<compile_context>
chip_gen: v7x
topology: tpu7x:2x2x1
jax: 0.10.0
libtpu: 0.0.40
codegen_flags: <defaults>
</compile_context>

<pallas_src>
import numpy as np
import jax
import jax.numpy as jnp
from jax.experimental import pallas as pl
from jax.experimental.pallas import tpu as pltpu

# ---------------- problem dims (small, consistent with the module) ------------
B, T, PX, PY = 2, 2, 2, 2      # batch, num_frames, patch_x, patch_y
F_DIM = 32                     # raw video feature dim (video_linear in-dim)
H = 32                         # model.hidden_dim
NHEAD = 4
DH = H // NHEAD
DFF = 64                       # transformer feed-forward dim
PPF = PX * PY                  # patches per frame
N_TOK = T * PPF                # video tokens per batch element (8)
L = N_TOK + 1                  # + cls token (9)
L_PAD = 16                     # padded per-example rows inside the kernel
LLP = B * L_PAD                # 32 padded rows total
NV = B * N_TOK                 # 16 real video-token rows
LN_EPS = 1e-5
ATT_SCALE = 1.0 / (DH ** 0.5)
NEG_INF = -1e9

# ---------------- weight pack: (W_ROWS, 128) --------------------------------
# Matrices stacked along sublanes at 8-aligned row offsets, columns from lane 0
# -> every unpack slice is a zero-cost view (no lane rotation).
R_WQ0, R_WK0, R_WV0, R_WO0 = 0, 32, 64, 96
R_WQ1, R_WK1 = 128, 160
R_WVID = 192
R_W1 = 224                     # (H, DFF)
R_W2 = 256                     # (DFF, H)
W_ROWS = 320

# ---------------- bias / LN / head-mask pack: (B_ROWS, 128) -------------------
ROW_LNG, ROW_LNB = 0, 1
ROW_BQ0, ROW_BK0, ROW_BV0, ROW_BO0 = 2, 3, 4, 5
ROW_N1G, ROW_N1B = 6, 7
ROW_B1, ROW_B2 = 8, 9
ROW_N2G, ROW_N2B = 10, 11
ROW_BQ1, ROW_BK1 = 12, 13
ROW_HM0 = 16                   # 4 head-column masks, rows 16..19
B_ROWS = 24

# ---------------- host-precomputed constants slab: (C_ROWS, C_W) --------------
C_W = max(H, LLP, NV)          # 32
C_PRE = 0                      # (NV, H)    bv + temporal pos per video token
C_SCAT = C_PRE + NV            # (LLP, NV)  scatter matrix: token -> padded row
C_CLS = C_SCAT + LLP           # (LLP, H)   cls embedding at rows 0, 16
C_MASK = C_CLS + LLP           # (LLP, LLP) additive mask (cross-batch / pad keys)
C_ROWS = C_MASK + LLP          # 112


# ---------------- shared math helpers -----------------------------------------
def _layernorm(x, g, b):
    mu = jnp.mean(x, axis=-1, keepdims=True)
    var = jnp.mean(jnp.square(x - mu), axis=-1, keepdims=True)
    return (x - mu) * jax.lax.rsqrt(var + LN_EPS) * g + b


def _mha_headmasked(x, wq, bq, wk, bk, mask_add, head_masks,
                    wv=None, bv=None, wo=None, bo=None):
    """nn.MultiheadAttention on the padded (LLP, H) slab.

    Per-head math is reproduced exactly with full-width matmuls and disjoint
    head-column masks: (q*mask_h)@k^T == q_h@k_h^T, and the concatenated head
    output equals sum_h (p_h@v)*mask_h.  The attention scale is pre-folded
    into wq/bq; mask_add kills cross-batch and pad keys with -1e9, so the
    padded softmax equals the per-example softmax on the valid rows/cols."""
    q = jnp.dot(x, wq, preferred_element_type=jnp.float32) + bq
    k = jnp.dot(x, wk, preferred_element_type=jnp.float32) + bk
    kt = k.T                                           # single transpose, shared by heads
    v = None
    if wo is not None:
        v = jnp.dot(x, wv, preferred_element_type=jnp.float32) + bv
    att = None
    oc = None
    for h in range(NHEAD):
        hm = head_masks[h]                             # (1, H): ones on head-h columns
        s = jnp.dot(q * hm, kt, preferred_element_type=jnp.float32) + mask_add
        s = s - jnp.max(s, axis=-1, keepdims=True)
        e = jnp.exp(s)
        p = e / jnp.sum(e, axis=-1, keepdims=True)     # exact softmax (rows sum to 1)
        att = p if att is None else att + p
        if wo is not None:
            oh = jnp.dot(p, v, preferred_element_type=jnp.float32) * hm
            oc = oh if oc is None else oc + oh
    att = att * (1.0 / NHEAD)
    out = None
    if wo is not None:
        out = jnp.dot(oc, wo, preferred_element_type=jnp.float32) + bo
    return att, out


# ---------------- the single fused Pallas kernel --------------------------------
def fused_kernel(vf_ref, c_ref, w_ref, b_ref, att1_ref, att2_ref):
    # ---- constants (all slices 8-aligned rows, lane 0: pure views) ------------
    pre_add = c_ref[C_PRE:C_PRE + NV, 0:H]
    scatter = c_ref[C_SCAT:C_SCAT + LLP, 0:NV]
    cls_slab = c_ref[C_CLS:C_CLS + LLP, 0:H]
    mask_add = c_ref[C_MASK:C_MASK + LLP, 0:LLP]

    # ---- weights ---------------------------------------------------------------
    wq0 = w_ref[R_WQ0:R_WQ0 + H, 0:H]
    wk0 = w_ref[R_WK0:R_WK0 + H, 0:H]
    wv0 = w_ref[R_WV0:R_WV0 + H, 0:H]
    wo0 = w_ref[R_WO0:R_WO0 + H, 0:H]
    wq1 = w_ref[R_WQ1:R_WQ1 + H, 0:H]
    wk1 = w_ref[R_WK1:R_WK1 + H, 0:H]
    wvid = w_ref[R_WVID:R_WVID + F_DIM, 0:H]
    w1 = w_ref[R_W1:R_W1 + H, 0:DFF]
    w2 = w_ref[R_W2:R_W2 + DFF, 0:H]

    def brow(r, width=H):
        return b_ref[r:r + 1, 0:width]

    ln_g, ln_b = brow(ROW_LNG), brow(ROW_LNB)
    bq0, bk0, bv0, bo0 = brow(ROW_BQ0), brow(ROW_BK0), brow(ROW_BV0), brow(ROW_BO0)
    n1g, n1b = brow(ROW_N1G), brow(ROW_N1B)
    b1, b2 = brow(ROW_B1, DFF), brow(ROW_B2)
    n2g, n2b = brow(ROW_N2G), brow(ROW_N2B)
    bq1, bk1 = brow(ROW_BQ1), brow(ROW_BK1)
    hms = [brow(ROW_HM0 + h) for h in range(NHEAD)]

    # ---- video_linear + (bv + temporal pos) + LayerNorm on the 16 token rows ---
    emb = jnp.dot(vf_ref[...], wvid, preferred_element_type=jnp.float32) + pre_add
    v_ln = _layernorm(emb, ln_g, ln_b)                               # (NV, H)

    # ---- scatter tokens into the padded slab and add the cls rows --------------
    # scatter places token j of example b at row b*L_PAD + 1 + j; cls/pad rows
    # come out zero and the cls slab adds the cls embedding at rows 0 and 16.
    x = jnp.dot(scatter, v_ln, preferred_element_type=jnp.float32) + cls_slab

    # ---- layer-0 attention weights + full encoder layer 0 (post-norm, ReLU) ----
    att1, sa = _mha_headmasked(x, wq0, bq0, wk0, bk0, mask_add, hms,
                               wv0, bv0, wo0, bo0)
    h1 = _layernorm(x + sa, n1g, n1b)
    ff = jnp.maximum(jnp.dot(h1, w1, preferred_element_type=jnp.float32) + b1, 0.0)
    ff = jnp.dot(ff, w2, preferred_element_type=jnp.float32) + b2
    out1 = _layernorm(h1 + ff, n2g, n2b)

    # ---- layer-1 attention weights on out1 --------------------------------------
    att2, _ = _mha_headmasked(out1, wq1, bq1, wk1, bk1, mask_add, hms)

    # ---- per-example diagonal 9x9 blocks at 8-aligned offsets -> (B, L, L) ------
    for bi in range(B):
        r0 = bi * L_PAD
        att1_ref[bi] = att1[r0:r0 + L, r0:r0 + L]
        att2_ref[bi] = att2[r0:r0 + L, r0:r0 + L]


# ---------------- wrapper --------------------------------------------------------
@jax.jit
def att_extractor_forward(video_features, c_pack, w_pack, b_pack):
    vf = video_features.astype(jnp.float32).reshape(NV, F_DIM)
    att1, att2 = pl.pallas_call(
        fused_kernel,
        out_shape=(jax.ShapeDtypeStruct((B, L, L), jnp.float32),
                   jax.ShapeDtypeStruct((B, L, L), jnp.float32)),
        in_specs=[pl.BlockSpec(memory_space=pltpu.MemorySpace.VMEM)] * 4,
        out_specs=(pl.BlockSpec(memory_space=pltpu.MemorySpace.VMEM),
                   pl.BlockSpec(memory_space=pltpu.MemorySpace.VMEM)),
    )(vf, c_pack, w_pack, b_pack)
    return att1, att2


# ---------------- parameter packing (one-time, outside the per-call path) --------
def pack_params(p):
    def n(a):
        return np.asarray(a, dtype=np.float32)

    # weights, sublane-stacked, lane-0 aligned; attention scale folded into wq/bq
    w = np.zeros((W_ROWS, 128), np.float32)
    wqkv0, wqkv1 = n(p["wqkv0"]), n(p["wqkv1"])
    w[R_WQ0:R_WQ0 + H, :H] = wqkv0[:, 0:H] * ATT_SCALE
    w[R_WK0:R_WK0 + H, :H] = wqkv0[:, H:2 * H]
    w[R_WV0:R_WV0 + H, :H] = wqkv0[:, 2 * H:3 * H]
    w[R_WO0:R_WO0 + H, :H] = n(p["wo0"])
    w[R_WQ1:R_WQ1 + H, :H] = wqkv1[:, 0:H] * ATT_SCALE
    w[R_WK1:R_WK1 + H, :H] = wqkv1[:, H:2 * H]
    w[R_WVID:R_WVID + F_DIM, :H] = n(p["wv"])
    w[R_W1:R_W1 + H, :DFF] = n(p["w1"])
    w[R_W2:R_W2 + DFF, :H] = n(p["w2"])

    # biases / LN params / head-column masks
    bb = np.zeros((B_ROWS, 128), np.float32)

    def put(row, vec):
        vec = np.asarray(vec, np.float32).reshape(-1)
        bb[row, :vec.shape[0]] = vec

    bqkv0, bqkv1 = n(p["bqkv0"]).reshape(-1), n(p["bqkv1"]).reshape(-1)
    put(ROW_LNG, p["ln_g"]);   put(ROW_LNB, p["ln_b"])
    put(ROW_BQ0, bqkv0[0:H] * ATT_SCALE)
    put(ROW_BK0, bqkv0[H:2 * H]);  put(ROW_BV0, bqkv0[2 * H:3 * H])
    put(ROW_BO0, p["bo0"])
    put(ROW_N1G, p["n1g"]);    put(ROW_N1B, p["n1b"])
    put(ROW_B1, p["b1"]);      put(ROW_B2, p["b2"])
    put(ROW_N2G, p["n2g"]);    put(ROW_N2B, p["n2b"])
    put(ROW_BQ1, bqkv1[0:H] * ATT_SCALE);  put(ROW_BK1, bqkv1[H:2 * H])
    for h in range(NHEAD):
        hm = np.zeros((H,), np.float32)
        hm[h * DH:(h + 1) * DH] = 1.0
        put(ROW_HM0 + h, hm)

    # host-precomputed constants: pos+bv slab, scatter matrix, cls slab, mask
    c = np.zeros((C_ROWS, C_W), np.float32)
    pos = n(p["pos_table"])
    bv = n(p["bv"]).reshape(-1)
    cls = n(p["cls_table"])[0]
    for bi in range(B):
        c[C_CLS + bi * L_PAD, :H] = cls
        for t in range(T):
            for pp in range(PPF):
                tok = t * PPF + pp
                c[C_PRE + bi * N_TOK + tok, :H] = bv + pos[t]
                c[C_SCAT + bi * L_PAD + 1 + tok, bi * N_TOK + tok] = 1.0
    for r in range(LLP):
        for col in range(LLP):
            same_example = (r // L_PAD) == (col // L_PAD)
            valid_key = (col % L_PAD) < L
            c[C_MASK + r, col] = 0.0 if (same_example and valid_key) else NEG_INF

    return jnp.asarray(w), jnp.asarray(bb), jnp.asarray(c)


# ---------------- deterministic synthetic parameters ------------------------------
def init_params(key):
    ks = jax.random.split(key, 14)

    def w(k, shape, scale=0.1):
        return jax.random.normal(k, shape, jnp.float32) * scale

    return dict(
        cls_table=w(ks[0], (4, H)),              # nn.Embedding table; row 0 used
        pos_table=w(ks[1], (T, H)),              # temporal position embedding
        wv=w(ks[2], (F_DIM, H)), bv=w(ks[3], (1, H)),          # video_linear
        ln_g=jnp.ones((1, H), jnp.float32), ln_b=jnp.zeros((1, H), jnp.float32),
        # encoder layer 0
        wqkv0=w(ks[4], (H, 3 * H)), bqkv0=w(ks[5], (1, 3 * H)),
        wo0=w(ks[6], (H, H)), bo0=w(ks[7], (1, H)),
        n1g=jnp.ones((1, H), jnp.float32), n1b=jnp.zeros((1, H), jnp.float32),
        w1=w(ks[8], (H, DFF)), b1=w(ks[9], (1, DFF)),
        w2=w(ks[10], (DFF, H)), b2=w(ks[11], (1, H)),
        n2g=jnp.ones((1, H), jnp.float32), n2b=jnp.zeros((1, H), jnp.float32),
        # encoder layer 1 (only its self-attention q/k projections are needed)
        wqkv1=w(ks[12], (H, 3 * H)), bqkv1=w(ks[13], (1, 3 * H)),
    )


# ---------------- pure-JAX reference (independent per-batch math, no Pallas) ------
def _mha_ref(x, wqkv, bqkv, wo=None, bo=None):
    qkv = jnp.dot(x, wqkv) + bqkv
    q, k, v = qkv[:, :H], qkv[:, H:2 * H], qkv[:, 2 * H:]
    att_sum = jnp.zeros((x.shape[0], x.shape[0]), jnp.float32)
    out = None if wo is None else jnp.zeros((x.shape[0], H), jnp.float32) + bo
    for h in range(NHEAD):
        qh = q[:, h * DH:(h + 1) * DH]
        kh = k[:, h * DH:(h + 1) * DH]
        s = (qh @ kh.T) * ATT_SCALE
        s = s - jnp.max(s, axis=-1, keepdims=True)
        e = jnp.exp(s)
        p = e / jnp.sum(e, axis=-1, keepdims=True)
        att_sum = att_sum + p
        if wo is not None:
            vh = v[:, h * DH:(h + 1) * DH]
            out = out + (p @ vh) @ wo[h * DH:(h + 1) * DH, :]
    return att_sum / NHEAD, out


def reference_forward(video_features, params):
    vf = video_features.astype(jnp.float32).reshape(B, N_TOK, F_DIM)
    pos_full = jnp.repeat(params["pos_table"][:T], PPF, axis=0)
    a1s, a2s = [], []
    for bi in range(B):
        emb = vf[bi] @ params["wv"] + params["bv"] + pos_full
        emb = _layernorm(emb, params["ln_g"], params["ln_b"])
        x = jnp.concatenate([params["cls_table"][0][None, :], emb], axis=0)
        att1, sa = _mha_ref(x, params["wqkv0"], params["bqkv0"],
                            params["wo0"], params["bo0"])
        h1 = _layernorm(x + sa, params["n1g"], params["n1b"])
        ff = jnp.maximum(h1 @ params["w1"] + params["b1"], 0.0)
        ff = ff @ params["w2"] + params["b2"]
        out1 = _layernorm(h1 + ff, params["n2g"], params["n2b"])
        att2, _ = _mha_ref(out1, params["wqkv1"], params["bqkv1"])
        a1s.append(att1)
        a2s.append(att2)
    return jnp.stack(a1s), jnp.stack(a2s)


if __name__ == "__main__":
    key = jax.random.PRNGKey(0)
    kp, kx = jax.random.split(key)
    params = init_params(kp)
    w_pack, b_pack, c_pack = pack_params(params)   # one-time packing, not per-call glue
    video_features = jax.random.normal(kx, (B, T, PX, PY, F_DIM), jnp.float32)

    att1, att2 = jax.block_until_ready(
        att_extractor_forward(video_features, c_pack, w_pack, b_pack))

    assert att1.shape == (B, L, L) and att2.shape == (B, L, L)
    r1, r2 = reference_forward(video_features, params)
    # Exact softmax division in the kernel; tolerance only covers f32 matmul
    # accumulation-order differences.  Real bugs would be O(0.1-1).
    assert jnp.allclose(att1, r1, atol=1e-3, rtol=1e-3), "att1 mismatch"
    assert jnp.allclose(att2, r2, atol=1e-3, rtol=1e-3), "att2 mismatch"
    print("KERNEL_OK")
</pallas_src>

<mosaic_0001>
module attributes {stable_mosaic.version = 11 : i64} {
  func.func @fused_kernel(%arg0: memref<16x32xf32, #tpu.memory_space<vmem>>, %arg1: memref<112x32xf32, #tpu.memory_space<vmem>>, %arg2: memref<320x128xf32, #tpu.memory_space<vmem>>, %arg3: memref<24x128xf32, #tpu.memory_space<vmem>>, %arg4: memref<2x9x9xf32, #tpu.memory_space<vmem>>, %arg5: memref<2x9x9xf32, #tpu.memory_space<vmem>>) attributes {dimension_semantics = [], scalar_prefetch = 0 : i64, scratch_operands = 0 : i64, tpu.core_type = #tpu.core_type<tc>} {
    %c0 = arith.constant 0 : index
    %c0_0 = arith.constant 0 : index
    %0 = vector.load %arg1[%c0, %c0_0] : memref<112x32xf32, #tpu.memory_space<vmem>>, vector<16x32xf32>
    %c16 = arith.constant 16 : index
    %c0_1 = arith.constant 0 : index
    %1 = vector.load %arg1[%c16, %c0_1] : memref<112x32xf32, #tpu.memory_space<vmem>>, vector<32x16xf32>
    %c48 = arith.constant 48 : index
    %c0_2 = arith.constant 0 : index
    %2 = vector.load %arg1[%c48, %c0_2] : memref<112x32xf32, #tpu.memory_space<vmem>>, vector<32x32xf32>
    %c80 = arith.constant 80 : index
    %c0_3 = arith.constant 0 : index
    %3 = vector.load %arg1[%c80, %c0_3] : memref<112x32xf32, #tpu.memory_space<vmem>>, vector<32x32xf32>
    %c0_4 = arith.constant 0 : index
    %c0_5 = arith.constant 0 : index
    %4 = vector.load %arg2[%c0_4, %c0_5] : memref<320x128xf32, #tpu.memory_space<vmem>>, vector<32x32xf32>
    %c32 = arith.constant 32 : index
    %c0_6 = arith.constant 0 : index
    %5 = vector.load %arg2[%c32, %c0_6] : memref<320x128xf32, #tpu.memory_space<vmem>>, vector<32x32xf32>
    %c64 = arith.constant 64 : index
    %c0_7 = arith.constant 0 : index
    %6 = vector.load %arg2[%c64, %c0_7] : memref<320x128xf32, #tpu.memory_space<vmem>>, vector<32x32xf32>
    %c96 = arith.constant 96 : index
    %c0_8 = arith.constant 0 : index
    %7 = vector.load %arg2[%c96, %c0_8] : memref<320x128xf32, #tpu.memory_space<vmem>>, vector<32x32xf32>
    %c128 = arith.constant 128 : index
    %c0_9 = arith.constant 0 : index
    %8 = vector.load %arg2[%c128, %c0_9] : memref<320x128xf32, #tpu.memory_space<vmem>>, vector<32x32xf32>
    %c160 = arith.constant 160 : index
    %c0_10 = arith.constant 0 : index
    %9 = vector.load %arg2[%c160, %c0_10] : memref<320x128xf32, #tpu.memory_space<vmem>>, vector<32x32xf32>
    %c192 = arith.constant 192 : index
    %c0_11 = arith.constant 0 : index
    %10 = vector.load %arg2[%c192, %c0_11] : memref<320x128xf32, #tpu.memory_space<vmem>>, vector<32x32xf32>
    %c224 = arith.constant 224 : index
    %c0_12 = arith.constant 0 : index
    %11 = vector.load %arg2[%c224, %c0_12] : memref<320x128xf32, #tpu.memory_space<vmem>>, vector<32x64xf32>
    %c256 = arith.constant 256 : index
    %c0_13 = arith.constant 0 : index
    %12 = vector.load %arg2[%c256, %c0_13] : memref<320x128xf32, #tpu.memory_space<vmem>>, vector<64x32xf32>
    %c0_14 = arith.constant 0 : index
    %c0_15 = arith.constant 0 : index
    %13 = vector.load %arg3[%c0_14, %c0_15] : memref<24x128xf32, #tpu.memory_space<vmem>>, vector<1x32xf32>
    %c1 = arith.constant 1 : index
    %c0_16 = arith.constant 0 : index
    %14 = vector.load %arg3[%c1, %c0_16] : memref<24x128xf32, #tpu.memory_space<vmem>>, vector<1x32xf32>
    %c2 = arith.constant 2 : index
    %c0_17 = arith.constant 0 : index
    %15 = vector.load %arg3[%c2, %c0_17] : memref<24x128xf32, #tpu.memory_space<vmem>>, vector<1x32xf32>
    %c3 = arith.constant 3 : index
    %c0_18 = arith.constant 0 : index
    %16 = vector.load %arg3[%c3, %c0_18] : memref<24x128xf32, #tpu.memory_space<vmem>>, vector<1x32xf32>
    %c4 = arith.constant 4 : index
    %c0_19 = arith.constant 0 : index
    %17 = vector.load %arg3[%c4, %c0_19] : memref<24x128xf32, #tpu.memory_space<vmem>>, vector<1x32xf32>
    %c5 = arith.constant 5 : index
    %c0_20 = arith.constant 0 : index
    %18 = vector.load %arg3[%c5, %c0_20] : memref<24x128xf32, #tpu.memory_space<vmem>>, vector<1x32xf32>
    %c6 = arith.constant 6 : index
    %c0_21 = arith.constant 0 : index
    %19 = vector.load %arg3[%c6, %c0_21] : memref<24x128xf32, #tpu.memory_space<vmem>>, vector<1x32xf32>
    %c7 = arith.constant 7 : index
    %c0_22 = arith.constant 0 : index
    %20 = vector.load %arg3[%c7, %c0_22] : memref<24x128xf32, #tpu.memory_space<vmem>>, vector<1x32xf32>
    %c8 = arith.constant 8 : index
    %c0_23 = arith.constant 0 : index
    %21 = vector.load %arg3[%c8, %c0_23] : memref<24x128xf32, #tpu.memory_space<vmem>>, vector<1x64xf32>
    %c9 = arith.constant 9 : index
    %c0_24 = arith.constant 0 : index
    %22 = vector.load %arg3[%c9, %c0_24] : memref<24x128xf32, #tpu.memory_space<vmem>>, vector<1x32xf32>
    %c10 = arith.constant 10 : index
    %c0_25 = arith.constant 0 : index
    %23 = vector.load %arg3[%c10, %c0_25] : memref<24x128xf32, #tpu.memory_space<vmem>>, vector<1x32xf32>
    %c11 = arith.constant 11 : index
    %c0_26 = arith.constant 0 : index
    %24 = vector.load %arg3[%c11, %c0_26] : memref<24x128xf32, #tpu.memory_space<vmem>>, vector<1x32xf32>
    %c12 = arith.constant 12 : index
    %c0_27 = arith.constant 0 : index
    %25 = vector.load %arg3[%c12, %c0_27] : memref<24x128xf32, #tpu.memory_space<vmem>>, vector<1x32xf32>
    %c13 = arith.constant 13 : index
    %c0_28 = arith.constant 0 : index
    %26 = vector.load %arg3[%c13, %c0_28] : memref<24x128xf32, #tpu.memory_space<vmem>>, vector<1x32xf32>
    %c16_29 = arith.constant 16 : index
    %c0_30 = arith.constant 0 : index
    %27 = vector.load %arg3[%c16_29, %c0_30] : memref<24x128xf32, #tpu.memory_space<vmem>>, vector<1x32xf32>
    %c17 = arith.constant 17 : index
    %c0_31 = arith.constant 0 : index
    %28 = vector.load %arg3[%c17, %c0_31] : memref<24x128xf32, #tpu.memory_space<vmem>>, vector<1x32xf32>
    %c18 = arith.constant 18 : index
    %c0_32 = arith.constant 0 : index
    %29 = vector.load %arg3[%c18, %c0_32] : memref<24x128xf32, #tpu.memory_space<vmem>>, vector<1x32xf32>
    %c19 = arith.constant 19 : index
    %c0_33 = arith.constant 0 : index
    %30 = vector.load %arg3[%c19, %c0_33] : memref<24x128xf32, #tpu.memory_space<vmem>>, vector<1x32xf32>
    %c0_34 = arith.constant 0 : index
    %c0_35 = arith.constant 0 : index
    %31 = vector.load %arg0[%c0_34, %c0_35] : memref<16x32xf32, #tpu.memory_space<vmem>>, vector<16x32xf32>
    %cst = arith.constant dense<0.000000e+00> : vector<16x32xf32>
    %32 = tpu.matmul %31, %10, %cst {dimension_numbers = #tpu.dot_dimension_numbers<[1], [0], [0], [1], [0, 0, 1, 1], [], []>} : vector<16x32xf32>, vector<32x32xf32>, vector<16x32xf32> -> vector<16x32xf32>
    %33 = arith.addf %32, %0 : vector<16x32xf32>
    %cst_36 = arith.constant dense<0.000000e+00> : vector<16xf32>
    %34 = vector.multi_reduction <add>, %33, %cst_36 [1] : vector<16x32xf32> to vector<16xf32>
    %35 = vector.shape_cast %34 : vector<16xf32> to vector<16x1xf32>
    %cst_37 = arith.constant 3.200000e+01 : f32
    %36 = vector.broadcast %cst_37 : f32 to vector<16x1xf32>
    %37 = arith.divf %35, %36 : vector<16x1xf32>
    %38 = vector.broadcast %37 : vector<16x1xf32> to vector<16x32xf32>
    %39 = arith.subf %33, %38 : vector<16x32xf32>
    %40 = arith.mulf %39, %39 : vector<16x32xf32>
    %cst_38 = arith.constant dense<0.000000e+00> : vector<16xf32>
    %41 = vector.multi_reduction <add>, %40, %cst_38 [1] : vector<16x32xf32> to vector<16xf32>
    %42 = vector.shape_cast %41 : vector<16xf32> to vector<16x1xf32>
    %cst_39 = arith.constant 3.200000e+01 : f32
    %43 = vector.broadcast %cst_39 : f32 to vector<16x1xf32>
    %44 = arith.divf %42, %43 : vector<16x1xf32>
    %45 = vector.broadcast %37 : vector<16x1xf32> to vector<16x32xf32>
    %46 = arith.subf %33, %45 : vector<16x32xf32>
    %cst_40 = arith.constant 9.99999974E-6 : f32
    %47 = vector.broadcast %cst_40 : f32 to vector<16x1xf32>
    %48 = arith.addf %44, %47 : vector<16x1xf32>
    %49 = math.rsqrt %48 : vector<16x1xf32>
    %50 = vector.broadcast %49 : vector<16x1xf32> to vector<16x32xf32>
    %51 = arith.mulf %46, %50 : vector<16x32xf32>
    %52 = vector.broadcast %13 : vector<1x32xf32> to vector<16x32xf32>
    %53 = arith.mulf %51, %52 : vector<16x32xf32>
    %54 = vector.broadcast %14 : vector<1x32xf32> to vector<16x32xf32>
    %55 = arith.addf %53, %54 : vector<16x32xf32>
    %cst_41 = arith.constant dense<0.000000e+00> : vector<32x32xf32>
    %56 = tpu.matmul %1, %55, %cst_41 {dimension_numbers = #tpu.dot_dimension_numbers<[1], [0], [0], [1], [0, 0, 1, 1], [], []>} : vector<32x16xf32>, vector<16x32xf32>, vector<32x32xf32> -> vector<32x32xf32>
    %57 = arith.addf %56, %2 : vector<32x32xf32>
    %cst_42 = arith.constant dense<0.000000e+00> : vector<32x32xf32>
    %58 = tpu.matmul %57, %4, %cst_42 {dimension_numbers = #tpu.dot_dimension_numbers<[1], [0], [0], [1], [0, 0, 1, 1], [], []>} : vector<32x32xf32>, vector<32x32xf32>, vector<32x32xf32> -> vector<32x32xf32>
    %59 = vector.broadcast %15 : vector<1x32xf32> to vector<32x32xf32>
    %60 = arith.addf %58, %59 : vector<32x32xf32>
    %cst_43 = arith.constant dense<0.000000e+00> : vector<32x32xf32>
    %61 = tpu.matmul %57, %5, %cst_43 {dimension_numbers = #tpu.dot_dimension_numbers<[1], [0], [0], [1], [0, 0, 1, 1], [], []>} : vector<32x32xf32>, vector<32x32xf32>, vector<32x32xf32> -> vector<32x32xf32>
    %62 = vector.broadcast %16 : vector<1x32xf32> to vector<32x32xf32>
    %63 = arith.addf %61, %62 : vector<32x32xf32>
    %64 = tpu.transpose %63, [1, 0] : vector<32x32xf32> -> vector<32x32xf32>
    %cst_44 = arith.constant dense<0.000000e+00> : vector<32x32xf32>
    %65 = tpu.matmul %57, %6, %cst_44 {dimension_numbers = #tpu.dot_dimension_numbers<[1], [0], [0], [1], [0, 0, 1, 1], [], []>} : vector<32x32xf32>, vector<32x32xf32>, vector<32x32xf32> -> vector<32x32xf32>
    %66 = vector.broadcast %17 : vector<1x32xf32> to vector<32x32xf32>
    %67 = arith.addf %65, %66 : vector<32x32xf32>
    %68 = vector.broadcast %27 : vector<1x32xf32> to vector<32x32xf32>
    %69 = arith.mulf %60, %68 : vector<32x32xf32>
    %cst_45 = arith.constant dense<0.000000e+00> : vector<32x32xf32>
    %70 = tpu.matmul %69, %64, %cst_45 {dimension_numbers = #tpu.dot_dimension_numbers<[1], [0], [0], [1], [0, 0, 1, 1], [], []>} : vector<32x32xf32>, vector<32x32xf32>, vector<32x32xf32> -> vector<32x32xf32>
    %71 = arith.addf %70, %3 : vector<32x32xf32>
    %cst_46 = arith.constant dense<0xFF800000> : vector<32xf32>
    %72 = vector.multi_reduction <maximumf>, %71, %cst_46 [1] : vector<32x32xf32> to vector<32xf32>
    %73 = vector.shape_cast %72 : vector<32xf32> to vector<32x1xf32>
    %74 = vector.broadcast %73 : vector<32x1xf32> to vector<32x32xf32>
    %75 = arith.subf %71, %74 : vector<32x32xf32>
    %76 = math.exp %75 : vector<32x32xf32>
    %cst_47 = arith.constant dense<0.000000e+00> : vector<32xf32>
    %77 = vector.multi_reduction <add>, %76, %cst_47 [1] : vector<32x32xf32> to vector<32xf32>
    %78 = vector.shape_cast %77 : vector<32xf32> to vector<32x1xf32>
    %79 = vector.broadcast %78 : vector<32x1xf32> to vector<32x32xf32>
    %80 = arith.divf %76, %79 : vector<32x32xf32>
    %cst_48 = arith.constant dense<0.000000e+00> : vector<32x32xf32>
    %81 = tpu.matmul %80, %67, %cst_48 {dimension_numbers = #tpu.dot_dimension_numbers<[1], [0], [0], [1], [0, 0, 1, 1], [], []>} : vector<32x32xf32>, vector<32x32xf32>, vector<32x32xf32> -> vector<32x32xf32>
    %82 = vector.broadcast %27 : vector<1x32xf32> to vector<32x32xf32>
    %83 = arith.mulf %81, %82 : vector<32x32xf32>
    %84 = vector.broadcast %28 : vector<1x32xf32> to vector<32x32xf32>
    %85 = arith.mulf %60, %84 : vector<32x32xf32>
    %cst_49 = arith.constant dense<0.000000e+00> : vector<32x32xf32>
    %86 = tpu.matmul %85, %64, %cst_49 {dimension_numbers = #tpu.dot_dimension_numbers<[1], [0], [0], [1], [0, 0, 1, 1], [], []>} : vector<32x32xf32>, vector<32x32xf32>, vector<32x32xf32> -> vector<32x32xf32>
    %87 = arith.addf %86, %3 : vector<32x32xf32>
    %cst_50 = arith.constant dense<0xFF800000> : vector<32xf32>
    %88 = vector.multi_reduction <maximumf>, %87, %cst_50 [1] : vector<32x32xf32> to vector<32xf32>
    %89 = vector.shape_cast %88 : vector<32xf32> to vector<32x1xf32>
    %90 = vector.broadcast %89 : vector<32x1xf32> to vector<32x32xf32>
    %91 = arith.subf %87, %90 : vector<32x32xf32>
    %92 = math.exp %91 : vector<32x32xf32>
    %cst_51 = arith.constant dense<0.000000e+00> : vector<32xf32>
    %93 = vector.multi_reduction <add>, %92, %cst_51 [1] : vector<32x32xf32> to vector<32xf32>
    %94 = vector.shape_cast %93 : vector<32xf32> to vector<32x1xf32>
    %95 = vector.broadcast %94 : vector<32x1xf32> to vector<32x32xf32>
    %96 = arith.divf %92, %95 : vector<32x32xf32>
    %97 = arith.addf %80, %96 : vector<32x32xf32>
    %cst_52 = arith.constant dense<0.000000e+00> : vector<32x32xf32>
    %98 = tpu.matmul %96, %67, %cst_52 {dimension_numbers = #tpu.dot_dimension_numbers<[1], [0], [0], [1], [0, 0, 1, 1], [], []>} : vector<32x32xf32>, vector<32x32xf32>, vector<32x32xf32> -> vector<32x32xf32>
    %99 = vector.broadcast %28 : vector<1x32xf32> to vector<32x32xf32>
    %100 = arith.mulf %98, %99 : vector<32x32xf32>
    %101 = arith.addf %83, %100 : vector<32x32xf32>
    %102 = vector.broadcast %29 : vector<1x32xf32> to vector<32x32xf32>
    %103 = arith.mulf %60, %102 : vector<32x32xf32>
    %cst_53 = arith.constant dense<0.000000e+00> : vector<32x32xf32>
    %104 = tpu.matmul %103, %64, %cst_53 {dimension_numbers = #tpu.dot_dimension_numbers<[1], [0], [0], [1], [0, 0, 1, 1], [], []>} : vector<32x32xf32>, vector<32x32xf32>, vector<32x32xf32> -> vector<32x32xf32>
    %105 = arith.addf %104, %3 : vector<32x32xf32>
    %cst_54 = arith.constant dense<0xFF800000> : vector<32xf32>
    %106 = vector.multi_reduction <maximumf>, %105, %cst_54 [1] : vector<32x32xf32> to vector<32xf32>
    %107 = vector.shape_cast %106 : vector<32xf32> to vector<32x1xf32>
    %108 = vector.broadcast %107 : vector<32x1xf32> to vector<32x32xf32>
    %109 = arith.subf %105, %108 : vector<32x32xf32>
    %110 = math.exp %109 : vector<32x32xf32>
    %cst_55 = arith.constant dense<0.000000e+00> : vector<32xf32>
    %111 = vector.multi_reduction <add>, %110, %cst_55 [1] : vector<32x32xf32> to vector<32xf32>
    %112 = vector.shape_cast %111 : vector<32xf32> to vector<32x1xf32>
    %113 = vector.broadcast %112 : vector<32x1xf32> to vector<32x32xf32>
    %114 = arith.divf %110, %113 : vector<32x32xf32>
    %115 = arith.addf %97, %114 : vector<32x32xf32>
    %cst_56 = arith.constant dense<0.000000e+00> : vector<32x32xf32>
    %116 = tpu.matmul %114, %67, %cst_56 {dimension_numbers = #tpu.dot_dimension_numbers<[1], [0], [0], [1], [0, 0, 1, 1], [], []>} : vector<32x32xf32>, vector<32x32xf32>, vector<32x32xf32> -> vector<32x32xf32>
    %117 = vector.broadcast %29 : vector<1x32xf32> to vector<32x32xf32>
    %118 = arith.mulf %116, %117 : vector<32x32xf32>
    %119 = arith.addf %101, %118 : vector<32x32xf32>
    %120 = vector.broadcast %30 : vector<1x32xf32> to vector<32x32xf32>
    %121 = arith.mulf %60, %120 : vector<32x32xf32>
    %cst_57 = arith.constant dense<0.000000e+00> : vector<32x32xf32>
    %122 = tpu.matmul %121, %64, %cst_57 {dimension_numbers = #tpu.dot_dimension_numbers<[1], [0], [0], [1], [0, 0, 1, 1], [], []>} : vector<32x32xf32>, vector<32x32xf32>, vector<32x32xf32> -> vector<32x32xf32>
    %123 = arith.addf %122, %3 : vector<32x32xf32>
    %cst_58 = arith.constant dense<0xFF800000> : vector<32xf32>
    %124 = vector.multi_reduction <maximumf>, %123, %cst_58 [1] : vector<32x32xf32> to vector<32xf32>
    %125 = vector.shape_cast %124 : vector<32xf32> to vector<32x1xf32>
    %126 = vector.broadcast %125 : vector<32x1xf32> to vector<32x32xf32>
    %127 = arith.subf %123, %126 : vector<32x32xf32>
    %128 = math.exp %127 : vector<32x32xf32>
    %cst_59 = arith.constant dense<0.000000e+00> : vector<32xf32>
    %129 = vector.multi_reduction <add>, %128, %cst_59 [1] : vector<32x32xf32> to vector<32xf32>
    %130 = vector.shape_cast %129 : vector<32xf32> to vector<32x1xf32>
    %131 = vector.broadcast %130 : vector<32x1xf32> to vector<32x32xf32>
    %132 = arith.divf %128, %131 : vector<32x32xf32>
    %133 = arith.addf %115, %132 : vector<32x32xf32>
    %cst_60 = arith.constant dense<0.000000e+00> : vector<32x32xf32>
    %134 = tpu.matmul %132, %67, %cst_60 {dimension_numbers = #tpu.dot_dimension_numbers<[1], [0], [0], [1], [0, 0, 1, 1], [], []>} : vector<32x32xf32>, vector<32x32xf32>, vector<32x32xf32> -> vector<32x32xf32>
    %135 = vector.broadcast %30 : vector<1x32xf32> to vector<32x32xf32>
    %136 = arith.mulf %134, %135 : vector<32x32xf32>
    %137 = arith.addf %119, %136 : vector<32x32xf32>
    %cst_61 = arith.constant 2.500000e-01 : f32
    %138 = vector.broadcast %cst_61 : f32 to vector<32x32xf32>
    %139 = arith.mulf %133, %138 : vector<32x32xf32>
    %cst_62 = arith.constant dense<0.000000e+00> : vector<32x32xf32>
    %140 = tpu.matmul %137, %7, %cst_62 {dimension_numbers = #tpu.dot_dimension_numbers<[1], [0], [0], [1], [0, 0, 1, 1], [], []>} : vector<32x32xf32>, vector<32x32xf32>, vector<32x32xf32> -> vector<32x32xf32>
    %141 = vector.broadcast %18 : vector<1x32xf32> to vector<32x32xf32>
    %142 = arith.addf %140, %141 : vector<32x32xf32>
    %143 = arith.addf %57, %142 : vector<32x32xf32>
    %cst_63 = arith.constant dense<0.000000e+00> : vector<32xf32>
    %144 = vector.multi_reduction <add>, %143, %cst_63 [1] : vector<32x32xf32> to vector<32xf32>
    %145 = vector.shape_cast %144 : vector<32xf32> to vector<32x1xf32>
    %cst_64 = arith.constant 3.200000e+01 : f32
    %146 = vector.broadcast %cst_64 : f32 to vector<32x1xf32>
    %147 = arith.divf %145, %146 : vector<32x1xf32>
    %148 = vector.broadcast %147 : vector<32x1xf32> to vector<32x32xf32>
    %149 = arith.subf %143, %148 : vector<32x32xf32>
    %150 = arith.mulf %149, %149 : vector<32x32xf32>
    %cst_65 = arith.constant dense<0.000000e+00> : vector<32xf32>
    %151 = vector.multi_reduction <add>, %150, %cst_65 [1] : vector<32x32xf32> to vector<32xf32>
    %152 = vector.shape_cast %151 : vector<32xf32> to vector<32x1xf32>
    %cst_66 = arith.constant 3.200000e+01 : f32
    %153 = vector.broadcast %cst_66 : f32 to vector<32x1xf32>
    %154 = arith.divf %152, %153 : vector<32x1xf32>
    %155 = vector.broadcast %147 : vector<32x1xf32> to vector<32x32xf32>
    %156 = arith.subf %143, %155 : vector<32x32xf32>
    %cst_67 = arith.constant 9.99999974E-6 : f32
    %157 = vector.broadcast %cst_67 : f32 to vector<32x1xf32>
    %158 = arith.addf %154, %157 : vector<32x1xf32>
    %159 = math.rsqrt %158 : vector<32x1xf32>
    %160 = vector.broadcast %159 : vector<32x1xf32> to vector<32x32xf32>
    %161 = arith.mulf %156, %160 : vector<32x32xf32>
    %162 = vector.broadcast %19 : vector<1x32xf32> to vector<32x32xf32>
    %163 = arith.mulf %161, %162 : vector<32x32xf32>
    %164 = vector.broadcast %20 : vector<1x32xf32> to vector<32x32xf32>
    %165 = arith.addf %163, %164 : vector<32x32xf32>
    %cst_68 = arith.constant dense<0.000000e+00> : vector<32x64xf32>
    %166 = tpu.matmul %165, %11, %cst_68 {dimension_numbers = #tpu.dot_dimension_numbers<[1], [0], [0], [1], [0, 0, 1, 1], [], []>} : vector<32x32xf32>, vector<32x64xf32>, vector<32x64xf32> -> vector<32x64xf32>
    %167 = vector.broadcast %21 : vector<1x64xf32> to vector<32x64xf32>
    %168 = arith.addf %166, %167 : vector<32x64xf32>
    %cst_69 = arith.constant 0.000000e+00 : f32
    %169 = vector.broadcast %cst_69 : f32 to vector<32x64xf32>
    %170 = arith.maximumf %168, %169 : vector<32x64xf32>
    %cst_70 = arith.constant dense<0.000000e+00> : vector<32x32xf32>
    %171 = tpu.matmul %170, %12, %cst_70 {dimension_numbers = #tpu.dot_dimension_numbers<[1], [0], [0], [1], [0, 0, 1, 1], [], []>} : vector<32x64xf32>, vector<64x32xf32>, vector<32x32xf32> -> vector<32x32xf32>
    %172 = vector.broadcast %22 : vector<1x32xf32> to vector<32x32xf32>
    %173 = arith.addf %171, %172 : vector<32x32xf32>
    %174 = arith.addf %165, %173 : vector<32x32xf32>
    %cst_71 = arith.constant dense<0.000000e+00> : vector<32xf32>
    %175 = vector.multi_reduction <add>, %174, %cst_71 [1] : vector<32x32xf32> to vector<32xf32>
    %176 = vector.shape_cast %175 : vector<32xf32> to vector<32x1xf32>
    %cst_72 = arith.constant 3.200000e+01 : f32
    %177 = vector.broadcast %cst_72 : f32 to vector<32x1xf32>
    %178 = arith.divf %176, %177 : vector<32x1xf32>
    %179 = vector.broadcast %178 : vector<32x1xf32> to vector<32x32xf32>
    %180 = arith.subf %174, %179 : vector<32x32xf32>
    %181 = arith.mulf %180, %180 : vector<32x32xf32>
    %cst_73 = arith.constant dense<0.000000e+00> : vector<32xf32>
    %182 = vector.multi_reduction <add>, %181, %cst_73 [1] : vector<32x32xf32> to vector<32xf32>
    %183 = vector.shape_cast %182 : vector<32xf32> to vector<32x1xf32>
    %cst_74 = arith.constant 3.200000e+01 : f32
    %184 = vector.broadcast %cst_74 : f32 to vector<32x1xf32>
    %185 = arith.divf %183, %184 : vector<32x1xf32>
    %186 = vector.broadcast %178 : vector<32x1xf32> to vector<32x32xf32>
    %187 = arith.subf %174, %186 : vector<32x32xf32>
    %cst_75 = arith.constant 9.99999974E-6 : f32
    %188 = vector.broadcast %cst_75 : f32 to vector<32x1xf32>
    %189 = arith.addf %185, %188 : vector<32x1xf32>
    %190 = math.rsqrt %189 : vector<32x1xf32>
    %191 = vector.broadcast %190 : vector<32x1xf32> to vector<32x32xf32>
    %192 = arith.mulf %187, %191 : vector<32x32xf32>
    %193 = vector.broadcast %23 : vector<1x32xf32> to vector<32x32xf32>
    %194 = arith.mulf %192, %193 : vector<32x32xf32>
    %195 = vector.broadcast %24 : vector<1x32xf32> to vector<32x32xf32>
    %196 = arith.addf %194, %195 : vector<32x32xf32>
    %cst_76 = arith.constant dense<0.000000e+00> : vector<32x32xf32>
    %197 = tpu.matmul %196, %8, %cst_76 {dimension_numbers = #tpu.dot_dimension_numbers<[1], [0], [0], [1], [0, 0, 1, 1], [], []>} : vector<32x32xf32>, vector<32x32xf32>, vector<32x32xf32> -> vector<32x32xf32>
    %198 = vector.broadcast %25 : vector<1x32xf32> to vector<32x32xf32>
    %199 = arith.addf %197, %198 : vector<32x32xf32>
    %cst_77 = arith.constant dense<0.000000e+00> : vector<32x32xf32>
    %200 = tpu.matmul %196, %9, %cst_77 {dimension_numbers = #tpu.dot_dimension_numbers<[1], [0], [0], [1], [0, 0, 1, 1], [], []>} : vector<32x32xf32>, vector<32x32xf32>, vector<32x32xf32> -> vector<32x32xf32>
    %201 = vector.broadcast %26 : vector<1x32xf32> to vector<32x32xf32>
    %202 = arith.addf %200, %201 : vector<32x32xf32>
    %203 = tpu.transpose %202, [1, 0] : vector<32x32xf32> -> vector<32x32xf32>
    %204 = vector.broadcast %27 : vector<1x32xf32> to vector<32x32xf32>
    %205 = arith.mulf %199, %204 : vector<32x32xf32>
    %cst_78 = arith.constant dense<0.000000e+00> : vector<32x32xf32>
    %206 = tpu.matmul %205, %203, %cst_78 {dimension_numbers = #tpu.dot_dimension_numbers<[1], [0], [0], [1], [0, 0, 1, 1], [], []>} : vector<32x32xf32>, vector<32x32xf32>, vector<32x32xf32> -> vector<32x32xf32>
    %207 = arith.addf %206, %3 : vector<32x32xf32>
    %cst_79 = arith.constant dense<0xFF800000> : vector<32xf32>
    %208 = vector.multi_reduction <maximumf>, %207, %cst_79 [1] : vector<32x32xf32> to vector<32xf32>
    %209 = vector.shape_cast %208 : vector<32xf32> to vector<32x1xf32>
    %210 = vector.broadcast %209 : vector<32x1xf32> to vector<32x32xf32>
    %211 = arith.subf %207, %210 : vector<32x32xf32>
    %212 = math.exp %211 : vector<32x32xf32>
    %cst_80 = arith.constant dense<0.000000e+00> : vector<32xf32>
    %213 = vector.multi_reduction <add>, %212, %cst_80 [1] : vector<32x32xf32> to vector<32xf32>
    %214 = vector.shape_cast %213 : vector<32xf32> to vector<32x1xf32>
    %215 = vector.broadcast %214 : vector<32x1xf32> to vector<32x32xf32>
    %216 = arith.divf %212, %215 : vector<32x32xf32>
    %217 = vector.broadcast %28 : vector<1x32xf32> to vector<32x32xf32>
    %218 = arith.mulf %199, %217 : vector<32x32xf32>
    %cst_81 = arith.constant dense<0.000000e+00> : vector<32x32xf32>
    %219 = tpu.matmul %218, %203, %cst_81 {dimension_numbers = #tpu.dot_dimension_numbers<[1], [0], [0], [1], [0, 0, 1, 1], [], []>} : vector<32x32xf32>, vector<32x32xf32>, vector<32x32xf32> -> vector<32x32xf32>
    %220 = arith.addf %219, %3 : vector<32x32xf32>
    %cst_82 = arith.constant dense<0xFF800000> : vector<32xf32>
    %221 = vector.multi_reduction <maximumf>, %220, %cst_82 [1] : vector<32x32xf32> to vector<32xf32>
    %222 = vector.shape_cast %221 : vector<32xf32> to vector<32x1xf32>
    %223 = vector.broadcast %222 : vector<32x1xf32> to vector<32x32xf32>
    %224 = arith.subf %220, %223 : vector<32x32xf32>
    %225 = math.exp %224 : vector<32x32xf32>
    %cst_83 = arith.constant dense<0.000000e+00> : vector<32xf32>
    %226 = vector.multi_reduction <add>, %225, %cst_83 [1] : vector<32x32xf32> to vector<32xf32>
    %227 = vector.shape_cast %226 : vector<32xf32> to vector<32x1xf32>
    %228 = vector.broadcast %227 : vector<32x1xf32> to vector<32x32xf32>
    %229 = arith.divf %225, %228 : vector<32x32xf32>
    %230 = arith.addf %216, %229 : vector<32x32xf32>
    %231 = vector.broadcast %29 : vector<1x32xf32> to vector<32x32xf32>
    %232 = arith.mulf %199, %231 : vector<32x32xf32>
    %cst_84 = arith.constant dense<0.000000e+00> : vector<32x32xf32>
    %233 = tpu.matmul %232, %203, %cst_84 {dimension_numbers = #tpu.dot_dimension_numbers<[1], [0], [0], [1], [0, 0, 1, 1], [], []>} : vector<32x32xf32>, vector<32x32xf32>, vector<32x32xf32> -> vector<32x32xf32>
    %234 = arith.addf %233, %3 : vector<32x32xf32>
    %cst_85 = arith.constant dense<0xFF800000> : vector<32xf32>
    %235 = vector.multi_reduction <maximumf>, %234, %cst_85 [1] : vector<32x32xf32> to vector<32xf32>
    %236 = vector.shape_cast %235 : vector<32xf32> to vector<32x1xf32>
    %237 = vector.broadcast %236 : vector<32x1xf32> to vector<32x32xf32>
    %238 = arith.subf %234, %237 : vector<32x32xf32>
    %239 = math.exp %238 : vector<32x32xf32>
    %cst_86 = arith.constant dense<0.000000e+00> : vector<32xf32>
    %240 = vector.multi_reduction <add>, %239, %cst_86 [1] : vector<32x32xf32> to vector<32xf32>
    %241 = vector.shape_cast %240 : vector<32xf32> to vector<32x1xf32>
    %242 = vector.broadcast %241 : vector<32x1xf32> to vector<32x32xf32>
    %243 = arith.divf %239, %242 : vector<32x32xf32>
    %244 = arith.addf %230, %243 : vector<32x32xf32>
    %245 = vector.broadcast %30 : vector<1x32xf32> to vector<32x32xf32>
    %246 = arith.mulf %199, %245 : vector<32x32xf32>
    %cst_87 = arith.constant dense<0.000000e+00> : vector<32x32xf32>
    %247 = tpu.matmul %246, %203, %cst_87 {dimension_numbers = #tpu.dot_dimension_numbers<[1], [0], [0], [1], [0, 0, 1, 1], [], []>} : vector<32x32xf32>, vector<32x32xf32>, vector<32x32xf32> -> vector<32x32xf32>
    %248 = arith.addf %247, %3 : vector<32x32xf32>
    %cst_88 = arith.constant dense<0xFF800000> : vector<32xf32>
    %249 = vector.multi_reduction <maximumf>, %248, %cst_88 [1] : vector<32x32xf32> to vector<32xf32>
    %250 = vector.shape_cast %249 : vector<32xf32> to vector<32x1xf32>
    %251 = vector.broadcast %250 : vector<32x1xf32> to vector<32x32xf32>
    %252 = arith.subf %248, %251 : vector<32x32xf32>
    %253 = math.exp %252 : vector<32x32xf32>
    %cst_89 = arith.constant dense<0.000000e+00> : vector<32xf32>
    %254 = vector.multi_reduction <add>, %253, %cst_89 [1] : vector<32x32xf32> to vector<32xf32>
    %255 = vector.shape_cast %254 : vector<32xf32> to vector<32x1xf32>
    %256 = vector.broadcast %255 : vector<32x1xf32> to vector<32x32xf32>
    %257 = arith.divf %253, %256 : vector<32x32xf32>
    %258 = arith.addf %244, %257 : vector<32x32xf32>
    %cst_90 = arith.constant 2.500000e-01 : f32
    %259 = vector.broadcast %cst_90 : f32 to vector<32x32xf32>
    %260 = arith.mulf %258, %259 : vector<32x32xf32>
    %261 = vector.extract_strided_slice %139 {offsets = [0, 0], sizes = [9, 9], strides = [1, 1]} : vector<32x32xf32> to vector<9x9xf32>
    %c0_91 = arith.constant 0 : index
    %c0_92 = arith.constant 0 : index
    %c0_93 = arith.constant 0 : index
    %262 = vector.load %arg4[%c0_91, %c0_92, %c0_93] : memref<2x9x9xf32, #tpu.memory_space<vmem>>, vector<1x9x9xf32>
    %263 = vector.shape_cast %262 : vector<1x9x9xf32> to vector<9x9xf32>
    %264 = vector.shape_cast %261 : vector<9x9xf32> to vector<1x9x9xf32>
    tpu.vector_store %arg4[%c0_91, %c0_92, %c0_93], %264 {strides = array<i32>} : memref<2x9x9xf32, #tpu.memory_space<vmem>>, vector<1x9x9xf32>,
    %265 = vector.extract_strided_slice %260 {offsets = [0, 0], sizes = [9, 9], strides = [1, 1]} : vector<32x32xf32> to vector<9x9xf32>
    %c0_94 = arith.constant 0 : index
    %c0_95 = arith.constant 0 : index
    %c0_96 = arith.constant 0 : index
    %266 = vector.load %arg5[%c0_94, %c0_95, %c0_96] : memref<2x9x9xf32, #tpu.memory_space<vmem>>, vector<1x9x9xf32>
    %267 = vector.shape_cast %266 : vector<1x9x9xf32> to vector<9x9xf32>
    %268 = vector.shape_cast %265 : vector<9x9xf32> to vector<1x9x9xf32>
    tpu.vector_store %arg5[%c0_94, %c0_95, %c0_96], %268 {strides = array<i32>} : memref<2x9x9xf32, #tpu.memory_space<vmem>>, vector<1x9x9xf32>,
    %269 = vector.extract_strided_slice %139 {offsets = [16, 16], sizes = [9, 9], strides = [1, 1]} : vector<32x32xf32> to vector<9x9xf32>
    %c1_97 = arith.constant 1 : index
    %c0_98 = arith.constant 0 : index
    %c0_99 = arith.constant 0 : index
    %270 = vector.load %arg4[%c1_97, %c0_98, %c0_99] : memref<2x9x9xf32, #tpu.memory_space<vmem>>, vector<1x9x9xf32>
    %271 = vector.shape_cast %270 : vector<1x9x9xf32> to vector<9x9xf32>
    %272 = vector.shape_cast %269 : vector<9x9xf32> to vector<1x9x9xf32>
    tpu.vector_store %arg4[%c1_97, %c0_98, %c0_99], %272 {strides = array<i32>} : memref<2x9x9xf32, #tpu.memory_space<vmem>>, vector<1x9x9xf32>,
    %273 = vector.extract_strided_slice %260 {offsets = [16, 16], sizes = [9, 9], strides = [1, 1]} : vector<32x32xf32> to vector<9x9xf32>
    %c1_100 = arith.constant 1 : index
    %c0_101 = arith.constant 0 : index
    %c0_102 = arith.constant 0 : index
    %274 = vector.load %arg5[%c1_100, %c0_101, %c0_102] : memref<2x9x9xf32, #tpu.memory_space<vmem>>, vector<1x9x9xf32>
    %275 = vector.shape_cast %274 : vector<1x9x9xf32> to vector<9x9xf32>
    %276 = vector.shape_cast %273 : vector<9x9xf32> to vector<1x9x9xf32>
    tpu.vector_store %arg5[%c1_100, %c0_101, %c0_102], %276 {strides = array<i32>} : memref<2x9x9xf32, #tpu.memory_space<vmem>>, vector<1x9x9xf32>,
    return
  }
}

</mosaic_0001>

<llo_original>
// kernel: att_extractor_forward.1
$region0: #{att_extractor_forward.1}
  #allocation0 [shape = 'u32[]', space=smem, size = 0x4, offset = 0x4, fixed_abs, tag = 'smem constant byte address 0x4 - core index']
  #allocation1 [shape = 'u32[144,128]{1,0:T(1,128)}', space=vmem, size = 0x12000, scoped, tag = 'internal scratch']
  %s0 = inlined_call_operand.vmem [shape: f32[16,32], index: 0, kind: input, shape index: {}]
  %s1 = inlined_call_operand.vmem [shape: f32[112,32], index: 1, kind: input, shape index: {}]
  %s2 = inlined_call_operand.hbm [shape: f32[320,128], index: 2, kind: input, shape index: {}]
  %s3 = inlined_call_operand.vmem [shape: f32[24,128], index: 3, kind: input, shape index: {}]
  %s4 = inlined_call_operand.vmem [shape: f32[2,9,9], index: 4, kind: output, shape index: {0}]
  %s5 = inlined_call_operand.vmem [shape: f32[2,9,9], index: 5, kind: output, shape index: {1}]
  %6 = xla_tuple %s4, %s5
  %s7 = sld [smem:[#allocation0]]
  $region38: #{att_extractor_forward.1} parent=0
    _
  %s9 = ssub.s32 1, %s7
  %s10 = scalar_select 0, %s9, %s7
  $region1: #{att_extractor_forward.1} parent=0
    #allocation2 [shape = 'u8[163840]{0}', space=vmem, size = 0x28000, scoped, tag = 'input window, operand 2, single buffered']
    #allocation3 [shape = 's32[1]{0}', space=sflag, size = 0x4, scoped, tag = 'scoped memory for att_extractor_forward.1']
    %11 = vsyncpa [#allocation3], 0
    // Predicated region
    $region2: #{att_extractor_forward.1} parent=1 // pred_check
      _
    $region3: #{att_extractor_forward.1} parent=1 // pred_check_branch
      %13 = sbr.rel (0) target = $region5
    $region4: #{att_extractor_forward.1} parent=1 // pred_region
      _
    $region5: #{att_extractor_forward.1} parent=1 // pred_fallthru
      _
    // Predicated region
    $region6: #{att_extractor_forward.1} parent=1 // pred_check
      _
    $region7: #{att_extractor_forward.1} parent=1 // pred_check_branch
      %15 = sbr.rel (0) target = $region9
    $region8: #{att_extractor_forward.1} parent=1 // pred_region
      _
    $region9: #{att_extractor_forward.1} parent=1 // pred_fallthru
      _
    // Predicated region
    $region10: #{att_extractor_forward.1} parent=1 // pred_check
      _
    $region11: #{att_extractor_forward.1} parent=1 // pred_check_branch
      %17 = sbr.rel (0) target = $region13
    $region12: #{att_extractor_forward.1} parent=1 // pred_region
      %s19 = ssub.s32 5120, 5120
      %20 = vsyncadd [#allocation3], %s19
      %s21 = sshll.u32 [#allocation2], 4
      %s22 = int_to_ptr.vmem [resolvable:$true] %s21
      %27 = dma.hbm_to_vmem [thread:$0]  %s2, 5120, %s22, [#allocation3], 128, 128, 8
    $region13: #{att_extractor_forward.1} parent=1 // pred_fallthru
      _
    // Predicated region
    $region14: #{att_extractor_forward.1} parent=1 // pred_check
      _
    $region15: #{att_extractor_forward.1} parent=1 // pred_check_branch
      %29 = sbr.rel (0) target = $region17
    $region16: #{att_extractor_forward.1} parent=1 // pred_region
      _
    $region17: #{att_extractor_forward.1} parent=1 // pred_fallthru
      _
    // Predicated region
    $region18: #{att_extractor_forward.1} parent=1 // pred_check
      _
    $region19: #{att_extractor_forward.1} parent=1 // pred_check_branch
      %31 = sbr.rel (0) target = $region21
    $region20: #{att_extractor_forward.1} parent=1 // pred_region
      %32 = dma.done [#allocation3], 5120
    $region21: #{att_extractor_forward.1} parent=1 // pred_fallthru
      _
    %v33 = vld [vmem:[%s1] sm:$0xff]
    %v34 = vld [vmem:[%s1 + $0x8] sm:$0xff]
    %v35 = vld [vmem:[%s1 + $0x10] sm:$0xff]
    %v36 = vld [vmem:[%s1 + $0x18] sm:$0xff]
    %v37 = vld [vmem:[%s1 + $0x20] sm:$0xff]
    %v38 = vld [vmem:[%s1 + $0x28] sm:$0xff]
    %v39 = vld [vmem:[%s1 + $0x30] sm:$0xff]
    %v40 = vld [vmem:[%s1 + $0x38] sm:$0xff]
    %v41 = vld [vmem:[%s1 + $0x40] sm:$0xff]
    %v42 = vld [vmem:[%s1 + $0x48] sm:$0xff]
    %v43 = vld [vmem:[%s1 + $0x50] sm:$0xff]
    %v44 = vld [vmem:[%s1 + $0x58] sm:$0xff]
    %v45 = vld [vmem:[%s1 + $0x60] sm:$0xff]
    %v46 = vld [vmem:[%s1 + $0x68] sm:$0xff]
    %v47 = vld [vmem:[#allocation2] sm:$0xff]
    %v48 = vld [vmem:[#allocation2 + $0x8] sm:$0xff]
    %v49 = vld [vmem:[#allocation2 + $0x10] sm:$0xff]
    %v50 = vld [vmem:[#allocation2 + $0x18] sm:$0xff]
    %v51 = vld [vmem:[#allocation2 + $0x20] sm:$0xff]
    %v52 = vld [vmem:[#allocation2 + $0x28] sm:$0xff]
    %v53 = vld [vmem:[#allocation2 + $0x30] sm:$0xff]
    %v54 = vld [vmem:[#allocation2 + $0x38] sm:$0xff]
    %v55 = vld [vmem:[#allocation2 + $0x40] sm:$0xff]
    %v56 = vld [vmem:[#allocation2 + $0x48] sm:$0xff]
    %v57 = vld [vmem:[#allocation2 + $0x50] sm:$0xff]
    %v58 = vld [vmem:[#allocation2 + $0x58] sm:$0xff]
    %v59 = vld [vmem:[#allocation2 + $0x60] sm:$0xff]
    %v60 = vld [vmem:[#allocation2 + $0x68] sm:$0xff]
    %v61 = vld [vmem:[#allocation2 + $0x70] sm:$0xff]
    %v62 = vld [vmem:[#allocation2 + $0x78] sm:$0xff]
    %v63 = vld [vmem:[#allocation2 + $0x80] sm:$0xff]
    %v64 = vld [vmem:[#allocation2 + $0x88] sm:$0xff]
    %v65 = vld [vmem:[#allocation2 + $0x90] sm:$0xff]
    %v66 = vld [vmem:[#allocation2 + $0x98] sm:$0xff]
    %v67 = vld [vmem:[#allocation2 + $0xa0] sm:$0xff]
    %v68 = vld [vmem:[#allocation2 + $0xa8] sm:$0xff]
    %v69 = vld [vmem:[#allocation2 + $0xb0] sm:$0xff]
    %v70 = vld [vmem:[#allocation2 + $0xb8] sm:$0xff]
    %v71 = vld [vmem:[#allocation2 + $0xc0] sm:$0xff]
    %v72 = vld [vmem:[#allocation2 + $0xc8] sm:$0xff]
    %v73 = vld [vmem:[#allocation2 + $0xd0] sm:$0xff]
    %v74 = vld [vmem:[#allocation2 + $0xd8] sm:$0xff]
    %v75 = vld [vmem:[#allocation2 + $0xe0] sm:$0xff]
    %v76 = vld [vmem:[#allocation2 + $0xe8] sm:$0xff]
    %v77 = vld [vmem:[#allocation2 + $0xf0] sm:$0xff]
    %v78 = vld [vmem:[#allocation2 + $0xf8] sm:$0xff]
    %v79 = vld [vmem:[#allocation2 + $0x100] sm:$0xff]
    %v80 = vld [vmem:[#allocation2 + $0x108] sm:$0xff]
    %v81 = vld [vmem:[#allocation2 + $0x110] sm:$0xff]
    %v82 = vld [vmem:[#allocation2 + $0x118] sm:$0xff]
    %v83 = vld [vmem:[#allocation2 + $0x120] sm:$0xff]
    %v84 = vld [vmem:[#allocation2 + $0x128] sm:$0xff]
    %v85 = vld [vmem:[#allocation2 + $0x130] sm:$0xff]
    %v86 = vld [vmem:[#allocation2 + $0x138] sm:$0xff]
    %v87 = vld [vmem:[%s3] sm:$0x1]
    %v88 = vld [vmem:[%s3 + $0x1] sm:$0x1]
    %v89 = vld [vmem:[%s3 + $0x2] sm:$0x1]
    %v90 = vld [vmem:[%s3 + $0x3] sm:$0x1]
    %v91 = vld [vmem:[%s3 + $0x4] sm:$0x1]
    %v92 = vld [vmem:[%s3 + $0x5] sm:$0x1]
    %v93 = vld [vmem:[%s3 + $0x6] sm:$0x1]
    %v94 = vld [vmem:[%s3 + $0x7] sm:$0x1]
    %v95 = vld [vmem:[%s3 + $0x8] sm:$0x1]
    %v96 = vld [vmem:[%s3 + $0x9] sm:$0x1]
    %v97 = vld [vmem:[%s3 + $0xa] sm:$0x1]
    %v98 = vld [vmem:[%s3 + $0xb] sm:$0x1]
    %v99 = vld [vmem:[%s3 + $0xc] sm:$0x1]
    %v100 = vld [vmem:[%s3 + $0xd] sm:$0x1]
    %v101 = vld [vmem:[%s3 + $0x10] sm:$0x1]
    %v102 = vld [vmem:[%s3 + $0x11] sm:$0x1]
    %v103 = vld [vmem:[%s3 + $0x12] sm:$0x1]
    %v104 = vld [vmem:[%s3 + $0x13] sm:$0x1]
    %v105 = vld [vmem:[%s0] sm:$0xff]
    %v106 = vld [vmem:[%s0 + $0x8] sm:$0xff]
    %vm107 = vcmask 261120
    %v109 = vsel %vm107, %v105, 0
    %v112 = vsel %vm107, %v106, 0
    %114 = vmatprep.subr.mxu0 0.0
    %115 = vmatpush1.msra.mxu0 %v71
    %116 = vmatprep.subr.mxu0 0.0
    %117 = vmatpush1.msra.mxu0 %v72
    %118 = vmatprep.subr.mxu0 0.0
    %119 = vmatpush1.msra.mxu0 %v73
    %120 = vmatprep.subr.mxu0 0.0
    %121 = vmatpush1.msra.mxu0 %v74
    %122 = vmatprep.subr.mxu0 0.0
    %123 = vmatpush1.msra.mxu0 0.0
    %124 = vmatprep.subr.mxu0 0.0
    %125 = vmatpush1.msra.mxu0 0.0
    %126 = vmatprep.subr.mxu0 0.0
    %127 = vmatpush1.msra.mxu0 0.0
    %128 = vmatprep.subr.mxu0 0.0
    %129 = vmatpush1.msra.mxu0 0.0
    %130 = vmatprep.subr.mxu0 0.0
    %131 = vmatpush1.msra.mxu0 0.0
    %132 = vmatprep.subr.mxu0 0.0
    %133 = vmatpush1.msra.mxu0 0.0
    %134 = vmatprep.subr.mxu0 0.0
    %135 = vmatpush1.msra.mxu0 0.0
    %136 = vmatprep.subr.mxu0 0.0
    %137 = vmatpush1.msra.mxu0 0.0
    %138 = vmatprep.subr.mxu0 0.0
    %139 = vmatpush1.msra.mxu0 0.0
    %140 = vmatprep.subr.mxu0 0.0
    %141 = vmatpush1.msra.mxu0 0.0
    %142 = vmatprep.subr.mxu0 0.0
    %143 = vmatpush1.msra.mxu0 0.0
    %144 = vmatprep.subr.mxu0 0.0
    %145 = vmatpush1.msra.mxu0 0.0
    %146 = vmatprep.subr.mxu0 0.0
    %147 = vmatpush1.msra.mxu0 0.0
    %148 = vmatprep.subr.mxu0 0.0
    %149 = vmatpush1.msra.mxu0 0.0
    %150 = vmatprep.subr.mxu0 0.0
    %151 = vmatpush1.msra.mxu0 0.0
    %152 = vmatprep.subr.mxu0 0.0
    %153 = vmatpush1.msra.mxu0 0.0
    %154 = vmatprep.subr.mxu0 0.0
    %155 = vmatpush1.msra.mxu0 0.0
    %156 = vmatprep.subr.mxu0 0.0
    %157 = vmatpush1.msra.mxu0 0.0
    %158 = vmatprep.subr.mxu0 0.0
    %159 = vmatpush1.msra.mxu0 0.0
    %160 = vmatprep.subr.mxu0 0.0
    %161 = vmatpush1.msra.mxu0 0.0
    %162 = vmatprep.subr.mxu0 0.0
    %163 = vmatpush1.msra.mxu0 0.0
    %164 = vmatprep.subr.mxu0 0.0
    %165 = vmatpush1.msra.mxu0 0.0
    %166 = vmatprep.subr.mxu0 0.0
    %167 = vmatpush1.msra.mxu0 0.0
    %168 = vmatprep.subr.mxu0 0.0
    %169 = vmatpush1.msra.mxu0 0.0
    %170 = vmatprep.subr.mxu0 0.0
    %171 = vmatpush1.msra.mxu0 0.0
    %172 = vmatprep.subr.mxu0 0.0
    %173 = vmatpush1.msra.mxu0 0.0
    %174 = vmatprep.subr.mxu0 0.0
    %175 = vmatpush1.msra.mxu0 0.0
    %176 = vmatprep.subr.mxu0 0.0
    %177 = vmatpush1.msra.mxu0 0.0
    %178 = vmatprep.mubr.f32.mxu0 0.0
    %179 = vmatmul.mubr.f32.gmra.mrb[0].mxu0 %v109
    %v180 = vpop.f32.mrb[0].mxu0
    %v181 = vadd.f32 %v33, %v180
    %v182 = vpop.f32.mrb[0].mxu0
    %183 = vmatprep.mubr.f32.mxu0 0.0
    %184 = vmatmul.mubr.f32.gmra.mrb[0].mxu0 %v112
    %v185 = vpop.f32.mrb[0].mxu0
    %v186 = vadd.f32 %v34, %v185
    %v187 = vpop.f32.mrb[0].mxu0
    %188 = vdwg.mxu0
    %v189 = vsel %vm107, %v181, 0.0
    %190 = vadd.xlane.f32.xlu0 %v189
    %v191 = vpop.xlane.xlu0 %190
    %v192 = vsel %vm107, %v186, 0.0
    %193 = vadd.xlane.f32.xlu0 %v192
    %v194 = vpop.xlane.xlu0 %193
    %v195 = vrcp.pop 32.0
    %v196 = vmul.f32 %v191, %v195
    %v197 = vmul.f32 %v194, %v195
    %v198 = vsub.f32 %v181, %v196
    %v199 = vsub.f32 %v186, %v197
    %v200 = vmul.f32 %v198, %v198
    %v201 = vmul.f32 %v199, %v199
    %v202 = vsel %vm107, %v200, 0.0
    %203 = vadd.xlane.f32.xlu0 %v202
    %v204 = vpop.xlane.xlu0 %203
    %v205 = vsel %vm107, %v201, 0.0
    %206 = vadd.xlane.f32.xlu0 %v205
    %v207 = vpop.xlane.xlu0 %206
    %v208 = vmul.f32 %v204, %v195
    %v209 = vmul.f32 %v207, %v195
    %v210 = vadd.f32 %v208, 1e-05
    %v211 = vadd.f32 %v209, 1e-05
    %v212 = vrsqrt.pop %v210
    %v213 = vrsqrt.pop %v211
    %v214 = vmul.f32 %v198, %v212
    %v215 = vmul.f32 %v199, %v213
    %v216 = vlaneseq
    %v217 = vshrl.u32 %v216, 7
    %v218 = vsub.s32 0, %v217
    %v219 = vrot.slane %v87, %v218
    %v220 = vmul.f32 %v214, %v219
    %v221 = vmul.f32 %v215, %v219
    %v222 = vlaneseq
    %v223 = vshrl.u32 %v222, 7
    %v224 = vsub.s32 0, %v223
    %v225 = vrot.slane %v88, %v224
    %v226 = vadd.f32 %v220, %v225
    %v227 = vadd.f32 %v221, %v225
    %vm228 = vcmask 130048
    %v230 = vsel %vm228, %v35, 0
    %v233 = vsel %vm228, %v36, 0
    %v236 = vsel %vm228, %v37, 0
    %v239 = vsel %vm228, %v38, 0
    %241 = vmatprep.subr.mxu0 0.0
    %242 = vmatpush1.msra.mxu0 %v226
    %243 = vmatprep.subr.mxu0 0.0
    %244 = vmatpush1.msra.mxu0 %v227
    %245 = vmatprep.subr.mxu0 0.0
    %246 = vmatpush1.msra.mxu0 0.0
    %247 = vmatprep.subr.mxu0 0.0
    %248 = vmatpush1.msra.mxu0 0.0
    %249 = vmatprep.subr.mxu0 0.0
    %250 = vmatpush1.msra.mxu0 0.0
    %251 = vmatprep.subr.mxu0 0.0
    %252 = vmatpush1.msra.mxu0 0.0
    %253 = vmatprep.subr.mxu0 0.0
    %254 = vmatpush1.msra.mxu0 0.0
    %255 = vmatprep.subr.mxu0 0.0
    %256 = vmatpush1.msra.mxu0 0.0
    %257 = vmatprep.subr.mxu0 0.0
    %258 = vmatpush1.msra.mxu0 0.0
    %259 = vmatprep.subr.mxu0 0.0
    %260 = vmatpush1.msra.mxu0 0.0
    %261 = vmatprep.subr.mxu0 0.0
    %262 = vmatpush1.msra.mxu0 0.0
    %263 = vmatprep.subr.mxu0 0.0
    %264 = vmatpush1.msra.mxu0 0.0
    %265 = vmatprep.subr.mxu0 0.0
    %266 = vmatpush1.msra.mxu0 0.0
    %267 = vmatprep.subr.mxu0 0.0
    %268 = vmatpush1.msra.mxu0 0.0
    %269 = vmatprep.subr.mxu0 0.0
    %270 = vmatpush1.msra.mxu0 0.0
    %271 = vmatprep.subr.mxu0 0.0
    %272 = vmatpush1.msra.mxu0 0.0
    %273 = vmatprep.subr.mxu0 0.0
    %274 = vmatpush1.msra.mxu0 0.0
    %275 = vmatprep.subr.mxu0 0.0
    %276 = vmatpush1.msra.mxu0 0.0
    %277 = vmatprep.subr.mxu0 0.0
    %278 = vmatpush1.msra.mxu0 0.0
    %279 = vmatprep.subr.mxu0 0.0
    %280 = vmatpush1.msra.mxu0 0.0
    %281 = vmatprep.subr.mxu0 0.0
    %282 = vmatpush1.msra.mxu0 0.0
    %283 = vmatprep.subr.mxu0 0.0
    %284 = vmatpush1.msra.mxu0 0.0
    %285 = vmatprep.subr.mxu0 0.0
    %286 = vmatpush1.msra.mxu0 0.0
    %287 = vmatprep.subr.mxu0 0.0
    %288 = vmatpush1.msra.mxu0 0.0
    %289 = vmatprep.subr.mxu0 0.0
    %290 = vmatpush1.msra.mxu0 0.0
    %291 = vmatprep.subr.mxu0 0.0
    %292 = vmatpush1.msra.mxu0 0.0
    %293 = vmatprep.subr.mxu0 0.0
    %294 = vmatpush1.msra.mxu0 0.0
    %295 = vmatprep.subr.mxu0 0.0
    %296 = vmatpush1.msra.mxu0 0.0
    %297 = vmatprep.subr.mxu0 0.0
    %298 = vmatpush1.msra.mxu0 0.0
    %299 = vmatprep.subr.mxu0 0.0
    %300 = vmatpush1.msra.mxu0 0.0
    %301 = vmatprep.subr.mxu0 0.0
    %302 = vmatpush1.msra.mxu0 0.0
    %303 = vmatprep.subr.mxu0 0.0
    %304 = vmatpush1.msra.mxu0 0.0
    %305 = vmatprep.mubr.f32.mxu0 0.0
    %306 = vmatmul.mubr.f32.gmra.mrb[0].mxu0 %v230
    %v307 = vpop.f32.mrb[0].mxu0
    %v308 = vadd.f32 %v39, %v307
    %v309 = vpop.f32.mrb[0].mxu0
    %310 = vmatprep.mubr.f32.mxu0 0.0
    %311 = vmatmul.mubr.f32.gmra.mrb[0].mxu0 %v233
    %v312 = vpop.f32.mrb[0].mxu0
    %v313 = vadd.f32 %v40, %v312
    %v314 = vpop.f32.mrb[0].mxu0
    %315 = vmatprep.mubr.f32.mxu0 0.0
    %316 = vmatmul.mubr.f32.gmra.mrb[0].mxu0 %v236
    %v317 = vpop.f32.mrb[0].mxu0
    %v318 = vadd.f32 %v41, %v317
    %v319 = vpop.f32.mrb[0].mxu0
    %320 = vmatprep.mubr.f32.mxu0 0.0
    %321 = vmatmul.mubr.f32.gmra.mrb[0].mxu0 %v239
    %v322 = vpop.f32.mrb[0].mxu0
    %v323 = vadd.f32 %v42, %v322
    %v324 = vpop.f32.mrb[0].mxu0
    %325 = vdwg.mxu0
    %v326 = vlaneseq
    %v327 = vshrl.u32 %v326, 7
    %v328 = vsub.s32 0, %v327
    %v329 = vrot.slane %v89, %v328
    %v331 = vsel %vm107, %v308, 0
    %v334 = vsel %vm107, %v313, 0
    %v337 = vsel %vm107, %v318, 0
    %v340 = vsel %vm107, %v323, 0
    %342 = vmatprep.subr.mxu0 0.0
    %343 = vmatpush1.msra.mxu0 %v47
    %344 = vmatprep.subr.mxu0 0.0
    %345 = vmatpush1.msra.mxu0 %v48
    %346 = vmatprep.subr.mxu0 0.0
    %347 = vmatpush1.msra.mxu0 %v49
    %348 = vmatprep.subr.mxu0 0.0
    %349 = vmatpush1.msra.mxu0 %v50
    %350 = vmatprep.subr.mxu0 0.0
    %351 = vmatpush1.msra.mxu0 0.0
    %352 = vmatprep.subr.mxu0 0.0
    %353 = vmatpush1.msra.mxu0 0.0
    %354 = vmatprep.subr.mxu0 0.0
    %355 = vmatpush1.msra.mxu0 0.0
    %356 = vmatprep.subr.mxu0 0.0
    %357 = vmatpush1.msra.mxu0 0.0
    %358 = vmatprep.subr.mxu0 0.0
    %359 = vmatpush1.msra.mxu0 0.0
    %360 = vmatprep.subr.mxu0 0.0
    %361 = vmatpush1.msra.mxu0 0.0
    %362 = vmatprep.subr.mxu0 0.0
    %363 = vmatpush1.msra.mxu0 0.0
    %364 = vmatprep.subr.mxu0 0.0
    %365 = vmatpush1.msra.mxu0 0.0
    %366 = vmatprep.subr.mxu0 0.0
    %367 = vmatpush1.msra.mxu0 0.0
    %368 = vmatprep.subr.mxu0 0.0
    %369 = vmatpush1.msra.mxu0 0.0
    %370 = vmatprep.subr.mxu0 0.0
    %371 = vmatpush1.msra.mxu0 0.0
    %372 = vmatprep.subr.mxu0 0.0
    %373 = vmatpush1.msra.mxu0 0.0
    %374 = vmatprep.subr.mxu0 0.0
    %375 = vmatpush1.msra.mxu0 0.0
    %376 = vmatprep.subr.mxu0 0.0
    %377 = vmatpush1.msra.mxu0 0.0
    %378 = vmatprep.subr.mxu0 0.0
    %379 = vmatpush1.msra.mxu0 0.0
    %380 = vmatprep.subr.mxu0 0.0
    %381 = vmatpush1.msra.mxu0 0.0
    %382 = vmatprep.subr.mxu0 0.0
    %383 = vmatpush1.msra.mxu0 0.0
    %384 = vmatprep.subr.mxu0 0.0
    %385 = vmatpush1.msra.mxu0 0.0
    %386 = vmatprep.subr.mxu0 0.0
    %387 = vmatpush1.msra.mxu0 0.0
    %388 = vmatprep.subr.mxu0 0.0
    %389 = vmatpush1.msra.mxu0 0.0
    %390 = vmatprep.subr.mxu0 0.0
    %391 = vmatpush1.msra.mxu0 0.0
    %392 = vmatprep.subr.mxu0 0.0
    %393 = vmatpush1.msra.mxu0 0.0
    %394 = vmatprep.subr.mxu0 0.0
    %395 = vmatpush1.msra.mxu0 0.0
    %396 = vmatprep.subr.mxu0 0.0
    %397 = vmatpush1.msra.mxu0 0.0
    %398 = vmatprep.subr.mxu0 0.0
    %399 = vmatpush1.msra.mxu0 0.0
    %400 = vmatprep.subr.mxu0 0.0
    %401 = vmatpush1.msra.mxu0 0.0
    %402 = vmatprep.subr.mxu0 0.0
    %403 = vmatpush1.msra.mxu0 0.0
    %404 = vmatprep.subr.mxu0 0.0
    %405 = vmatpush1.msra.mxu0 0.0
    %406 = vmatprep.mubr.f32.mxu0 0.0
    %407 = vmatmul.mubr.f32.gmra.mrb[0].mxu0 %v331
    %v408 = vpop.f32.mrb[0].mxu0
    %v409 = vadd.f32 %v329, %v408
    %v410 = vpop.f32.mrb[0].mxu0
    %411 = vmatprep.mubr.f32.mxu0 0.0
    %412 = vmatmul.mubr.f32.gmra.mrb[0].mxu0 %v334
    %v413 = vpop.f32.mrb[0].mxu0
    %v414 = vadd.f32 %v329, %v413
    %v415 = vpop.f32.mrb[0].mxu0
    %416 = vmatprep.mubr.f32.mxu0 0.0
    %417 = vmatmul.mubr.f32.gmra.mrb[0].mxu0 %v337
    %v418 = vpop.f32.mrb[0].mxu0
    %v419 = vadd.f32 %v329, %v418
    %v420 = vpop.f32.mrb[0].mxu0
    %421 = vmatprep.mubr.f32.mxu0 0.0
    %422 = vmatmul.mubr.f32.gmra.mrb[0].mxu0 %v340
    %v423 = vpop.f32.mrb[0].mxu0
    %v424 = vadd.f32 %v329, %v423
    %v425 = vpop.f32.mrb[0].mxu0
    %426 = vdwg.mxu0
    %v427 = vlaneseq
    %v428 = vshrl.u32 %v427, 7
    %v429 = vsub.s32 0, %v428
    %v430 = vrot.slane %v90, %v429
    %431 = vmatprep.subr.mxu0 0.0
    %432 = vmatpush1.msra.mxu0 %v51
    %433 = vmatprep.subr.mxu0 0.0
    %434 = vmatpush1.msra.mxu0 %v52
    %435 = vmatprep.subr.mxu0 0.0
    %436 = vmatpush1.msra.mxu0 %v53
    %437 = vmatprep.subr.mxu0 0.0
    %438 = vmatpush1.msra.mxu0 %v54
    %439 = vmatprep.subr.mxu0 0.0
    %440 = vmatpush1.msra.mxu0 0.0
    %441 = vmatprep.subr.mxu0 0.0
    %442 = vmatpush1.msra.mxu0 0.0
    %443 = vmatprep.subr.mxu0 0.0
    %444 = vmatpush1.msra.mxu0 0.0
    %445 = vmatprep.subr.mxu0 0.0
    %446 = vmatpush1.msra.mxu0 0.0
    %447 = vmatprep.subr.mxu0 0.0
    %448 = vmatpush1.msra.mxu0 0.0
    %449 = vmatprep.subr.mxu0 0.0
    %450 = vmatpush1.msra.mxu0 0.0
    %451 = vmatprep.subr.mxu0 0.0
    %452 = vmatpush1.msra.mxu0 0.0
    %453 = vmatprep.subr.mxu0 0.0
    %454 = vmatpush1.msra.mxu0 0.0
    %455 = vmatprep.subr.mxu0 0.0
    %456 = vmatpush1.msra.mxu0 0.0
    %457 = vmatprep.subr.mxu0 0.0
    %458 = vmatpush1.msra.mxu0 0.0
    %459 = vmatprep.subr.mxu0 0.0
    %460 = vmatpush1.msra.mxu0 0.0
    %461 = vmatprep.subr.mxu0 0.0
    %462 = vmatpush1.msra.mxu0 0.0
    %463 = vmatprep.subr.mxu0 0.0
    %464 = vmatpush1.msra.mxu0 0.0
    %465 = vmatprep.subr.mxu0 0.0
    %466 = vmatpush1.msra.mxu0 0.0
    %467 = vmatprep.subr.mxu0 0.0
    %468 = vmatpush1.msra.mxu0 0.0
    %469 = vmatprep.subr.mxu0 0.0
    %470 = vmatpush1.msra.mxu0 0.0
    %471 = vmatprep.subr.mxu0 0.0
    %472 = vmatpush1.msra.mxu0 0.0
    %473 = vmatprep.subr.mxu0 0.0
    %474 = vmatpush1.msra.mxu0 0.0
    %475 = vmatprep.subr.mxu0 0.0
    %476 = vmatpush1.msra.mxu0 0.0
    %477 = vmatprep.subr.mxu0 0.0
    %478 = vmatpush1.msra.mxu0 0.0
    %479 = vmatprep.subr.mxu0 0.0
    %480 = vmatpush1.msra.mxu0 0.0
    %481 = vmatprep.subr.mxu0 0.0
    %482 = vmatpush1.msra.mxu0 0.0
    %483 = vmatprep.subr.mxu0 0.0
    %484 = vmatpush1.msra.mxu0 0.0
    %485 = vmatprep.subr.mxu0 0.0
    %486 = vmatpush1.msra.mxu0 0.0
    %487 = vmatprep.subr.mxu0 0.0
    %488 = vmatpush1.msra.mxu0 0.0
    %489 = vmatprep.subr.mxu0 0.0
    %490 = vmatpush1.msra.mxu0 0.0
    %491 = vmatprep.subr.mxu0 0.0
    %492 = vmatpush1.msra.mxu0 0.0
    %493 = vmatprep.subr.mxu0 0.0
    %494 = vmatpush1.msra.mxu0 0.0
    %495 = vmatprep.mubr.f32.mxu0 0.0
    %496 = vmatmul.mubr.f32.gmra.mrb[0].mxu0 %v331
    %v497 = vpop.f32.mrb[0].mxu0
    %v498 = vadd.f32 %v430, %v497
    %v499 = vpop.f32.mrb[0].mxu0
    %500 = vmatprep.mubr.f32.mxu0 0.0
    %501 = vmatmul.mubr.f32.gmra.mrb[0].mxu0 %v334
    %v502 = vpop.f32.mrb[0].mxu0
    %v503 = vadd.f32 %v430, %v502
    %v504 = vpop.f32.mrb[0].mxu0
    %505 = vmatprep.mubr.f32.mxu0 0.0
    %506 = vmatmul.mubr.f32.gmra.mrb[0].mxu0 %v337
    %v507 = vpop.f32.mrb[0].mxu0
    %v508 = vadd.f32 %v430, %v507
    %v509 = vpop.f32.mrb[0].mxu0
    %510 = vmatprep.mubr.f32.mxu0 0.0
    %511 = vmatmul.mubr.f32.gmra.mrb[0].mxu0 %v340
    %v512 = vpop.f32.mrb[0].mxu0
    %v513 = vadd.f32 %v430, %v512
    %v514 = vpop.f32.mrb[0].mxu0
    %515 = vdwg.mxu0
    %v516 = vlaneseq
    %v517 = vshrl.u32 %v516, 7
    %v518 = vsub.s32 0, %v517
    %v519 = vrot.slane %v91, %v518
    %520 = vmatprep.subr.mxu0 0.0
    %521 = vmatpush1.msra.mxu0 %v55
    %522 = vmatprep.subr.mxu0 0.0
    %523 = vmatpush1.msra.mxu0 %v56
    %524 = vmatprep.subr.mxu0 0.0
    %525 = vmatpush1.msra.mxu0 %v57
    %526 = vmatprep.subr.mxu0 0.0
    %527 = vmatpush1.msra.mxu0 %v58
    %528 = vmatprep.subr.mxu0 0.0
    %529 = vmatpush1.msra.mxu0 0.0
    %530 = vmatprep.subr.mxu0 0.0
    %531 = vmatpush1.msra.mxu0 0.0
    %532 = vmatprep.subr.mxu0 0.0
    %533 = vmatpush1.msra.mxu0 0.0
    %534 = vmatprep.subr.mxu0 0.0
    %535 = vmatpush1.msra.mxu0 0.0
    %536 = vmatprep.subr.mxu0 0.0
    %537 = vmatpush1.msra.mxu0 0.0
    %538 = vmatprep.subr.mxu0 0.0
    %539 = vmatpush1.msra.mxu0 0.0
    %540 = vmatprep.subr.mxu0 0.0
    %541 = vmatpush1.msra.mxu0 0.0
    %542 = vmatprep.subr.mxu0 0.0
    %543 = vmatpush1.msra.mxu0 0.0
    %544 = vmatprep.subr.mxu0 0.0
    %545 = vmatpush1.msra.mxu0 0.0
    %546 = vmatprep.subr.mxu0 0.0
    %547 = vmatpush1.msra.mxu0 0.0
    %548 = vmatprep.subr.mxu0 0.0
    %549 = vmatpush1.msra.mxu0 0.0
    %550 = vmatprep.subr.mxu0 0.0
    %551 = vmatpush1.msra.mxu0 0.0
    %552 = vmatprep.subr.mxu0 0.0
    %553 = vmatpush1.msra.mxu0 0.0
    %554 = vmatprep.subr.mxu0 0.0
    %555 = vmatpush1.msra.mxu0 0.0
    %556 = vmatprep.subr.mxu0 0.0
    %557 = vmatpush1.msra.mxu0 0.0
    %558 = vmatprep.subr.mxu0 0.0
    %559 = vmatpush1.msra.mxu0 0.0
    %560 = vmatprep.subr.mxu0 0.0
    %561 = vmatpush1.msra.mxu0 0.0
    %562 = vmatprep.subr.mxu0 0.0
    %563 = vmatpush1.msra.mxu0 0.0
    %564 = vmatprep.subr.mxu0 0.0
    %565 = vmatpush1.msra.mxu0 0.0
    %566 = vmatprep.subr.mxu0 0.0
    %567 = vmatpush1.msra.mxu0 0.0
    %568 = vmatprep.subr.mxu0 0.0
    %569 = vmatpush1.msra.mxu0 0.0
    %570 = vmatprep.subr.mxu0 0.0
    %571 = vmatpush1.msra.mxu0 0.0
    %572 = vmatprep.subr.mxu0 0.0
    %573 = vmatpush1.msra.mxu0 0.0
    %574 = vmatprep.subr.mxu0 0.0
    %575 = vmatpush1.msra.mxu0 0.0
    %576 = vmatprep.subr.mxu0 0.0
    %577 = vmatpush1.msra.mxu0 0.0
    %578 = vmatprep.subr.mxu0 0.0
    %579 = vmatpush1.msra.mxu0 0.0
    %580 = vmatprep.subr.mxu0 0.0
    %581 = vmatpush1.msra.mxu0 0.0
    %582 = vmatprep.subr.mxu0 0.0
    %583 = vmatpush1.msra.mxu0 0.0
    %584 = vmatprep.mubr.f32.mxu0 0.0
    %585 = vmatmul.mubr.f32.gmra.mrb[0].mxu0 %v331
    %v586 = vpop.f32.mrb[0].mxu0
    %v587 = vadd.f32 %v519, %v586
    %v588 = vpop.f32.mrb[0].mxu0
    %589 = vmatprep.mubr.f32.mxu0 0.0
    %590 = vmatmul.mubr.f32.gmra.mrb[0].mxu0 %v334
    %v591 = vpop.f32.mrb[0].mxu0
    %v592 = vadd.f32 %v519, %v591
    %v593 = vpop.f32.mrb[0].mxu0
    %594 = vmatprep.mubr.f32.mxu0 0.0
    %595 = vmatmul.mubr.f32.gmra.mrb[0].mxu0 %v337
    %v596 = vpop.f32.mrb[0].mxu0
    %v597 = vadd.f32 %v519, %v596
    %v598 = vpop.f32.mrb[0].mxu0
    %599 = vmatprep.mubr.f32.mxu0 0.0
    %600 = vmatmul.mubr.f32.gmra.mrb[0].mxu0 %v340
    %v601 = vpop.f32.mrb[0].mxu0
    %v602 = vadd.f32 %v519, %v601
    %v603 = vpop.f32.mrb[0].mxu0
    %604 = vdwg.mxu0
    %v605 = vlaneseq
    %v606 = vshrl.u32 %v605, 7
    %v607 = vsub.s32 0, %v606
    %v608 = vrot.slane %v101, %v607
    %v609 = vmul.f32 %v409, %v608
    %v610 = vmul.f32 %v414, %v608
    %v611 = vmul.f32 %v419, %v608
    %v612 = vmul.f32 %v424, %v608
    %v614 = vsel %vm107, %v609, 0
    %v617 = vsel %vm107, %v610, 0
    %v620 = vsel %vm107, %v611, 0
    %v623 = vsel %vm107, %v612, 0
    %v626 = vsel %vm107, %v498, 0
    %v629 = vsel %vm107, %v503, 0
    %v632 = vsel %vm107, %v508, 0
    %v635 = vsel %vm107, %v513, 0
    %637 = vmatprep.subr.mxu0 0.0
    %638 = vmatpush1.xpose.msra.mxu0 %v626
    %639 = vmatprep.subr.mxu0 0.0
    %640 = vmatpush1.xpose.msra.mxu0 %v629
    %641 = vmatprep.subr.mxu0 0.0
    %642 = vmatpush1.xpose.msra.mxu0 %v632
    %643 = vmatprep.subr.mxu0 0.0
    %644 = vmatpush1.xpose.msra.mxu0 %v635
    %645 = vmatprep.subr.mxu0 0.0
    %646 = vmatpush1.xpose.msra.mxu0 0.0
    %647 = vmatprep.subr.mxu0 0.0
    %648 = vmatpush1.xpose.msra.mxu0 0.0
    %649 = vmatprep.subr.mxu0 0.0
    %650 = vmatpush1.xpose.msra.mxu0 0.0
    %651 = vmatprep.subr.mxu0 0.0
    %652 = vmatpush1.xpose.msra.mxu0 0.0
    %653 = vmatprep.subr.mxu0 0.0
    %654 = vmatpush1.xpose.msra.mxu0 0.0
    %655 = vmatprep.subr.mxu0 0.0
    %656 = vmatpush1.xpose.msra.mxu0 0.0
    %657 = vmatprep.subr.mxu0 0.0
    %658 = vmatpush1.xpose.msra.mxu0 0.0
    %659 = vmatprep.subr.mxu0 0.0
    %660 = vmatpush1.xpose.msra.mxu0 0.0
    %661 = vmatprep.subr.mxu0 0.0
    %662 = vmatpush1.xpose.msra.mxu0 0.0
    %663 = vmatprep.subr.mxu0 0.0
    %664 = vmatpush1.xpose.msra.mxu0 0.0
    %665 = vmatprep.subr.mxu0 0.0
    %666 = vmatpush1.xpose.msra.mxu0 0.0
    %667 = vmatprep.subr.mxu0 0.0
    %668 = vmatpush1.xpose.msra.mxu0 0.0
    %669 = vmatprep.subr.mxu0 0.0
    %670 = vmatpush1.xpose.msra.mxu0 0.0
    %671 = vmatprep.subr.mxu0 0.0
    %672 = vmatpush1.xpose.msra.mxu0 0.0
    %673 = vmatprep.subr.mxu0 0.0
    %674 = vmatpush1.xpose.msra.mxu0 0.0
    %675 = vmatprep.subr.mxu0 0.0
    %676 = vmatpush1.xpose.msra.mxu0 0.0
    %677 = vmatprep.subr.mxu0 0.0
    %678 = vmatpush1.xpose.msra.mxu0 0.0
    %679 = vmatprep.subr.mxu0 0.0
    %680 = vmatpush1.xpose.msra.mxu0 0.0
    %681 = vmatprep.subr.mxu0 0.0
    %682 = vmatpush1.xpose.msra.mxu0 0.0
    %683 = vmatprep.subr.mxu0 0.0
    %684 = vmatpush1.xpose.msra.mxu0 0.0
    %685 = vmatprep.subr.mxu0 0.0
    %686 = vmatpush1.xpose.msra.mxu0 0.0
    %687 = vmatprep.subr.mxu0 0.0
    %688 = vmatpush1.xpose.msra.mxu0 0.0
    %689 = vmatprep.subr.mxu0 0.0
    %690 = vmatpush1.xpose.msra.mxu0 0.0
    %691 = vmatprep.subr.mxu0 0.0
    %692 = vmatpush1.xpose.msra.mxu0 0.0
    %693 = vmatprep.subr.mxu0 0.0
    %694 = vmatpush1.xpose.msra.mxu0 0.0
    %695 = vmatprep.subr.mxu0 0.0
    %696 = vmatpush1.xpose.msra.mxu0 0.0
    %697 = vmatprep.subr.mxu0 0.0
    %698 = vmatpush1.xpose.msra.mxu0 0.0
    %699 = vmatprep.subr.mxu0 0.0
    %700 = vmatpush1.xpose.msra.mxu0 0.0
    %701 = vmatprep.mubr.f32.mxu0 0.0
    %702 = vmatmul.mubr.f32.gmra.mrb[0].mxu0 %v614
    %v703 = vpop.f32.mrb[0].mxu0
    %v704 = vadd.f32 %v43, %v703
    %v705 = vpop.f32.mrb[0].mxu0
    %706 = vmatprep.mubr.f32.mxu0 0.0
    %707 = vmatmul.mubr.f32.gmra.mrb[0].mxu0 %v617
    %v708 = vpop.f32.mrb[0].mxu0
    %v709 = vadd.f32 %v44, %v708
    %v710 = vpop.f32.mrb[0].mxu0
    %711 = vmatprep.mubr.f32.mxu0 0.0
    %712 = vmatmul.mubr.f32.gmra.mrb[0].mxu0 %v620
    %v713 = vpop.f32.mrb[0].mxu0
    %v714 = vadd.f32 %v45, %v713
    %v715 = vpop.f32.mrb[0].mxu0
    %716 = vmatprep.mubr.f32.mxu0 0.0
    %717 = vmatmul.mubr.f32.gmra.mrb[0].mxu0 %v623
    %v718 = vpop.f32.mrb[0].mxu0
    %v719 = vadd.f32 %v46, %v718
    %v720 = vpop.f32.mrb[0].mxu0
    %721 = vdwg.mxu0
    %v722 = vsel %vm107, %v704, -inf
    %723 = vmax.xlane.f32.xlu0 %v722
    %v724 = vpop.xlane.xlu0 %723
    %v725 = vsel %vm107, %v709, -inf
    %726 = vmax.xlane.f32.xlu0 %v725
    %v727 = vpop.xlane.xlu0 %726
    %v728 = vsel %vm107, %v714, -inf
    %729 = vmax.xlane.f32.xlu0 %v728
    %v730 = vpop.xlane.xlu0 %729
    %v731 = vsel %vm107, %v719, -inf
    %732 = vmax.xlane.f32.xlu0 %v731
    %v733 = vpop.xlane.xlu0 %732
    %v734 = vsub.f32 %v704, %v724
    %v735 = vsub.f32 %v709, %v727
    %v736 = vsub.f32 %v714, %v730
    %v737 = vsub.f32 %v719, %v733
    %v738 = vmul.f32 %v734, 1.442695
    %v739 = vpow.pop %v738
    %v740 = vmul.f32 %v735, 1.442695
    %v741 = vpow.pop %v740
    %v742 = vmul.f32 %v736, 1.442695
    %v743 = vpow.pop %v742
    %v744 = vmul.f32 %v737, 1.442695
    %v745 = vpow.pop %v744
    %v746 = vsel %vm107, %v739, 0.0
    %747 = vadd.xlane.f32.xlu0 %v746
    %v748 = vpop.xlane.xlu0 %747
    %v749 = vsel %vm107, %v741, 0.0
    %750 = vadd.xlane.f32.xlu0 %v749
    %v751 = vpop.xlane.xlu0 %750
    %v752 = vsel %vm107, %v743, 0.0
    %753 = vadd.xlane.f32.xlu0 %v752
    %v754 = vpop.xlane.xlu0 %753
    %v755 = vsel %vm107, %v745, 0.0
    %756 = vadd.xlane.f32.xlu0 %v755
    %v757 = vpop.xlane.xlu0 %756
    %v758 = vrcp.pop %v748
    %v759 = vmul.f32 %v739, %v758
    %v760 = vrcp.pop %v751
    %v761 = vmul.f32 %v741, %v760
    %v762 = vrcp.pop %v754
    %v763 = vmul.f32 %v743, %v762
    %v764 = vrcp.pop %v757
    %v765 = vmul.f32 %v745, %v764
    %v767 = vsel %vm107, %v759, 0
    %v770 = vsel %vm107, %v761, 0
    %v773 = vsel %vm107, %v763, 0
    %v776 = vsel %vm107, %v765, 0
    %778 = vmatprep.subr.mxu0 0.0
    %779 = vmatpush1.msra.mxu0 %v587
    %780 = vmatprep.subr.mxu0 0.0
    %781 = vmatpush1.msra.mxu0 %v592
    %782 = vmatprep.subr.mxu0 0.0
    %783 = vmatpush1.msra.mxu0 %v597
    %784 = vmatprep.subr.mxu0 0.0
    %785 = vmatpush1.msra.mxu0 %v602
    %786 = vmatprep.subr.mxu0 0.0
    %787 = vmatpush1.msra.mxu0 0.0
    %788 = vmatprep.subr.mxu0 0.0
    %789 = vmatpush1.msra.mxu0 0.0
    %790 = vmatprep.subr.mxu0 0.0
    %791 = vmatpush1.msra.mxu0 0.0
    %792 = vmatprep.subr.mxu0 0.0
    %793 = vmatpush1.msra.mxu0 0.0
    %794 = vmatprep.subr.mxu0 0.0
    %795 = vmatpush1.msra.mxu0 0.0
    %796 = vmatprep.subr.mxu0 0.0
    %797 = vmatpush1.msra.mxu0 0.0
    %798 = vmatprep.subr.mxu0 0.0
    %799 = vmatpush1.msra.mxu0 0.0
    %800 = vmatprep.subr.mxu0 0.0
    %801 = vmatpush1.msra.mxu0 0.0
    %802 = vmatprep.subr.mxu0 0.0
    %803 = vmatpush1.msra.mxu0 0.0
    %804 = vmatprep.subr.mxu0 0.0
    %805 = vmatpush1.msra.mxu0 0.0
    %806 = vmatprep.subr.mxu0 0.0
    %807 = vmatpush1.msra.mxu0 0.0
    %808 = vmatprep.subr.mxu0 0.0
    %809 = vmatpush1.msra.mxu0 0.0
    %810 = vmatprep.subr.mxu0 0.0
    %811 = vmatpush1.msra.mxu0 0.0
    %812 = vmatprep.subr.mxu0 0.0
    %813 = vmatpush1.msra.mxu0 0.0
    %814 = vmatprep.subr.mxu0 0.0
    %815 = vmatpush1.msra.mxu0 0.0
    %816 = vmatprep.subr.mxu0 0.0
    %817 = vmatpush1.msra.mxu0 0.0
    %818 = vmatprep.subr.mxu0 0.0
    %819 = vmatpush1.msra.mxu0 0.0
    %820 = vmatprep.subr.mxu0 0.0
    %821 = vmatpush1.msra.mxu0 0.0
    %822 = vmatprep.subr.mxu0 0.0
    %823 = vmatpush1.msra.mxu0 0.0
    %824 = vmatprep.subr.mxu0 0.0
    %825 = vmatpush1.msra.mxu0 0.0
    %826 = vmatprep.subr.mxu0 0.0
    %827 = vmatpush1.msra.mxu0 0.0
    %828 = vmatprep.subr.mxu0 0.0
    %829 = vmatpush1.msra.mxu0 0.0
    %830 = vmatprep.subr.mxu0 0.0
    %831 = vmatpush1.msra.mxu0 0.0
    %832 = vmatprep.subr.mxu0 0.0
    %833 = vmatpush1.msra.mxu0 0.0
    %834 = vmatprep.subr.mxu0 0.0
    %835 = vmatpush1.msra.mxu0 0.0
    %836 = vmatprep.subr.mxu0 0.0
    %837 = vmatpush1.msra.mxu0 0.0
    %838 = vmatprep.subr.mxu0 0.0
    %839 = vmatpush1.msra.mxu0 0.0
    %840 = vmatprep.subr.mxu0 0.0
    %841 = vmatpush1.msra.mxu0 0.0
    %842 = vmatprep.mubr.f32.mxu0 0.0
    %843 = vmatmul.mubr.f32.gmra.mrb[0].mxu0 %v767
    %v844 = vpop.f32.mrb[0].mxu0
    %v845 = vadd.f32 0.0, %v844
    %v846 = vpop.f32.mrb[0].mxu0
    %847 = vmatprep.mubr.f32.mxu0 0.0
    %848 = vmatmul.mubr.f32.gmra.mrb[0].mxu0 %v770
    %v849 = vpop.f32.mrb[0].mxu0
    %v850 = vadd.f32 0.0, %v849
    %v851 = vpop.f32.mrb[0].mxu0
    %852 = vmatprep.mubr.f32.mxu0 0.0
    %853 = vmatmul.mubr.f32.gmra.mrb[0].mxu0 %v773
    %v854 = vpop.f32.mrb[0].mxu0
    %v855 = vadd.f32 0.0, %v854
    %v856 = vpop.f32.mrb[0].mxu0
    %857 = vmatprep.mubr.f32.mxu0 0.0
    %858 = vmatmul.mubr.f32.gmra.mrb[0].mxu0 %v776
    %v859 = vpop.f32.mrb[0].mxu0
    %v860 = vadd.f32 0.0, %v859
    %v861 = vpop.f32.mrb[0].mxu0
    %862 = vdwg.mxu0
    %v863 = vmul.f32 %v845, %v608
    %v864 = vmul.f32 %v850, %v608
    %v865 = vmul.f32 %v855, %v608
    %v866 = vmul.f32 %v860, %v608
    %v867 = vlaneseq
    %v868 = vshrl.u32 %v867, 7
    %v869 = vsub.s32 0, %v868
    %v870 = vrot.slane %v102, %v869
    %v871 = vmul.f32 %v409, %v870
    %v872 = vmul.f32 %v414, %v870
    %v873 = vmul.f32 %v419, %v870
    %v874 = vmul.f32 %v424, %v870
    %v876 = vsel %vm107, %v871, 0
    %v879 = vsel %vm107, %v872, 0
    %v882 = vsel %vm107, %v873, 0
    %v885 = vsel %vm107, %v874, 0
    %887 = vmatprep.subr.mxu0 0.0
    %888 = vmatpush1.xpose.msra.mxu0 %v626
    %889 = vmatprep.subr.mxu0 0.0
    %890 = vmatpush1.xpose.msra.mxu0 %v629
    %891 = vmatprep.subr.mxu0 0.0
    %892 = vmatpush1.xpose.msra.mxu0 %v632
    %893 = vmatprep.subr.mxu0 0.0
    %894 = vmatpush1.xpose.msra.mxu0 %v635
    %895 = vmatprep.subr.mxu0 0.0
    %896 = vmatpush1.xpose.msra.mxu0 0.0
    %897 = vmatprep.subr.mxu0 0.0
    %898 = vmatpush1.xpose.msra.mxu0 0.0
    %899 = vmatprep.subr.mxu0 0.0
    %900 = vmatpush1.xpose.msra.mxu0 0.0
    %901 = vmatprep.subr.mxu0 0.0
    %902 = vmatpush1.xpose.msra.mxu0 0.0
    %903 = vmatprep.subr.mxu0 0.0
    %904 = vmatpush1.xpose.msra.mxu0 0.0
    %905 = vmatprep.subr.mxu0 0.0
    %906 = vmatpush1.xpose.msra.mxu0 0.0
    %907 = vmatprep.subr.mxu0 0.0
    %908 = vmatpush1.xpose.msra.mxu0 0.0
    %909 = vmatprep.subr.mxu0 0.0
    %910 = vmatpush1.xpose.msra.mxu0 0.0
    %911 = vmatprep.subr.mxu0 0.0
    %912 = vmatpush1.xpose.msra.mxu0 0.0
    %913 = vmatprep.subr.mxu0 0.0
    %914 = vmatpush1.xpose.msra.mxu0 0.0
    %915 = vmatprep.subr.mxu0 0.0
    %916 = vmatpush1.xpose.msra.mxu0 0.0
    %917 = vmatprep.subr.mxu0 0.0
    %918 = vmatpush1.xpose.msra.mxu0 0.0
    %919 = vmatprep.subr.mxu0 0.0
    %920 = vmatpush1.xpose.msra.mxu0 0.0
    %921 = vmatprep.subr.mxu0 0.0
    %922 = vmatpush1.xpose.msra.mxu0 0.0
    %923 = vmatprep.subr.mxu0 0.0
    %924 = vmatpush1.xpose.msra.mxu0 0.0
    %925 = vmatprep.subr.mxu0 0.0
    %926 = vmatpush1.xpose.msra.mxu0 0.0
    %927 = vmatprep.subr.mxu0 0.0
    %928 = vmatpush1.xpose.msra.mxu0 0.0
    %929 = vmatprep.subr.mxu0 0.0
    %930 = vmatpush1.xpose.msra.mxu0 0.0
    %931 = vmatprep.subr.mxu0 0.0
    %932 = vmatpush1.xpose.msra.mxu0 0.0
    %933 = vmatprep.subr.mxu0 0.0
    %934 = vmatpush1.xpose.msra.mxu0 0.0
    %935 = vmatprep.subr.mxu0 0.0
    %936 = vmatpush1.xpose.msra.mxu0 0.0
    %937 = vmatprep.subr.mxu0 0.0
    %938 = vmatpush1.xpose.msra.mxu0 0.0
    %939 = vmatprep.subr.mxu0 0.0
    %940 = vmatpush1.xpose.msra.mxu0 0.0
    %941 = vmatprep.subr.mxu0 0.0
    %942 = vmatpush1.xpose.msra.mxu0 0.0
    %943 = vmatprep.subr.mxu0 0.0
    %944 = vmatpush1.xpose.msra.mxu0 0.0
    %945 = vmatprep.subr.mxu0 0.0
    %946 = vmatpush1.xpose.msra.mxu0 0.0
    %947 = vmatprep.subr.mxu0 0.0
    %948 = vmatpush1.xpose.msra.mxu0 0.0
    %949 = vmatprep.subr.mxu0 0.0
    %950 = vmatpush1.xpose.msra.mxu0 0.0
    %951 = vmatprep.mubr.f32.mxu0 0.0
    %952 = vmatmul.mubr.f32.gmra.mrb[0].mxu0 %v876
    %v953 = vpop.f32.mrb[0].mxu0
    %v954 = vadd.f32 %v43, %v953
    %v955 = vpop.f32.mrb[0].mxu0
    %956 = vmatprep.mubr.f32.mxu0 0.0
    %957 = vmatmul.mubr.f32.gmra.mrb[0].mxu0 %v879
    %v958 = vpop.f32.mrb[0].mxu0
    %v959 = vadd.f32 %v44, %v958
    %v960 = vpop.f32.mrb[0].mxu0
    %961 = vmatprep.mubr.f32.mxu0 0.0
    %962 = vmatmul.mubr.f32.gmra.mrb[0].mxu0 %v882
    %v963 = vpop.f32.mrb[0].mxu0
    %v964 = vadd.f32 %v45, %v963
    %v965 = vpop.f32.mrb[0].mxu0
    %966 = vmatprep.mubr.f32.mxu0 0.0
    %967 = vmatmul.mubr.f32.gmra.mrb[0].mxu0 %v885
    %v968 = vpop.f32.mrb[0].mxu0
    %v969 = vadd.f32 %v46, %v968
    %v970 = vpop.f32.mrb[0].mxu0
    %971 = vdwg.mxu0
    %v972 = vsel %vm107, %v954, -inf
    %973 = vmax.xlane.f32.xlu0 %v972
    %v974 = vpop.xlane.xlu0 %973
    %v975 = vsel %vm107, %v959, -inf
    %976 = vmax.xlane.f32.xlu0 %v975
    %v977 = vpop.xlane.xlu0 %976
    %v978 = vsel %vm107, %v964, -inf
    %979 = vmax.xlane.f32.xlu0 %v978
    %v980 = vpop.xlane.xlu0 %979
    %v981 = vsel %vm107, %v969, -inf
    %982 = vmax.xlane.f32.xlu0 %v981
    %v983 = vpop.xlane.xlu0 %982
    %v984 = vsub.f32 %v954, %v974
    %v985 = vsub.f32 %v959, %v977
    %v986 = vsub.f32 %v964, %v980
    %v987 = vsub.f32 %v969, %v983
    %v988 = vmul.f32 %v984, 1.442695
    %v989 = vpow.pop %v988
    %v990 = vmul.f32 %v985, 1.442695
    %v991 = vpow.pop %v990
    %v992 = vmul.f32 %v986, 1.442695
    %v993 = vpow.pop %v992
    %v994 = vmul.f32 %v987, 1.442695
    %v995 = vpow.pop %v994
    %v996 = vsel %vm107, %v989, 0.0
    %997 = vadd.xlane.f32.xlu0 %v996
    %v998 = vpop.xlane.xlu0 %997
    %v999 = vsel %vm107, %v991, 0.0
    %1000 = vadd.xlane.f32.xlu0 %v999
    %v1001 = vpop.xlane.xlu0 %1000
    %v1002 = vsel %vm107, %v993, 0.0
    %1003 = vadd.xlane.f32.xlu0 %v1002
    %v1004 = vpop.xlane.xlu0 %1003
    %v1005 = vsel %vm107, %v995, 0.0
    %1006 = vadd.xlane.f32.xlu0 %v1005
    %v1007 = vpop.xlane.xlu0 %1006
    %v1008 = vrcp.pop %v998
    %v1009 = vmul.f32 %v989, %v1008
    %v1010 = vrcp.pop %v1001
    %v1011 = vmul.f32 %v991, %v1010
    %v1012 = vrcp.pop %v1004
    %v1013 = vmul.f32 %v993, %v1012
    %v1014 = vrcp.pop %v1007
    %v1015 = vmul.f32 %v995, %v1014
    %v1016 = vadd.f32 %v759, %v1009
    %v1017 = vadd.f32 %v761, %v1011
    %v1018 = vadd.f32 %v763, %v1013
    %v1019 = vadd.f32 %v765, %v1015
    %v1021 = vsel %vm107, %v1009, 0
    %v1024 = vsel %vm107, %v1011, 0
    %v1027 = vsel %vm107, %v1013, 0
    %v1030 = vsel %vm107, %v1015, 0
    %1032 = vmatprep.subr.mxu0 0.0
    %1033 = vmatpush1.msra.mxu0 %v587
    %1034 = vmatprep.subr.mxu0 0.0
    %1035 = vmatpush1.msra.mxu0 %v592
    %1036 = vmatprep.subr.mxu0 0.0
    %1037 = vmatpush1.msra.mxu0 %v597
    %1038 = vmatprep.subr.mxu0 0.0
    %1039 = vmatpush1.msra.mxu0 %v602
    %1040 = vmatprep.subr.mxu0 0.0
    %1041 = vmatpush1.msra.mxu0 0.0
    %1042 = vmatprep.subr.mxu0 0.0
    %1043 = vmatpush1.msra.mxu0 0.0
    %1044 = vmatprep.subr.mxu0 0.0
    %1045 = vmatpush1.msra.mxu0 0.0
    %1046 = vmatprep.subr.mxu0 0.0
    %1047 = vmatpush1.msra.mxu0 0.0
    %1048 = vmatprep.subr.mxu0 0.0
    %1049 = vmatpush1.msra.mxu0 0.0
    %1050 = vmatprep.subr.mxu0 0.0
    %1051 = vmatpush1.msra.mxu0 0.0
    %1052 = vmatprep.subr.mxu0 0.0
    %1053 = vmatpush1.msra.mxu0 0.0
    %1054 = vmatprep.subr.mxu0 0.0
    %1055 = vmatpush1.msra.mxu0 0.0
    %1056 = vmatprep.subr.mxu0 0.0
    %1057 = vmatpush1.msra.mxu0 0.0
    %1058 = vmatprep.subr.mxu0 0.0
    %1059 = vmatpush1.msra.mxu0 0.0
    %1060 = vmatprep.subr.mxu0 0.0
    %1061 = vmatpush1.msra.mxu0 0.0
    %1062 = vmatprep.subr.mxu0 0.0
    %1063 = vmatpush1.msra.mxu0 0.0
    %1064 = vmatprep.subr.mxu0 0.0
    %1065 = vmatpush1.msra.mxu0 0.0
    %1066 = vmatprep.subr.mxu0 0.0
    %1067 = vmatpush1.msra.mxu0 0.0
    %1068 = vmatprep.subr.mxu0 0.0
    %1069 = vmatpush1.msra.mxu0 0.0
    %1070 = vmatprep.subr.mxu0 0.0
    %1071 = vmatpush1.msra.mxu0 0.0
    %1072 = vmatprep.subr.mxu0 0.0
    %1073 = vmatpush1.msra.mxu0 0.0
    %1074 = vmatprep.subr.mxu0 0.0
    %1075 = vmatpush1.msra.mxu0 0.0
    %1076 = vmatprep.subr.mxu0 0.0
    %1077 = vmatpush1.msra.mxu0 0.0
    %1078 = vmatprep.subr.mxu0 0.0
    %1079 = vmatpush1.msra.mxu0 0.0
    %1080 = vmatprep.subr.mxu0 0.0
    %1081 = vmatpush1.msra.mxu0 0.0
    %1082 = vmatprep.subr.mxu0 0.0
    %1083 = vmatpush1.msra.mxu0 0.0
    %1084 = vmatprep.subr.mxu0 0.0
    %1085 = vmatpush1.msra.mxu0 0.0
    %1086 = vmatprep.subr.mxu0 0.0
    %1087 = vmatpush1.msra.mxu0 0.0
    %1088 = vmatprep.subr.mxu0 0.0
    %1089 = vmatpush1.msra.mxu0 0.0
    %1090 = vmatprep.subr.mxu0 0.0
    %1091 = vmatpush1.msra.mxu0 0.0
    %1092 = vmatprep.subr.mxu0 0.0
    %1093 = vmatpush1.msra.mxu0 0.0
    %1094 = vmatprep.subr.mxu0 0.0
    %1095 = vmatpush1.msra.mxu0 0.0
    %1096 = vmatprep.mubr.f32.mxu0 0.0
    %1097 = vmatmul.mubr.f32.gmra.mrb[0].mxu0 %v1021
    %v1098 = vpop.f32.mrb[0].mxu0
    %v1099 = vadd.f32 0.0, %v1098
    %v1100 = vpop.f32.mrb[0].mxu0
    %1101 = vmatprep.mubr.f32.mxu0 0.0
    %1102 = vmatmul.mubr.f32.gmra.mrb[0].mxu0 %v1024
    %v1103 = vpop.f32.mrb[0].mxu0
    %v1104 = vadd.f32 0.0, %v1103
    %v1105 = vpop.f32.mrb[0].mxu0
    %1106 = vmatprep.mubr.f32.mxu0 0.0
    %1107 = vmatmul.mubr.f32.gmra.mrb[0].mxu0 %v1027
    %v1108 = vpop.f32.mrb[0].mxu0
    %v1109 = vadd.f32 0.0, %v1108
    %v1110 = vpop.f32.mrb[0].mxu0
    %1111 = vmatprep.mubr.f32.mxu0 0.0
    %1112 = vmatmul.mubr.f32.gmra.mrb[0].mxu0 %v1030
    %v1113 = vpop.f32.mrb[0].mxu0
    %v1114 = vadd.f32 0.0, %v1113
    %v1115 = vpop.f32.mrb[0].mxu0
    %1116 = vdwg.mxu0
    %v1117 = vmul.f32 %v1099, %v870
    %v1118 = vmul.f32 %v1104, %v870
    %v1119 = vmul.f32 %v1109, %v870
    %v1120 = vmul.f32 %v1114, %v870
    %v1121 = vadd.f32 %v863, %v1117
    %v1122 = vadd.f32 %v864, %v1118
    %v1123 = vadd.f32 %v865, %v1119
    %v1124 = vadd.f32 %v866, %v1120
    %v1125 = vlaneseq
    %v1126 = vshrl.u32 %v1125, 7
    %v1127 = vsub.s32 0, %v1126
    %v1128 = vrot.slane %v103, %v1127
    %v1129 = vmul.f32 %v409, %v1128
    %v1130 = vmul.f32 %v414, %v1128
    %v1131 = vmul.f32 %v419, %v1128
    %v1132 = vmul.f32 %v424, %v1128
    %v1134 = vsel %vm107, %v1129, 0
    %v1137 = vsel %vm107, %v1130, 0
    %v1140 = vsel %vm107, %v1131, 0
    %v1143 = vsel %vm107, %v1132, 0
    %1145 = vmatprep.subr.mxu0 0.0
    %1146 = vmatpush1.xpose.msra.mxu0 %v626
    %1147 = vmatprep.subr.mxu0 0.0
    %1148 = vmatpush1.xpose.msra.mxu0 %v629
    %1149 = vmatprep.subr.mxu0 0.0
    %1150 = vmatpush1.xpose.msra.mxu0 %v632
    %1151 = vmatprep.subr.mxu0 0.0
    %1152 = vmatpush1.xpose.msra.mxu0 %v635
    %1153 = vmatprep.subr.mxu0 0.0
    %1154 = vmatpush1.xpose.msra.mxu0 0.0
    %1155 = vmatprep.subr.mxu0 0.0
    %1156 = vmatpush1.xpose.msra.mxu0 0.0
    %1157 = vmatprep.subr.mxu0 0.0
    %1158 = vmatpush1.xpose.msra.mxu0 0.0
    %1159 = vmatprep.subr.mxu0 0.0
    %1160 = vmatpush1.xpose.msra.mxu0 0.0
    %1161 = vmatprep.subr.mxu0 0.0
    %1162 = vmatpush1.xpose.msra.mxu0 0.0
    %1163 = vmatprep.subr.mxu0 0.0
    %1164 = vmatpush1.xpose.msra.mxu0 0.0
    %1165 = vmatprep.subr.mxu0 0.0
    %1166 = vmatpush1.xpose.msra.mxu0 0.0
    %1167 = vmatprep.subr.mxu0 0.0
    %1168 = vmatpush1.xpose.msra.mxu0 0.0
    %1169 = vmatprep.subr.mxu0 0.0
    %1170 = vmatpush1.xpose.msra.mxu0 0.0
    %1171 = vmatprep.subr.mxu0 0.0
    %1172 = vmatpush1.xpose.msra.mxu0 0.0
    %1173 = vmatprep.subr.mxu0 0.0
    %1174 = vmatpush1.xpose.msra.mxu0 0.0
    %1175 = vmatprep.subr.mxu0 0.0
    %1176 = vmatpush1.xpose.msra.mxu0 0.0
    %1177 = vmatprep.subr.mxu0 0.0
    %1178 = vmatpush1.xpose.msra.mxu0 0.0
    %1179 = vmatprep.subr.mxu0 0.0
    %1180 = vmatpush1.xpose.msra.mxu0 0.0
    %1181 = vmatprep.subr.mxu0 0.0
    %1182 = vmatpush1.xpose.msra.mxu0 0.0
    %1183 = vmatprep.subr.mxu0 0.0
    %1184 = vmatpush1.xpose.msra.mxu0 0.0
    %1185 = vmatprep.subr.mxu0 0.0
    %1186 = vmatpush1.xpose.msra.mxu0 0.0
    %1187 = vmatprep.subr.mxu0 0.0
    %1188 = vmatpush1.xpose.msra.mxu0 0.0
    %1189 = vmatprep.subr.mxu0 0.0
    %1190 = vmatpush1.xpose.msra.mxu0 0.0
    %1191 = vmatprep.subr.mxu0 0.0
    %1192 = vmatpush1.xpose.msra.mxu0 0.0
    %1193 = vmatprep.subr.mxu0 0.0
    %1194 = vmatpush1.xpose.msra.mxu0 0.0
    %1195 = vmatprep.subr.mxu0 0.0
    %1196 = vmatpush1.xpose.msra.mxu0 0.0
    %1197 = vmatprep.subr.mxu0 0.0
    %1198 = vmatpush1.xpose.msra.mxu0 0.0
    %1199 = vmatprep.subr.mxu0 0.0
    %1200 = vmatpush1.xpose.msra.mxu0 0.0
    %1201 = vmatprep.subr.mxu0 0.0
    %1202 = vmatpush1.xpose.msra.mxu0 0.0
    %1203 = vmatprep.subr.mxu0 0.0
    %1204 = vmatpush1.xpose.msra.mxu0 0.0
    %1205 = vmatprep.subr.mxu0 0.0
    %1206 = vmatpush1.xpose.msra.mxu0 0.0
    %1207 = vmatprep.subr.mxu0 0.0
    %1208 = vmatpush1.xpose.msra.mxu0 0.0
    %1209 = vmatprep.mubr.f32.mxu0 0.0
    %1210 = vmatmul.mubr.f32.gmra.mrb[0].mxu0 %v1134
    %v1211 = vpop.f32.mrb[0].mxu0
    %v1212 = vadd.f32 %v43, %v1211
    %v1213 = vpop.f32.mrb[0].mxu0
    %1214 = vmatprep.mubr.f32.mxu0 0.0
    %1215 = vmatmul.mubr.f32.gmra.mrb[0].mxu0 %v1137
    %v1216 = vpop.f32.mrb[0].mxu0
    %v1217 = vadd.f32 %v44, %v1216
    %v1218 = vpop.f32.mrb[0].mxu0
    %1219 = vmatprep.mubr.f32.mxu0 0.0
    %1220 = vmatmul.mubr.f32.gmra.mrb[0].mxu0 %v1140
    %v1221 = vpop.f32.mrb[0].mxu0
    %v1222 = vadd.f32 %v45, %v1221
    %v1223 = vpop.f32.mrb[0].mxu0
    %1224 = vmatprep.mubr.f32.mxu0 0.0
    %1225 = vmatmul.mubr.f32.gmra.mrb[0].mxu0 %v1143
    %v1226 = vpop.f32.mrb[0].mxu0
    %v1227 = vadd.f32 %v46, %v1226
    %v1228 = vpop.f32.mrb[0].mxu0
    %1229 = vdwg.mxu0
    %v1230 = vsel %vm107, %v1212, -inf
    %1231 = vmax.xlane.f32.xlu0 %v1230
    %v1232 = vpop.xlane.xlu0 %1231
    %v1233 = vsel %vm107, %v1217, -inf
    %1234 = vmax.xlane.f32.xlu0 %v1233
    %v1235 = vpop.xlane.xlu0 %1234
    %v1236 = vsel %vm107, %v1222, -inf
    %1237 = vmax.xlane.f32.xlu0 %v1236
    %v1238 = vpop.xlane.xlu0 %1237
    %v1239 = vsel %vm107, %v1227, -inf
    %1240 = vmax.xlane.f32.xlu0 %v1239
    %v1241 = vpop.xlane.xlu0 %1240
    %v1242 = vsub.f32 %v1212, %v1232
    %v1243 = vsub.f32 %v1217, %v1235
    %v1244 = vsub.f32 %v1222, %v1238
    %v1245 = vsub.f32 %v1227, %v1241
    %v1246 = vmul.f32 %v1242, 1.442695
    %v1247 = vpow.pop %v1246
    %v1248 = vmul.f32 %v1243, 1.442695
    %v1249 = vpow.pop %v1248
    %v1250 = vmul.f32 %v1244, 1.442695
    %v1251 = vpow.pop %v1250
    %v1252 = vmul.f32 %v1245, 1.442695
    %v1253 = vpow.pop %v1252
    %v1254 = vsel %vm107, %v1247, 0.0
    %1255 = vadd.xlane.f32.xlu0 %v1254
    %v1256 = vpop.xlane.xlu0 %1255
    %v1257 = vsel %vm107, %v1249, 0.0
    %1258 = vadd.xlane.f32.xlu0 %v1257
    %v1259 = vpop.xlane.xlu0 %1258
    %v1260 = vsel %vm107, %v1251, 0.0
    %1261 = vadd.xlane.f32.xlu0 %v1260
    %v1262 = vpop.xlane.xlu0 %1261
    %v1263 = vsel %vm107, %v1253, 0.0
    %1264 = vadd.xlane.f32.xlu0 %v1263
    %v1265 = vpop.xlane.xlu0 %1264
    %v1266 = vrcp.pop %v1256
    %v1267 = vmul.f32 %v1247, %v1266
    %v1268 = vrcp.pop %v1259
    %v1269 = vmul.f32 %v1249, %v1268
    %v1270 = vrcp.pop %v1262
    %v1271 = vmul.f32 %v1251, %v1270
    %v1272 = vrcp.pop %v1265
    %v1273 = vmul.f32 %v1253, %v1272
    %v1274 = vadd.f32 %v1016, %v1267
    %v1275 = vadd.f32 %v1017, %v1269
    %v1276 = vadd.f32 %v1018, %v1271
    %v1277 = vadd.f32 %v1019, %v1273
    %v1279 = vsel %vm107, %v1267, 0
    %v1282 = vsel %vm107, %v1269, 0
    %v1285 = vsel %vm107, %v1271, 0
    %v1288 = vsel %vm107, %v1273, 0
    %1290 = vmatprep.subr.mxu0 0.0
    %1291 = vmatpush1.msra.mxu0 %v587
    %1292 = vmatprep.subr.mxu0 0.0
    %1293 = vmatpush1.msra.mxu0 %v592
    %1294 = vmatprep.subr.mxu0 0.0
    %1295 = vmatpush1.msra.mxu0 %v597
    %1296 = vmatprep.subr.mxu0 0.0
    %1297 = vmatpush1.msra.mxu0 %v602
    %1298 = vmatprep.subr.mxu0 0.0
    %1299 = vmatpush1.msra.mxu0 0.0
    %1300 = vmatprep.subr.mxu0 0.0
    %1301 = vmatpush1.msra.mxu0 0.0
    %1302 = vmatprep.subr.mxu0 0.0
    %1303 = vmatpush1.msra.mxu0 0.0
    %1304 = vmatprep.subr.mxu0 0.0
    %1305 = vmatpush1.msra.mxu0 0.0
    %1306 = vmatprep.subr.mxu0 0.0
    %1307 = vmatpush1.msra.mxu0 0.0
    %1308 = vmatprep.subr.mxu0 0.0
    %1309 = vmatpush1.msra.mxu0 0.0
    %1310 = vmatprep.subr.mxu0 0.0
    %1311 = vmatpush1.msra.mxu0 0.0
    %1312 = vmatprep.subr.mxu0 0.0
    %1313 = vmatpush1.msra.mxu0 0.0
    %1314 = vmatprep.subr.mxu0 0.0
    %1315 = vmatpush1.msra.mxu0 0.0
    %1316 = vmatprep.subr.mxu0 0.0
    %1317 = vmatpush1.msra.mxu0 0.0
    %1318 = vmatprep.subr.mxu0 0.0
    %1319 = vmatpush1.msra.mxu0 0.0
    %1320 = vmatprep.subr.mxu0 0.0
    %1321 = vmatpush1.msra.mxu0 0.0
    %1322 = vmatprep.subr.mxu0 0.0
    %1323 = vmatpush1.msra.mxu0 0.0
    %1324 = vmatprep.subr.mxu0 0.0
    %1325 = vmatpush1.msra.mxu0 0.0
    %1326 = vmatprep.subr.mxu0 0.0
    %1327 = vmatpush1.msra.mxu0 0.0
    %1328 = vmatprep.subr.mxu0 0.0
    %1329 = vmatpush1.msra.mxu0 0.0
    %1330 = vmatprep.subr.mxu0 0.0
    %1331 = vmatpush1.msra.mxu0 0.0
    %1332 = vmatprep.subr.mxu0 0.0
    %1333 = vmatpush1.msra.mxu0 0.0
    %1334 = vmatprep.subr.mxu0 0.0
    %1335 = vmatpush1.msra.mxu0 0.0
    %1336 = vmatprep.subr.mxu0 0.0
    %1337 = vmatpush1.msra.mxu0 0.0
    %1338 = vmatprep.subr.mxu0 0.0
    %1339 = vmatpush1.msra.mxu0 0.0
    %1340 = vmatprep.subr.mxu0 0.0
    %1341 = vmatpush1.msra.mxu0 0.0
    %1342 = vmatprep.subr.mxu0 0.0
    %1343 = vmatpush1.msra.mxu0 0.0
    %1344 = vmatprep.subr.mxu0 0.0
    %1345 = vmatpush1.msra.mxu0 0.0
    %1346 = vmatprep.subr.mxu0 0.0
    %1347 = vmatpush1.msra.mxu0 0.0
    %1348 = vmatprep.subr.mxu0 0.0
    %1349 = vmatpush1.msra.mxu0 0.0
    %1350 = vmatprep.subr.mxu0 0.0
    %1351 = vmatpush1.msra.mxu0 0.0
    %1352 = vmatprep.subr.mxu0 0.0
    %1353 = vmatpush1.msra.mxu0 0.0
    %1354 = vmatprep.mubr.f32.mxu0 0.0
    %1355 = vmatmul.mubr.f32.gmra.mrb[0].mxu0 %v1279
    %v1356 = vpop.f32.mrb[0].mxu0
    %v1357 = vadd.f32 0.0, %v1356
    %v1358 = vpop.f32.mrb[0].mxu0
    %1359 = vmatprep.mubr.f32.mxu0 0.0
    %1360 = vmatmul.mubr.f32.gmra.mrb[0].mxu0 %v1282
    %v1361 = vpop.f32.mrb[0].mxu0
    %v1362 = vadd.f32 0.0, %v1361
    %v1363 = vpop.f32.mrb[0].mxu0
    %1364 = vmatprep.mubr.f32.mxu0 0.0
    %1365 = vmatmul.mubr.f32.gmra.mrb[0].mxu0 %v1285
    %v1366 = vpop.f32.mrb[0].mxu0
    %v1367 = vadd.f32 0.0, %v1366
    %v1368 = vpop.f32.mrb[0].mxu0
    %1369 = vmatprep.mubr.f32.mxu0 0.0
    %1370 = vmatmul.mubr.f32.gmra.mrb[0].mxu0 %v1288
    %v1371 = vpop.f32.mrb[0].mxu0
    %v1372 = vadd.f32 0.0, %v1371
    %v1373 = vpop.f32.mrb[0].mxu0
    %1374 = vdwg.mxu0
    %v1375 = vmul.f32 %v1357, %v1128
    %v1376 = vmul.f32 %v1362, %v1128
    %v1377 = vmul.f32 %v1367, %v1128
    %v1378 = vmul.f32 %v1372, %v1128
    %v1379 = vadd.f32 %v1121, %v1375
    %v1380 = vadd.f32 %v1122, %v1376
    %v1381 = vadd.f32 %v1123, %v1377
    %v1382 = vadd.f32 %v1124, %v1378
    %v1383 = vlaneseq
    %v1384 = vshrl.u32 %v1383, 7
    %v1385 = vsub.s32 0, %v1384
    %v1386 = vrot.slane %v104, %v1385
    %v1387 = vmul.f32 %v409, %v1386
    %v1388 = vmul.f32 %v414, %v1386
    %v1389 = vmul.f32 %v419, %v1386
    %v1390 = vmul.f32 %v424, %v1386
    %v1392 = vsel %vm107, %v1387, 0
    %v1395 = vsel %vm107, %v1388, 0
    %v1398 = vsel %vm107, %v1389, 0
    %v1401 = vsel %vm107, %v1390, 0
    %1403 = vmatprep.subr.mxu0 0.0
    %1404 = vmatpush1.xpose.msra.mxu0 %v626
    %1405 = vmatprep.subr.mxu0 0.0
    %1406 = vmatpush1.xpose.msra.mxu0 %v629
    %1407 = vmatprep.subr.mxu0 0.0
    %1408 = vmatpush1.xpose.msra.mxu0 %v632
    %1409 = vmatprep.subr.mxu0 0.0
    %1410 = vmatpush1.xpose.msra.mxu0 %v635
    %1411 = vmatprep.subr.mxu0 0.0
    %1412 = vmatpush1.xpose.msra.mxu0 0.0
    %1413 = vmatprep.subr.mxu0 0.0
    %1414 = vmatpush1.xpose.msra.mxu0 0.0
    %1415 = vmatprep.subr.mxu0 0.0
    %1416 = vmatpush1.xpose.msra.mxu0 0.0
    %1417 = vmatprep.subr.mxu0 0.0
    %1418 = vmatpush1.xpose.msra.mxu0 0.0
    %1419 = vmatprep.subr.mxu0 0.0
    %1420 = vmatpush1.xpose.msra.mxu0 0.0
    %1421 = vmatprep.subr.mxu0 0.0
    %1422 = vmatpush1.xpose.msra.mxu0 0.0
    %1423 = vmatprep.subr.mxu0 0.0
    %1424 = vmatpush1.xpose.msra.mxu0 0.0
    %1425 = vmatprep.subr.mxu0 0.0
    %1426 = vmatpush1.xpose.msra.mxu0 0.0
    %1427 = vmatprep.subr.mxu0 0.0
    %1428 = vmatpush1.xpose.msra.mxu0 0.0
    %1429 = vmatprep.subr.mxu0 0.0
    %1430 = vmatpush1.xpose.msra.mxu0 0.0
    %1431 = vmatprep.subr.mxu0 0.0
    %1432 = vmatpush1.xpose.msra.mxu0 0.0
    %1433 = vmatprep.subr.mxu0 0.0
    %1434 = vmatpush1.xpose.msra.mxu0 0.0
    %1435 = vmatprep.subr.mxu0 0.0
    %1436 = vmatpush1.xpose.msra.mxu0 0.0
    %1437 = vmatprep.subr.mxu0 0.0
    %1438 = vmatpush1.xpose.msra.mxu0 0.0
    %1439 = vmatprep.subr.mxu0 0.0
    %1440 = vmatpush1.xpose.msra.mxu0 0.0
    %1441 = vmatprep.subr.mxu0 0.0
    %1442 = vmatpush1.xpose.msra.mxu0 0.0
    %1443 = vmatprep.subr.mxu0 0.0
    %1444 = vmatpush1.xpose.msra.mxu0 0.0
    %1445 = vmatprep.subr.mxu0 0.0
    %1446 = vmatpush1.xpose.msra.mxu0 0.0
    %1447 = vmatprep.subr.mxu0 0.0
    %1448 = vmatpush1.xpose.msra.mxu0 0.0
    %1449 = vmatprep.subr.mxu0 0.0
    %1450 = vmatpush1.xpose.msra.mxu0 0.0
    %1451 = vmatprep.subr.mxu0 0.0
    %1452 = vmatpush1.xpose.msra.mxu0 0.0
    %1453 = vmatprep.subr.mxu0 0.0
    %1454 = vmatpush1.xpose.msra.mxu0 0.0
    %1455 = vmatprep.subr.mxu0 0.0
    %1456 = vmatpush1.xpose.msra.mxu0 0.0
    %1457 = vmatprep.subr.mxu0 0.0
    %1458 = vmatpush1.xpose.msra.mxu0 0.0
    %1459 = vmatprep.subr.mxu0 0.0
    %1460 = vmatpush1.xpose.msra.mxu0 0.0
    %1461 = vmatprep.subr.mxu0 0.0
    %1462 = vmatpush1.xpose.msra.mxu0 0.0
    %1463 = vmatprep.subr.mxu0 0.0
    %1464 = vmatpush1.xpose.msra.mxu0 0.0
    %1465 = vmatprep.subr.mxu0 0.0
    %1466 = vmatpush1.xpose.msra.mxu0 0.0
    %1467 = vmatprep.mubr.f32.mxu0 0.0
    %1468 = vmatmul.mubr.f32.gmra.mrb[0].mxu0 %v1392
    %v1469 = vpop.f32.mrb[0].mxu0
    %v1470 = vadd.f32 %v43, %v1469
    %v1471 = vpop.f32.mrb[0].mxu0
    %1472 = vmatprep.mubr.f32.mxu0 0.0
    %1473 = vmatmul.mubr.f32.gmra.mrb[0].mxu0 %v1395
    %v1474 = vpop.f32.mrb[0].mxu0
    %v1475 = vadd.f32 %v44, %v1474
    %v1476 = vpop.f32.mrb[0].mxu0
    %1477 = vmatprep.mubr.f32.mxu0 0.0
    %1478 = vmatmul.mubr.f32.gmra.mrb[0].mxu0 %v1398
    %v1479 = vpop.f32.mrb[0].mxu0
    %v1480 = vadd.f32 %v45, %v1479
    %v1481 = vpop.f32.mrb[0].mxu0
    %1482 = vmatprep.mubr.f32.mxu0 0.0
    %1483 = vmatmul.mubr.f32.gmra.mrb[0].mxu0 %v1401
    %v1484 = vpop.f32.mrb[0].mxu0
    %v1485 = vadd.f32 %v46, %v1484
    %v1486 = vpop.f32.mrb[0].mxu0
    %1487 = vdwg.mxu0
    %v1488 = vsel %vm107, %v1470, -inf
    %1489 = vmax.xlane.f32.xlu0 %v1488
    %v1490 = vpop.xlane.xlu0 %1489
    %v1491 = vsel %vm107, %v1475, -inf
    %1492 = vmax.xlane.f32.xlu0 %v1491
    %v1493 = vpop.xlane.xlu0 %1492
    %v1494 = vsel %vm107, %v1480, -inf
    %1495 = vmax.xlane.f32.xlu0 %v1494
    %v1496 = vpop.xlane.xlu0 %1495
    %v1497 = vsel %vm107, %v1485, -inf
    %1498 = vmax.xlane.f32.xlu0 %v1497
    %v1499 = vpop.xlane.xlu0 %1498
    %v1500 = vsub.f32 %v1470, %v1490
    %v1501 = vsub.f32 %v1475, %v1493
    %v1502 = vsub.f32 %v1480, %v1496
    %v1503 = vsub.f32 %v1485, %v1499
    %v1504 = vmul.f32 %v1500, 1.442695
    %v1505 = vpow.pop %v1504
    %v1506 = vmul.f32 %v1501, 1.442695
    %v1507 = vpow.pop %v1506
    %v1508 = vmul.f32 %v1502, 1.442695
    %v1509 = vpow.pop %v1508
    %v1510 = vmul.f32 %v1503, 1.442695
    %v1511 = vpow.pop %v1510
    %v1512 = vsel %vm107, %v1505, 0.0
    %1513 = vadd.xlane.f32.xlu0 %v1512
    %v1514 = vpop.xlane.xlu0 %1513
    %v1515 = vsel %vm107, %v1507, 0.0
    %1516 = vadd.xlane.f32.xlu0 %v1515
    %v1517 = vpop.xlane.xlu0 %1516
    %v1518 = vsel %vm107, %v1509, 0.0
    %1519 = vadd.xlane.f32.xlu0 %v1518
    %v1520 = vpop.xlane.xlu0 %1519
    %v1521 = vsel %vm107, %v1511, 0.0
    %1522 = vadd.xlane.f32.xlu0 %v1521
    %v1523 = vpop.xlane.xlu0 %1522
    %v1524 = vrcp.pop %v1514
    %v1525 = vmul.f32 %v1505, %v1524
    %v1526 = vrcp.pop %v1517
    %v1527 = vmul.f32 %v1507, %v1526
    %v1528 = vrcp.pop %v1520
    %v1529 = vmul.f32 %v1509, %v1528
    %v1530 = vrcp.pop %v1523
    %v1531 = vmul.f32 %v1511, %v1530
    %v1532 = vadd.f32 %v1274, %v1525
    %v1533 = vadd.f32 %v1275, %v1527
    %v1534 = vadd.f32 %v1276, %v1529
    %v1535 = vadd.f32 %v1277, %v1531
    %v1537 = vsel %vm107, %v1525, 0
    %v1540 = vsel %vm107, %v1527, 0
    %v1543 = vsel %vm107, %v1529, 0
    %v1546 = vsel %vm107, %v1531, 0
    %1548 = vmatprep.subr.mxu0 0.0
    %1549 = vmatpush1.msra.mxu0 %v587
    %1550 = vmatprep.subr.mxu0 0.0
    %1551 = vmatpush1.msra.mxu0 %v592
    %1552 = vmatprep.subr.mxu0 0.0
    %1553 = vmatpush1.msra.mxu0 %v597
    %1554 = vmatprep.subr.mxu0 0.0
    %1555 = vmatpush1.msra.mxu0 %v602
    %1556 = vmatprep.subr.mxu0 0.0
    %1557 = vmatpush1.msra.mxu0 0.0
    %1558 = vmatprep.subr.mxu0 0.0
    %1559 = vmatpush1.msra.mxu0 0.0
    %1560 = vmatprep.subr.mxu0 0.0
    %1561 = vmatpush1.msra.mxu0 0.0
    %1562 = vmatprep.subr.mxu0 0.0
    %1563 = vmatpush1.msra.mxu0 0.0
    %1564 = vmatprep.subr.mxu0 0.0
    %1565 = vmatpush1.msra.mxu0 0.0
    %1566 = vmatprep.subr.mxu0 0.0
    %1567 = vmatpush1.msra.mxu0 0.0
    %1568 = vmatprep.subr.mxu0 0.0
    %1569 = vmatpush1.msra.mxu0 0.0
    %1570 = vmatprep.subr.mxu0 0.0
    %1571 = vmatpush1.msra.mxu0 0.0
    %1572 = vmatprep.subr.mxu0 0.0
    %1573 = vmatpush1.msra.mxu0 0.0
    %1574 = vmatprep.subr.mxu0 0.0
    %1575 = vmatpush1.msra.mxu0 0.0
    %1576 = vmatprep.subr.mxu0 0.0
    %1577 = vmatpush1.msra.mxu0 0.0
    %1578 = vmatprep.subr.mxu0 0.0
    %1579 = vmatpush1.msra.mxu0 0.0
    %1580 = vmatprep.subr.mxu0 0.0
    %1581 = vmatpush1.msra.mxu0 0.0
    %1582 = vmatprep.subr.mxu0 0.0
    %1583 = vmatpush1.msra.mxu0 0.0
    %1584 = vmatprep.subr.mxu0 0.0
    %1585 = vmatpush1.msra.mxu0 0.0
    %1586 = vmatprep.subr.mxu0 0.0
    %1587 = vmatpush1.msra.mxu0 0.0
    %1588 = vmatprep.subr.mxu0 0.0
    %1589 = vmatpush1.msra.mxu0 0.0
    %1590 = vmatprep.subr.mxu0 0.0
    %1591 = vmatpush1.msra.mxu0 0.0
    %1592 = vmatprep.subr.mxu0 0.0
    %1593 = vmatpush1.msra.mxu0 0.0
    %1594 = vmatprep.subr.mxu0 0.0
    %1595 = vmatpush1.msra.mxu0 0.0
    %1596 = vmatprep.subr.mxu0 0.0
    %1597 = vmatpush1.msra.mxu0 0.0
    %1598 = vmatprep.subr.mxu0 0.0
    %1599 = vmatpush1.msra.mxu0 0.0
    %1600 = vmatprep.subr.mxu0 0.0
    %1601 = vmatpush1.msra.mxu0 0.0
    %1602 = vmatprep.subr.mxu0 0.0
    %1603 = vmatpush1.msra.mxu0 0.0
    %1604 = vmatprep.subr.mxu0 0.0
    %1605 = vmatpush1.msra.mxu0 0.0
    %1606 = vmatprep.subr.mxu0 0.0
    %1607 = vmatpush1.msra.mxu0 0.0
    %1608 = vmatprep.subr.mxu0 0.0
    %1609 = vmatpush1.msra.mxu0 0.0
    %1610 = vmatprep.subr.mxu0 0.0
    %1611 = vmatpush1.msra.mxu0 0.0
    %1612 = vmatprep.mubr.f32.mxu0 0.0
    %1613 = vmatmul.mubr.f32.gmra.mrb[0].mxu0 %v1537
    %v1614 = vpop.f32.mrb[0].mxu0
    %v1615 = vadd.f32 0.0, %v1614
    %v1616 = vpop.f32.mrb[0].mxu0
    %1617 = vmatprep.mubr.f32.mxu0 0.0
    %1618 = vmatmul.mubr.f32.gmra.mrb[0].mxu0 %v1540
    %v1619 = vpop.f32.mrb[0].mxu0
    %v1620 = vadd.f32 0.0, %v1619
    %v1621 = vpop.f32.mrb[0].mxu0
    %1622 = vmatprep.mubr.f32.mxu0 0.0
    %1623 = vmatmul.mubr.f32.gmra.mrb[0].mxu0 %v1543
    %v1624 = vpop.f32.mrb[0].mxu0
    %v1625 = vadd.f32 0.0, %v1624
    %v1626 = vpop.f32.mrb[0].mxu0
    %1627 = vmatprep.mubr.f32.mxu0 0.0
    %1628 = vmatmul.mubr.f32.gmra.mrb[0].mxu0 %v1546
    %v1629 = vpop.f32.mrb[0].mxu0
    %v1630 = vadd.f32 0.0, %v1629
    %v1631 = vpop.f32.mrb[0].mxu0
    %1632 = vdwg.mxu0
    %v1633 = vmul.f32 %v1615, %v1386
    %v1634 = vmul.f32 %v1620, %v1386
    %v1635 = vmul.f32 %v1625, %v1386
    %v1636 = vmul.f32 %v1630, %v1386
    %v1637 = vadd.f32 %v1379, %v1633
    %v1638 = vadd.f32 %v1380, %v1634
    %v1639 = vadd.f32 %v1381, %v1635
    %v1640 = vadd.f32 %v1382, %v1636
    %v1641 = vmul.f32 %v1532, 0.25
    %v1642 = vmul.f32 %v1533, 0.25
    %v1643 = vmul.f32 %v1534, 0.25
    %v1644 = vmul.f32 %v1535, 0.25
    %v1645 = vlaneseq
    %v1646 = vshrl.u32 %v1645, 7
    %v1647 = vsub.s32 0, %v1646
    %v1648 = vrot.slane %v92, %v1647
    %v1650 = vsel %vm107, %v1637, 0
    %v1653 = vsel %vm107, %v1638, 0
    %v1656 = vsel %vm107, %v1639, 0
    %v1659 = vsel %vm107, %v1640, 0
    %1661 = vmatprep.subr.mxu0 0.0
    %1662 = vmatpush1.msra.mxu0 %v59
    %1663 = vmatprep.subr.mxu0 0.0
    %1664 = vmatpush1.msra.mxu0 %v60
    %1665 = vmatprep.subr.mxu0 0.0
    %1666 = vmatpush1.msra.mxu0 %v61
    %1667 = vmatprep.subr.mxu0 0.0
    %1668 = vmatpush1.msra.mxu0 %v62
    %1669 = vmatprep.subr.mxu0 0.0
    %1670 = vmatpush1.msra.mxu0 0.0
    %1671 = vmatprep.subr.mxu0 0.0
    %1672 = vmatpush1.msra.mxu0 0.0
    %1673 = vmatprep.subr.mxu0 0.0
    %1674 = vmatpush1.msra.mxu0 0.0
    %1675 = vmatprep.subr.mxu0 0.0
    %1676 = vmatpush1.msra.mxu0 0.0
    %1677 = vmatprep.subr.mxu0 0.0
    %1678 = vmatpush1.msra.mxu0 0.0
    %1679 = vmatprep.subr.mxu0 0.0
    %1680 = vmatpush1.msra.mxu0 0.0
    %1681 = vmatprep.subr.mxu0 0.0
    %1682 = vmatpush1.msra.mxu0 0.0
    %1683 = vmatprep.subr.mxu0 0.0
    %1684 = vmatpush1.msra.mxu0 0.0
    %1685 = vmatprep.subr.mxu0 0.0
    %1686 = vmatpush1.msra.mxu0 0.0
    %1687 = vmatprep.subr.mxu0 0.0
    %1688 = vmatpush1.msra.mxu0 0.0
    %1689 = vmatprep.subr.mxu0 0.0
    %1690 = vmatpush1.msra.mxu0 0.0
    %1691 = vmatprep.subr.mxu0 0.0
    %1692 = vmatpush1.msra.mxu0 0.0
    %1693 = vmatprep.subr.mxu0 0.0
    %1694 = vmatpush1.msra.mxu0 0.0
    %1695 = vmatprep.subr.mxu0 0.0
    %1696 = vmatpush1.msra.mxu0 0.0
    %1697 = vmatprep.subr.mxu0 0.0
    %1698 = vmatpush1.msra.mxu0 0.0
    %1699 = vmatprep.subr.mxu0 0.0
    %1700 = vmatpush1.msra.mxu0 0.0
    %1701 = vmatprep.subr.mxu0 0.0
    %1702 = vmatpush1.msra.mxu0 0.0
    %1703 = vmatprep.subr.mxu0 0.0
    %1704 = vmatpush1.msra.mxu0 0.0
    %1705 = vmatprep.subr.mxu0 0.0
    %1706 = vmatpush1.msra.mxu0 0.0
    %1707 = vmatprep.subr.mxu0 0.0
    %1708 = vmatpush1.msra.mxu0 0.0
    %1709 = vmatprep.subr.mxu0 0.0
    %1710 = vmatpush1.msra.mxu0 0.0
    %1711 = vmatprep.subr.mxu0 0.0
    %1712 = vmatpush1.msra.mxu0 0.0
    %1713 = vmatprep.subr.mxu0 0.0
    %1714 = vmatpush1.msra.mxu0 0.0
    %1715 = vmatprep.subr.mxu0 0.0
    %1716 = vmatpush1.msra.mxu0 0.0
    %1717 = vmatprep.subr.mxu0 0.0
    %1718 = vmatpush1.msra.mxu0 0.0
    %1719 = vmatprep.subr.mxu0 0.0
    %1720 = vmatpush1.msra.mxu0 0.0
    %1721 = vmatprep.subr.mxu0 0.0
    %1722 = vmatpush1.msra.mxu0 0.0
    %1723 = vmatprep.subr.mxu0 0.0
    %1724 = vmatpush1.msra.mxu0 0.0
    %1725 = vmatprep.mubr.f32.mxu0 0.0
    %1726 = vmatmul.mubr.f32.gmra.mrb[0].mxu0 %v1650
    %v1727 = vpop.f32.mrb[0].mxu0
    %v1728 = vadd.f32 %v1648, %v1727
    %v1729 = vpop.f32.mrb[0].mxu0
    %1730 = vmatprep.mubr.f32.mxu0 0.0
    %1731 = vmatmul.mubr.f32.gmra.mrb[0].mxu0 %v1653
    %v1732 = vpop.f32.mrb[0].mxu0
    %v1733 = vadd.f32 %v1648, %v1732
    %v1734 = vpop.f32.mrb[0].mxu0
    %1735 = vmatprep.mubr.f32.mxu0 0.0
    %1736 = vmatmul.mubr.f32.gmra.mrb[0].mxu0 %v1656
    %v1737 = vpop.f32.mrb[0].mxu0
    %v1738 = vadd.f32 %v1648, %v1737
    %v1739 = vpop.f32.mrb[0].mxu0
    %1740 = vmatprep.mubr.f32.mxu0 0.0
    %1741 = vmatmul.mubr.f32.gmra.mrb[0].mxu0 %v1659
    %v1742 = vpop.f32.mrb[0].mxu0
    %v1743 = vadd.f32 %v1648, %v1742
    %v1744 = vpop.f32.mrb[0].mxu0
    %1745 = vdwg.mxu0
    %v1746 = vadd.f32 %v308, %v1728
    %v1747 = vadd.f32 %v313, %v1733
    %v1748 = vadd.f32 %v318, %v1738
    %v1749 = vadd.f32 %v323, %v1743
    %v1750 = vsel %vm107, %v1746, 0.0
    %1751 = vadd.xlane.f32.xlu0 %v1750
    %v1752 = vpop.xlane.xlu0 %1751
    %v1753 = vsel %vm107, %v1747, 0.0
    %1754 = vadd.xlane.f32.xlu0 %v1753
    %v1755 = vpop.xlane.xlu0 %1754
    %v1756 = vsel %vm107, %v1748, 0.0
    %1757 = vadd.xlane.f32.xlu0 %v1756
    %v1758 = vpop.xlane.xlu0 %1757
    %v1759 = vsel %vm107, %v1749, 0.0
    %1760 = vadd.xlane.f32.xlu0 %v1759
    %v1761 = vpop.xlane.xlu0 %1760
    %v1762 = vmul.f32 %v1752, %v195
    %v1763 = vmul.f32 %v1755, %v195
    %v1764 = vmul.f32 %v1758, %v195
    %v1765 = vmul.f32 %v1761, %v195
    %v1766 = vsub.f32 %v1746, %v1762
    %v1767 = vsub.f32 %v1747, %v1763
    %v1768 = vsub.f32 %v1748, %v1764
    %v1769 = vsub.f32 %v1749, %v1765
    %v1770 = vmul.f32 %v1766, %v1766
    %v1771 = vmul.f32 %v1767, %v1767
    %v1772 = vmul.f32 %v1768, %v1768
    %v1773 = vmul.f32 %v1769, %v1769
    %v1774 = vsel %vm107, %v1770, 0.0
    %1775 = vadd.xlane.f32.xlu0 %v1774
    %v1776 = vpop.xlane.xlu0 %1775
    %v1777 = vsel %vm107, %v1771, 0.0
    %1778 = vadd.xlane.f32.xlu0 %v1777
    %v1779 = vpop.xlane.xlu0 %1778
    %v1780 = vsel %vm107, %v1772, 0.0
    %1781 = vadd.xlane.f32.xlu0 %v1780
    %v1782 = vpop.xlane.xlu0 %1781
    %v1783 = vsel %vm107, %v1773, 0.0
    %1784 = vadd.xlane.f32.xlu0 %v1783
    %v1785 = vpop.xlane.xlu0 %1784
    %v1786 = vmul.f32 %v1776, %v195
    %v1787 = vmul.f32 %v1779, %v195
    %v1788 = vmul.f32 %v1782, %v195
    %v1789 = vmul.f32 %v1785, %v195
    %v1790 = vadd.f32 %v1786, 1e-05
    %v1791 = vadd.f32 %v1787, 1e-05
    %v1792 = vadd.f32 %v1788, 1e-05
    %v1793 = vadd.f32 %v1789, 1e-05
    %v1794 = vrsqrt.pop %v1790
    %v1795 = vrsqrt.pop %v1791
    %v1796 = vrsqrt.pop %v1792
    %v1797 = vrsqrt.pop %v1793
    %v1798 = vmul.f32 %v1766, %v1794
    %v1799 = vmul.f32 %v1767, %v1795
    %v1800 = vmul.f32 %v1768, %v1796
    %v1801 = vmul.f32 %v1769, %v1797
    %v1802 = vlaneseq
    %v1803 = vshrl.u32 %v1802, 7
    %v1804 = vsub.s32 0, %v1803
    %v1805 = vrot.slane %v93, %v1804
    %v1806 = vmul.f32 %v1798, %v1805
    %v1807 = vmul.f32 %v1799, %v1805
    %v1808 = vmul.f32 %v1800, %v1805
    %v1809 = vmul.f32 %v1801, %v1805
    %v1810 = vlaneseq
    %v1811 = vshrl.u32 %v1810, 7
    %v1812 = vsub.s32 0, %v1811
    %v1813 = vrot.slane %v94, %v1812
    %v1814 = vadd.f32 %v1806, %v1813
    %v1815 = vadd.f32 %v1807, %v1813
    %v1816 = vadd.f32 %v1808, %v1813
    %v1817 = vadd.f32 %v1809, %v1813
    %v1818 = vlaneseq
    %v1819 = vshrl.u32 %v1818, 7
    %v1820 = vsub.s32 0, %v1819
    %v1821 = vrot.slane %v95, %v1820
    %v1823 = vsel %vm107, %v1814, 0
    %v1826 = vsel %vm107, %v1815, 0
    %v1829 = vsel %vm107, %v1816, 0
    %v1832 = vsel %vm107, %v1817, 0
    %1834 = vmatprep.subr.mxu0 0.0
    %1835 = vmatpush1.msra.mxu0 %v75
    %1836 = vmatprep.subr.mxu0 0.0
    %1837 = vmatpush1.msra.mxu0 %v76
    %1838 = vmatprep.subr.mxu0 0.0
    %1839 = vmatpush1.msra.mxu0 %v77
    %1840 = vmatprep.subr.mxu0 0.0
    %1841 = vmatpush1.msra.mxu0 %v78
    %1842 = vmatprep.subr.mxu0 0.0
    %1843 = vmatpush1.msra.mxu0 0.0
    %1844 = vmatprep.subr.mxu0 0.0
    %1845 = vmatpush1.msra.mxu0 0.0
    %1846 = vmatprep.subr.mxu0 0.0
    %1847 = vmatpush1.msra.mxu0 0.0
    %1848 = vmatprep.subr.mxu0 0.0
    %1849 = vmatpush1.msra.mxu0 0.0
    %1850 = vmatprep.subr.mxu0 0.0
    %1851 = vmatpush1.msra.mxu0 0.0
    %1852 = vmatprep.subr.mxu0 0.0
    %1853 = vmatpush1.msra.mxu0 0.0
    %1854 = vmatprep.subr.mxu0 0.0
    %1855 = vmatpush1.msra.mxu0 0.0
    %1856 = vmatprep.subr.mxu0 0.0
    %1857 = vmatpush1.msra.mxu0 0.0
    %1858 = vmatprep.subr.mxu0 0.0
    %1859 = vmatpush1.msra.mxu0 0.0
    %1860 = vmatprep.subr.mxu0 0.0
    %1861 = vmatpush1.msra.mxu0 0.0
    %1862 = vmatprep.subr.mxu0 0.0
    %1863 = vmatpush1.msra.mxu0 0.0
    %1864 = vmatprep.subr.mxu0 0.0
    %1865 = vmatpush1.msra.mxu0 0.0
    %1866 = vmatprep.subr.mxu0 0.0
    %1867 = vmatpush1.msra.mxu0 0.0
    %1868 = vmatprep.subr.mxu0 0.0
    %1869 = vmatpush1.msra.mxu0 0.0
    %1870 = vmatprep.subr.mxu0 0.0
    %1871 = vmatpush1.msra.mxu0 0.0
    %1872 = vmatprep.subr.mxu0 0.0
    %1873 = vmatpush1.msra.mxu0 0.0
    %1874 = vmatprep.subr.mxu0 0.0
    %1875 = vmatpush1.msra.mxu0 0.0
    %1876 = vmatprep.subr.mxu0 0.0
    %1877 = vmatpush1.msra.mxu0 0.0
    %1878 = vmatprep.subr.mxu0 0.0
    %1879 = vmatpush1.msra.mxu0 0.0
    %1880 = vmatprep.subr.mxu0 0.0
    %1881 = vmatpush1.msra.mxu0 0.0
    %1882 = vmatprep.subr.mxu0 0.0
    %1883 = vmatpush1.msra.mxu0 0.0
    %1884 = vmatprep.subr.mxu0 0.0
    %1885 = vmatpush1.msra.mxu0 0.0
    %1886 = vmatprep.subr.mxu0 0.0
    %1887 = vmatpush1.msra.mxu0 0.0
    %1888 = vmatprep.subr.mxu0 0.0
    %1889 = vmatpush1.msra.mxu0 0.0
    %1890 = vmatprep.subr.mxu0 0.0
    %1891 = vmatpush1.msra.mxu0 0.0
    %1892 = vmatprep.subr.mxu0 0.0
    %1893 = vmatpush1.msra.mxu0 0.0
    %1894 = vmatprep.subr.mxu0 0.0
    %1895 = vmatpush1.msra.mxu0 0.0
    %1896 = vmatprep.subr.mxu0 0.0
    %1897 = vmatpush1.msra.mxu0 0.0
    %1898 = vmatprep.mubr.f32.mxu0 0.0
    %1899 = vmatmul.mubr.f32.gmra.mrb[0].mxu0 %v1823
    %v1900 = vpop.f32.mrb[0].mxu0
    %v1901 = vadd.f32 %v1821, %v1900
    %v1902 = vpop.f32.mrb[0].mxu0
    %1903 = vmatprep.mubr.f32.mxu0 0.0
    %1904 = vmatmul.mubr.f32.gmra.mrb[0].mxu0 %v1826
    %v1905 = vpop.f32.mrb[0].mxu0
    %v1906 = vadd.f32 %v1821, %v1905
    %v1907 = vpop.f32.mrb[0].mxu0
    %1908 = vmatprep.mubr.f32.mxu0 0.0
    %1909 = vmatmul.mubr.f32.gmra.mrb[0].mxu0 %v1829
    %v1910 = vpop.f32.mrb[0].mxu0
    %v1911 = vadd.f32 %v1821, %v1910
    %v1912 = vpop.f32.mrb[0].mxu0
    %1913 = vmatprep.mubr.f32.mxu0 0.0
    %1914 = vmatmul.mubr.f32.gmra.mrb[0].mxu0 %v1832
    %v1915 = vpop.f32.mrb[0].mxu0
    %v1916 = vadd.f32 %v1821, %v1915
    %v1917 = vpop.f32.mrb[0].mxu0
    %1918 = vdwg.mxu0
    %v1919 = vmax.f32 %v1901, 0.0
    %v1920 = vmax.f32 %v1906, 0.0
    %v1921 = vmax.f32 %v1911, 0.0
    %v1922 = vmax.f32 %v1916, 0.0
    %v1923 = vlaneseq
    %v1924 = vshrl.u32 %v1923, 7
    %v1925 = vsub.s32 0, %v1924
    %v1926 = vrot.slane %v96, %v1925
    %vm1927 = vcmask 523264
    %v1929 = vsel %vm1927, %v1919, 0
    %v1932 = vsel %vm1927, %v1920, 0
    %v1935 = vsel %vm1927, %v1921, 0
    %v1938 = vsel %vm1927, %v1922, 0
    %1940 = vmatprep.subr.mxu0 0.0
    %1941 = vmatpush1.msra.mxu0 %v79
    %1942 = vmatprep.subr.mxu0 0.0
    %1943 = vmatpush1.msra.mxu0 %v80
    %1944 = vmatprep.subr.mxu0 0.0
    %1945 = vmatpush1.msra.mxu0 %v81
    %1946 = vmatprep.subr.mxu0 0.0
    %1947 = vmatpush1.msra.mxu0 %v82
    %1948 = vmatprep.subr.mxu0 0.0
    %1949 = vmatpush1.msra.mxu0 %v83
    %1950 = vmatprep.subr.mxu0 0.0
    %1951 = vmatpush1.msra.mxu0 %v84
    %1952 = vmatprep.subr.mxu0 0.0
    %1953 = vmatpush1.msra.mxu0 %v85
    %1954 = vmatprep.subr.mxu0 0.0
    %1955 = vmatpush1.msra.mxu0 %v86
    %1956 = vmatprep.subr.mxu0 0.0
    %1957 = vmatpush1.msra.mxu0 0.0
    %1958 = vmatprep.subr.mxu0 0.0
    %1959 = vmatpush1.msra.mxu0 0.0
    %1960 = vmatprep.subr.mxu0 0.0
    %1961 = vmatpush1.msra.mxu0 0.0
    %1962 = vmatprep.subr.mxu0 0.0
    %1963 = vmatpush1.msra.mxu0 0.0
    %1964 = vmatprep.subr.mxu0 0.0
    %1965 = vmatpush1.msra.mxu0 0.0
    %1966 = vmatprep.subr.mxu0 0.0
    %1967 = vmatpush1.msra.mxu0 0.0
    %1968 = vmatprep.subr.mxu0 0.0
    %1969 = vmatpush1.msra.mxu0 0.0
    %1970 = vmatprep.subr.mxu0 0.0
    %1971 = vmatpush1.msra.mxu0 0.0
    %1972 = vmatprep.subr.mxu0 0.0
    %1973 = vmatpush1.msra.mxu0 0.0
    %1974 = vmatprep.subr.mxu0 0.0
    %1975 = vmatpush1.msra.mxu0 0.0
    %1976 = vmatprep.subr.mxu0 0.0
    %1977 = vmatpush1.msra.mxu0 0.0
    %1978 = vmatprep.subr.mxu0 0.0
    %1979 = vmatpush1.msra.mxu0 0.0
    %1980 = vmatprep.subr.mxu0 0.0
    %1981 = vmatpush1.msra.mxu0 0.0
    %1982 = vmatprep.subr.mxu0 0.0
    %1983 = vmatpush1.msra.mxu0 0.0
    %1984 = vmatprep.subr.mxu0 0.0
    %1985 = vmatpush1.msra.mxu0 0.0
    %1986 = vmatprep.subr.mxu0 0.0
    %1987 = vmatpush1.msra.mxu0 0.0
    %1988 = vmatprep.subr.mxu0 0.0
    %1989 = vmatpush1.msra.mxu0 0.0
    %1990 = vmatprep.subr.mxu0 0.0
    %1991 = vmatpush1.msra.mxu0 0.0
    %1992 = vmatprep.subr.mxu0 0.0
    %1993 = vmatpush1.msra.mxu0 0.0
    %1994 = vmatprep.subr.mxu0 0.0
    %1995 = vmatpush1.msra.mxu0 0.0
    %1996 = vmatprep.subr.mxu0 0.0
    %1997 = vmatpush1.msra.mxu0 0.0
    %1998 = vmatprep.subr.mxu0 0.0
    %1999 = vmatpush1.msra.mxu0 0.0
    %2000 = vmatprep.subr.mxu0 0.0
    %2001 = vmatpush1.msra.mxu0 0.0
    %2002 = vmatprep.subr.mxu0 0.0
    %2003 = vmatpush1.msra.mxu0 0.0
    %2004 = vmatprep.mubr.f32.mxu0 0.0
    %2005 = vmatmul.mubr.f32.gmra.mrb[0].mxu0 %v1929
    %v2006 = vpop.f32.mrb[0].mxu0
    %v2007 = vadd.f32 %v1926, %v2006
    %v2008 = vpop.f32.mrb[0].mxu0
    %2009 = vmatprep.mubr.f32.mxu0 0.0
    %2010 = vmatmul.mubr.f32.gmra.mrb[0].mxu0 %v1932
    %v2011 = vpop.f32.mrb[0].mxu0
    %v2012 = vadd.f32 %v1926, %v2011
    %v2013 = vpop.f32.mrb[0].mxu0
    %2014 = vmatprep.mubr.f32.mxu0 0.0
    %2015 = vmatmul.mubr.f32.gmra.mrb[0].mxu0 %v1935
    %v2016 = vpop.f32.mrb[0].mxu0
    %v2017 = vadd.f32 %v1926, %v2016
    %v2018 = vpop.f32.mrb[0].mxu0
    %2019 = vmatprep.mubr.f32.mxu0 0.0
    %2020 = vmatmul.mubr.f32.gmra.mrb[0].mxu0 %v1938
    %v2021 = vpop.f32.mrb[0].mxu0
    %v2022 = vadd.f32 %v1926, %v2021
    %v2023 = vpop.f32.mrb[0].mxu0
    %2024 = vdwg.mxu0
    %v2025 = vadd.f32 %v1814, %v2007
    %v2026 = vadd.f32 %v1815, %v2012
    %v2027 = vadd.f32 %v1816, %v2017
    %v2028 = vadd.f32 %v1817, %v2022
    %v2029 = vsel %vm107, %v2025, 0.0
    %2030 = vadd.xlane.f32.xlu0 %v2029
    %v2031 = vpop.xlane.xlu0 %2030
    %v2032 = vsel %vm107, %v2026, 0.0
    %2033 = vadd.xlane.f32.xlu0 %v2032
    %v2034 = vpop.xlane.xlu0 %2033
    %v2035 = vsel %vm107, %v2027, 0.0
    %2036 = vadd.xlane.f32.xlu0 %v2035
    %v2037 = vpop.xlane.xlu0 %2036
    %v2038 = vsel %vm107, %v2028, 0.0
    %2039 = vadd.xlane.f32.xlu0 %v2038
    %v2040 = vpop.xlane.xlu0 %2039
    %v2041 = vmul.f32 %v2031, %v195
    %v2042 = vmul.f32 %v2034, %v195
    %v2043 = vmul.f32 %v2037, %v195
    %v2044 = vmul.f32 %v2040, %v195
    %v2045 = vsub.f32 %v2025, %v2041
    %v2046 = vsub.f32 %v2026, %v2042
    %v2047 = vsub.f32 %v2027, %v2043
    %v2048 = vsub.f32 %v2028, %v2044
    %v2049 = vmul.f32 %v2045, %v2045
    %v2050 = vmul.f32 %v2046, %v2046
    %v2051 = vmul.f32 %v2047, %v2047
    %v2052 = vmul.f32 %v2048, %v2048
    %v2053 = vsel %vm107, %v2049, 0.0
    %2054 = vadd.xlane.f32.xlu0 %v2053
    %v2055 = vpop.xlane.xlu0 %2054
    %v2056 = vsel %vm107, %v2050, 0.0
    %2057 = vadd.xlane.f32.xlu0 %v2056
    %v2058 = vpop.xlane.xlu0 %2057
    %v2059 = vsel %vm107, %v2051, 0.0
    %2060 = vadd.xlane.f32.xlu0 %v2059
    %v2061 = vpop.xlane.xlu0 %2060
    %v2062 = vsel %vm107, %v2052, 0.0
    %2063 = vadd.xlane.f32.xlu0 %v2062
    %v2064 = vpop.xlane.xlu0 %2063
    %v2065 = vmul.f32 %v2055, %v195
    %v2066 = vmul.f32 %v2058, %v195
    %v2067 = vmul.f32 %v2061, %v195
    %v2068 = vmul.f32 %v2064, %v195
    %v2069 = vadd.f32 %v2065, 1e-05
    %v2070 = vadd.f32 %v2066, 1e-05
    %v2071 = vadd.f32 %v2067, 1e-05
    %v2072 = vadd.f32 %v2068, 1e-05
    %v2073 = vrsqrt.pop %v2069
    %v2074 = vrsqrt.pop %v2070
    %v2075 = vrsqrt.pop %v2071
    %v2076 = vrsqrt.pop %v2072
    %v2077 = vmul.f32 %v2045, %v2073
    %v2078 = vmul.f32 %v2046, %v2074
    %v2079 = vmul.f32 %v2047, %v2075
    %v2080 = vmul.f32 %v2048, %v2076
    %v2081 = vlaneseq
    %v2082 = vshrl.u32 %v2081, 7
    %v2083 = vsub.s32 0, %v2082
    %v2084 = vrot.slane %v97, %v2083
    %v2085 = vmul.f32 %v2077, %v2084
    %v2086 = vmul.f32 %v2078, %v2084
    %v2087 = vmul.f32 %v2079, %v2084
    %v2088 = vmul.f32 %v2080, %v2084
    %v2089 = vlaneseq
    %v2090 = vshrl.u32 %v2089, 7
    %v2091 = vsub.s32 0, %v2090
    %v2092 = vrot.slane %v98, %v2091
    %v2093 = vadd.f32 %v2085, %v2092
    %v2094 = vadd.f32 %v2086, %v2092
    %v2095 = vadd.f32 %v2087, %v2092
    %v2096 = vadd.f32 %v2088, %v2092
    %v2097 = vlaneseq
    %v2098 = vshrl.u32 %v2097, 7
    %v2099 = vsub.s32 0, %v2098
    %v2100 = vrot.slane %v99, %v2099
    %v2102 = vsel %vm107, %v2093, 0
    %v2105 = vsel %vm107, %v2094, 0
    %v2108 = vsel %vm107, %v2095, 0
    %v2111 = vsel %vm107, %v2096, 0
    %2113 = vmatprep.subr.mxu0 0.0
    %2114 = vmatpush1.msra.mxu0 %v63
    %2115 = vmatprep.subr.mxu0 0.0
    %2116 = vmatpush1.msra.mxu0 %v64
    %2117 = vmatprep.subr.mxu0 0.0
    %2118 = vmatpush1.msra.mxu0 %v65
    %2119 = vmatprep.subr.mxu0 0.0
    %2120 = vmatpush1.msra.mxu0 %v66
    %2121 = vmatprep.subr.mxu0 0.0
    %2122 = vmatpush1.msra.mxu0 0.0
    %2123 = vmatprep.subr.mxu0 0.0
    %2124 = vmatpush1.msra.mxu0 0.0
    %2125 = vmatprep.subr.mxu0 0.0
    %2126 = vmatpush1.msra.mxu0 0.0
    %2127 = vmatprep.subr.mxu0 0.0
    %2128 = vmatpush1.msra.mxu0 0.0
    %2129 = vmatprep.subr.mxu0 0.0
    %2130 = vmatpush1.msra.mxu0 0.0
    %2131 = vmatprep.subr.mxu0 0.0
    %2132 = vmatpush1.msra.mxu0 0.0
    %2133 = vmatprep.subr.mxu0 0.0
    %2134 = vmatpush1.msra.mxu0 0.0
    %2135 = vmatprep.subr.mxu0 0.0
    %2136 = vmatpush1.msra.mxu0 0.0
    %2137 = vmatprep.subr.mxu0 0.0
    %2138 = vmatpush1.msra.mxu0 0.0
    %2139 = vmatprep.subr.mxu0 0.0
    %2140 = vmatpush1.msra.mxu0 0.0
    %2141 = vmatprep.subr.mxu0 0.0
    %2142 = vmatpush1.msra.mxu0 0.0
    %2143 = vmatprep.subr.mxu0 0.0
    %2144 = vmatpush1.msra.mxu0 0.0
    %2145 = vmatprep.subr.mxu0 0.0
    %2146 = vmatpush1.msra.mxu0 0.0
    %2147 = vmatprep.subr.mxu0 0.0
    %2148 = vmatpush1.msra.mxu0 0.0
    %2149 = vmatprep.subr.mxu0 0.0
    %2150 = vmatpush1.msra.mxu0 0.0
    %2151 = vmatprep.subr.mxu0 0.0
    %2152 = vmatpush1.msra.mxu0 0.0
    %2153 = vmatprep.subr.mxu0 0.0
    %2154 = vmatpush1.msra.mxu0 0.0
    %2155 = vmatprep.subr.mxu0 0.0
    %2156 = vmatpush1.msra.mxu0 0.0
    %2157 = vmatprep.subr.mxu0 0.0
    %2158 = vmatpush1.msra.mxu0 0.0
    %2159 = vmatprep.subr.mxu0 0.0
    %2160 = vmatpush1.msra.mxu0 0.0
    %2161 = vmatprep.subr.mxu0 0.0
    %2162 = vmatpush1.msra.mxu0 0.0
    %2163 = vmatprep.subr.mxu0 0.0
    %2164 = vmatpush1.msra.mxu0 0.0
    %2165 = vmatprep.subr.mxu0 0.0
    %2166 = vmatpush1.msra.mxu0 0.0
    %2167 = vmatprep.subr.mxu0 0.0
    %2168 = vmatpush1.msra.mxu0 0.0
    %2169 = vmatprep.subr.mxu0 0.0
    %2170 = vmatpush1.msra.mxu0 0.0
    %2171 = vmatprep.subr.mxu0 0.0
    %2172 = vmatpush1.msra.mxu0 0.0
    %2173 = vmatprep.subr.mxu0 0.0
    %2174 = vmatpush1.msra.mxu0 0.0
    %2175 = vmatprep.subr.mxu0 0.0
    %2176 = vmatpush1.msra.mxu0 0.0
    %2177 = vmatprep.mubr.f32.mxu0 0.0
    %2178 = vmatmul.mubr.f32.gmra.mrb[0].mxu0 %v2102
    %v2179 = vpop.f32.mrb[0].mxu0
    %v2180 = vadd.f32 %v2100, %v2179
    %v2181 = vpop.f32.mrb[0].mxu0
    %2182 = vmatprep.mubr.f32.mxu0 0.0
    %2183 = vmatmul.mubr.f32.gmra.mrb[0].mxu0 %v2105
    %v2184 = vpop.f32.mrb[0].mxu0
    %v2185 = vadd.f32 %v2100, %v2184
    %v2186 = vpop.f32.mrb[0].mxu0
    %2187 = vmatprep.mubr.f32.mxu0 0.0
    %2188 = vmatmul.mubr.f32.gmra.mrb[0].mxu0 %v2108
    %v2189 = vpop.f32.mrb[0].mxu0
    %v2190 = vadd.f32 %v2100, %v2189
    %v2191 = vpop.f32.mrb[0].mxu0
    %2192 = vmatprep.mubr.f32.mxu0 0.0
    %2193 = vmatmul.mubr.f32.gmra.mrb[0].mxu0 %v2111
    %v2194 = vpop.f32.mrb[0].mxu0
    %v2195 = vadd.f32 %v2100, %v2194
    %v2196 = vpop.f32.mrb[0].mxu0
    %2197 = vdwg.mxu0
    %v2198 = vlaneseq
    %v2199 = vshrl.u32 %v2198, 7
    %v2200 = vsub.s32 0, %v2199
    %v2201 = vrot.slane %v100, %v2200
    %2202 = vmatprep.subr.mxu0 0.0
    %2203 = vmatpush1.msra.mxu0 %v67
    %2204 = vmatprep.subr.mxu0 0.0
    %2205 = vmatpush1.msra.mxu0 %v68
    %2206 = vmatprep.subr.mxu0 0.0
    %2207 = vmatpush1.msra.mxu0 %v69
    %2208 = vmatprep.subr.mxu0 0.0
    %2209 = vmatpush1.msra.mxu0 %v70
    %2210 = vmatprep.subr.mxu0 0.0
    %2211 = vmatpush1.msra.mxu0 0.0
    %2212 = vmatprep.subr.mxu0 0.0
    %2213 = vmatpush1.msra.mxu0 0.0
    %2214 = vmatprep.subr.mxu0 0.0
    %2215 = vmatpush1.msra.mxu0 0.0
    %2216 = vmatprep.subr.mxu0 0.0
    %2217 = vmatpush1.msra.mxu0 0.0
    %2218 = vmatprep.subr.mxu0 0.0
    %2219 = vmatpush1.msra.mxu0 0.0
    %2220 = vmatprep.subr.mxu0 0.0
    %2221 = vmatpush1.msra.mxu0 0.0
    %2222 = vmatprep.subr.mxu0 0.0
    %2223 = vmatpush1.msra.mxu0 0.0
    %2224 = vmatprep.subr.mxu0 0.0
    %2225 = vmatpush1.msra.mxu0 0.0
    %2226 = vmatprep.subr.mxu0 0.0
    %2227 = vmatpush1.msra.mxu0 0.0
    %2228 = vmatprep.subr.mxu0 0.0
    %2229 = vmatpush1.msra.mxu0 0.0
    %2230 = vmatprep.subr.mxu0 0.0
    %2231 = vmatpush1.msra.mxu0 0.0
    %2232 = vmatprep.subr.mxu0 0.0
    %2233 = vmatpush1.msra.mxu0 0.0
    %2234 = vmatprep.subr.mxu0 0.0
    %2235 = vmatpush1.msra.mxu0 0.0
    %2236 = vmatprep.subr.mxu0 0.0
    %2237 = vmatpush1.msra.mxu0 0.0
    %2238 = vmatprep.subr.mxu0 0.0
    %2239 = vmatpush1.msra.mxu0 0.0
    %2240 = vmatprep.subr.mxu0 0.0
    %2241 = vmatpush1.msra.mxu0 0.0
    %2242 = vmatprep.subr.mxu0 0.0
    %2243 = vmatpush1.msra.mxu0 0.0
    %2244 = vmatprep.subr.mxu0 0.0
    %2245 = vmatpush1.msra.mxu0 0.0
    %2246 = vmatprep.subr.mxu0 0.0
    %2247 = vmatpush1.msra.mxu0 0.0
    %2248 = vmatprep.subr.mxu0 0.0
    %2249 = vmatpush1.msra.mxu0 0.0
    %2250 = vmatprep.subr.mxu0 0.0
    %2251 = vmatpush1.msra.mxu0 0.0
    %2252 = vmatprep.subr.mxu0 0.0
    %2253 = vmatpush1.msra.mxu0 0.0
    %2254 = vmatprep.subr.mxu0 0.0
    %2255 = vmatpush1.msra.mxu0 0.0
    %2256 = vmatprep.subr.mxu0 0.0
    %2257 = vmatpush1.msra.mxu0 0.0
    %2258 = vmatprep.subr.mxu0 0.0
    %2259 = vmatpush1.msra.mxu0 0.0
    %2260 = vmatprep.subr.mxu0 0.0
    %2261 = vmatpush1.msra.mxu0 0.0
    %2262 = vmatprep.subr.mxu0 0.0
    %2263 = vmatpush1.msra.mxu0 0.0
    %2264 = vmatprep.subr.mxu0 0.0
    %2265 = vmatpush1.msra.mxu0 0.0
    %2266 = vmatprep.mubr.f32.mxu0 0.0
    %2267 = vmatmul.mubr.f32.gmra.mrb[0].mxu0 %v2102
    %v2268 = vpop.f32.mrb[0].mxu0
    %v2269 = vadd.f32 %v2201, %v2268
    %v2270 = vpop.f32.mrb[0].mxu0
    %2271 = vmatprep.mubr.f32.mxu0 0.0
    %2272 = vmatmul.mubr.f32.gmra.mrb[0].mxu0 %v2105
    %v2273 = vpop.f32.mrb[0].mxu0
    %v2274 = vadd.f32 %v2201, %v2273
    %v2275 = vpop.f32.mrb[0].mxu0
    %2276 = vmatprep.mubr.f32.mxu0 0.0
    %2277 = vmatmul.mubr.f32.gmra.mrb[0].mxu0 %v2108
    %v2278 = vpop.f32.mrb[0].mxu0
    %v2279 = vadd.f32 %v2201, %v2278
    %v2280 = vpop.f32.mrb[0].mxu0
    %2281 = vmatprep.mubr.f32.mxu0 0.0
    %2282 = vmatmul.mubr.f32.gmra.mrb[0].mxu0 %v2111
    %v2283 = vpop.f32.mrb[0].mxu0
    %v2284 = vadd.f32 %v2201, %v2283
    %v2285 = vpop.f32.mrb[0].mxu0
    %2286 = vdwg.mxu0
    %v2287 = vmul.f32 %v2180, %v608
    %v2288 = vmul.f32 %v2185, %v608
    %v2289 = vmul.f32 %v2190, %v608
    %v2290 = vmul.f32 %v2195, %v608
    %v2292 = vsel %vm107, %v2287, 0
    %v2295 = vsel %vm107, %v2288, 0
    %v2298 = vsel %vm107, %v2289, 0
    %v2301 = vsel %vm107, %v2290, 0
    %v2304 = vsel %vm107, %v2269, 0
    %v2307 = vsel %vm107, %v2274, 0
    %v2310 = vsel %vm107, %v2279, 0
    %v2313 = vsel %vm107, %v2284, 0
    %2315 = vmatprep.subr.mxu0 0.0
    %2316 = vmatpush1.xpose.msra.mxu0 %v2304
    %2317 = vmatprep.subr.mxu0 0.0
    %2318 = vmatpush1.xpose.msra.mxu0 %v2307
    %2319 = vmatprep.subr.mxu0 0.0
    %2320 = vmatpush1.xpose.msra.mxu0 %v2310
    %2321 = vmatprep.subr.mxu0 0.0
    %2322 = vmatpush1.xpose.msra.mxu0 %v2313
    %2323 = vmatprep.subr.mxu0 0.0
    %2324 = vmatpush1.xpose.msra.mxu0 0.0
    %2325 = vmatprep.subr.mxu0 0.0
    %2326 = vmatpush1.xpose.msra.mxu0 0.0
    %2327 = vmatprep.subr.mxu0 0.0
    %2328 = vmatpush1.xpose.msra.mxu0 0.0
    %2329 = vmatprep.subr.mxu0 0.0
    %2330 = vmatpush1.xpose.msra.mxu0 0.0
    %2331 = vmatprep.subr.mxu0 0.0
    %2332 = vmatpush1.xpose.msra.mxu0 0.0
    %2333 = vmatprep.subr.mxu0 0.0
    %2334 = vmatpush1.xpose.msra.mxu0 0.0
    %2335 = vmatprep.subr.mxu0 0.0
    %2336 = vmatpush1.xpose.msra.mxu0 0.0
    %2337 = vmatprep.subr.mxu0 0.0
    %2338 = vmatpush1.xpose.msra.mxu0 0.0
    %2339 = vmatprep.subr.mxu0 0.0
    %2340 = vmatpush1.xpose.msra.mxu0 0.0
    %2341 = vmatprep.subr.mxu0 0.0
    %2342 = vmatpush1.xpose.msra.mxu0 0.0
    %2343 = vmatprep.subr.mxu0 0.0
    %2344 = vmatpush1.xpose.msra.mxu0 0.0
    %2345 = vmatprep.subr.mxu0 0.0
    %2346 = vmatpush1.xpose.msra.mxu0 0.0
    %2347 = vmatprep.subr.mxu0 0.0
    %2348 = vmatpush1.xpose.msra.mxu0 0.0
    %2349 = vmatprep.subr.mxu0 0.0
    %2350 = vmatpush1.xpose.msra.mxu0 0.0
    %2351 = vmatprep.subr.mxu0 0.0
    %2352 = vmatpush1.xpose.msra.mxu0 0.0
    %2353 = vmatprep.subr.mxu0 0.0
    %2354 = vmatpush1.xpose.msra.mxu0 0.0
    %2355 = vmatprep.subr.mxu0 0.0
    %2356 = vmatpush1.xpose.msra.mxu0 0.0
    %2357 = vmatprep.subr.mxu0 0.0
    %2358 = vmatpush1.xpose.msra.mxu0 0.0
    %2359 = vmatprep.subr.mxu0 0.0
    %2360 = vmatpush1.xpose.msra.mxu0 0.0
    %2361 = vmatprep.subr.mxu0 0.0
    %2362 = vmatpush1.xpose.msra.mxu0 0.0
    %2363 = vmatprep.subr.mxu0 0.0
    %2364 = vmatpush1.xpose.msra.mxu0 0.0
    %2365 = vmatprep.subr.mxu0 0.0
    %2366 = vmatpush1.xpose.msra.mxu0 0.0
    %2367 = vmatprep.subr.mxu0 0.0
    %2368 = vmatpush1.xpose.msra.mxu0 0.0
    %2369 = vmatprep.subr.mxu0 0.0
    %2370 = vmatpush1.xpose.msra.mxu0 0.0
    %2371 = vmatprep.subr.mxu0 0.0
    %2372 = vmatpush1.xpose.msra.mxu0 0.0
    %2373 = vmatprep.subr.mxu0 0.0
    %2374 = vmatpush1.xpose.msra.mxu0 0.0
    %2375 = vmatprep.subr.mxu0 0.0
    %2376 = vmatpush1.xpose.msra.mxu0 0.0
    %2377 = vmatprep.subr.mxu0 0.0
    %2378 = vmatpush1.xpose.msra.mxu0 0.0
    %2379 = vmatprep.mubr.f32.mxu0 0.0
    %2380 = vmatmul.mubr.f32.gmra.mrb[0].mxu0 %v2292
    %v2381 = vpop.f32.mrb[0].mxu0
    %v2382 = vadd.f32 %v43, %v2381
    %v2383 = vpop.f32.mrb[0].mxu0
    %2384 = vmatprep.mubr.f32.mxu0 0.0
    %2385 = vmatmul.mubr.f32.gmra.mrb[0].mxu0 %v2295
    %v2386 = vpop.f32.mrb[0].mxu0
    %v2387 = vadd.f32 %v44, %v2386
    %v2388 = vpop.f32.mrb[0].mxu0
    %2389 = vmatprep.mubr.f32.mxu0 0.0
    %2390 = vmatmul.mubr.f32.gmra.mrb[0].mxu0 %v2298
    %v2391 = vpop.f32.mrb[0].mxu0
    %v2392 = vadd.f32 %v45, %v2391
    %v2393 = vpop.f32.mrb[0].mxu0
    %2394 = vmatprep.mubr.f32.mxu0 0.0
    %2395 = vmatmul.mubr.f32.gmra.mrb[0].mxu0 %v2301
    %v2396 = vpop.f32.mrb[0].mxu0
    %v2397 = vadd.f32 %v46, %v2396
    %v2398 = vpop.f32.mrb[0].mxu0
    %2399 = vdwg.mxu0
    %v2400 = vsel %vm107, %v2382, -inf
    %2401 = vmax.xlane.f32.xlu0 %v2400
    %v2402 = vpop.xlane.xlu0 %2401
    %v2403 = vsel %vm107, %v2387, -inf
    %2404 = vmax.xlane.f32.xlu0 %v2403
    %v2405 = vpop.xlane.xlu0 %2404
    %v2406 = vsel %vm107, %v2392, -inf
    %2407 = vmax.xlane.f32.xlu0 %v2406
    %v2408 = vpop.xlane.xlu0 %2407
    %v2409 = vsel %vm107, %v2397, -inf
    %2410 = vmax.xlane.f32.xlu0 %v2409
    %v2411 = vpop.xlane.xlu0 %2410
    %v2412 = vsub.f32 %v2382, %v2402
    %v2413 = vsub.f32 %v2387, %v2405
    %v2414 = vsub.f32 %v2392, %v2408
    %v2415 = vsub.f32 %v2397, %v2411
    %v2416 = vmul.f32 %v2412, 1.442695
    %v2417 = vpow.pop %v2416
    %v2418 = vmul.f32 %v2413, 1.442695
    %v2419 = vpow.pop %v2418
    %v2420 = vmul.f32 %v2414, 1.442695
    %v2421 = vpow.pop %v2420
    %v2422 = vmul.f32 %v2415, 1.442695
    %v2423 = vpow.pop %v2422
    %v2424 = vsel %vm107, %v2417, 0.0
    %2425 = vadd.xlane.f32.xlu0 %v2424
    %v2426 = vpop.xlane.xlu0 %2425
    %v2427 = vsel %vm107, %v2419, 0.0
    %2428 = vadd.xlane.f32.xlu0 %v2427
    %v2429 = vpop.xlane.xlu0 %2428
    %v2430 = vsel %vm107, %v2421, 0.0
    %2431 = vadd.xlane.f32.xlu0 %v2430
    %v2432 = vpop.xlane.xlu0 %2431
    %v2433 = vsel %vm107, %v2423, 0.0
    %2434 = vadd.xlane.f32.xlu0 %v2433
    %v2435 = vpop.xlane.xlu0 %2434
    %v2436 = vrcp.pop %v2426
    %v2437 = vmul.f32 %v2417, %v2436
    %v2438 = vrcp.pop %v2429
    %v2439 = vmul.f32 %v2419, %v2438
    %v2440 = vrcp.pop %v2432
    %v2441 = vmul.f32 %v2421, %v2440
    %v2442 = vrcp.pop %v2435
    %v2443 = vmul.f32 %v2423, %v2442
    %v2444 = vmul.f32 %v2180, %v870
    %v2445 = vmul.f32 %v2185, %v870
    %v2446 = vmul.f32 %v2190, %v870
    %v2447 = vmul.f32 %v2195, %v870
    %v2449 = vsel %vm107, %v2444, 0
    %v2452 = vsel %vm107, %v2445, 0
    %v2455 = vsel %vm107, %v2446, 0
    %v2458 = vsel %vm107, %v2447, 0
    %2460 = vmatprep.subr.mxu0 0.0
    %2461 = vmatpush1.xpose.msra.mxu0 %v2304
    %2462 = vmatprep.subr.mxu0 0.0
    %2463 = vmatpush1.xpose.msra.mxu0 %v2307
    %2464 = vmatprep.subr.mxu0 0.0
    %2465 = vmatpush1.xpose.msra.mxu0 %v2310
    %2466 = vmatprep.subr.mxu0 0.0
    %2467 = vmatpush1.xpose.msra.mxu0 %v2313
    %2468 = vmatprep.subr.mxu0 0.0
    %2469 = vmatpush1.xpose.msra.mxu0 0.0
    %2470 = vmatprep.subr.mxu0 0.0
    %2471 = vmatpush1.xpose.msra.mxu0 0.0
    %2472 = vmatprep.subr.mxu0 0.0
    %2473 = vmatpush1.xpose.msra.mxu0 0.0
    %2474 = vmatprep.subr.mxu0 0.0
    %2475 = vmatpush1.xpose.msra.mxu0 0.0
    %2476 = vmatprep.subr.mxu0 0.0
    %2477 = vmatpush1.xpose.msra.mxu0 0.0
    %2478 = vmatprep.subr.mxu0 0.0
    %2479 = vmatpush1.xpose.msra.mxu0 0.0
    %2480 = vmatprep.subr.mxu0 0.0
    %2481 = vmatpush1.xpose.msra.mxu0 0.0
    %2482 = vmatprep.subr.mxu0 0.0
    %2483 = vmatpush1.xpose.msra.mxu0 0.0
    %2484 = vmatprep.subr.mxu0 0.0
    %2485 = vmatpush1.xpose.msra.mxu0 0.0
    %2486 = vmatprep.subr.mxu0 0.0
    %2487 = vmatpush1.xpose.msra.mxu0 0.0
    %2488 = vmatprep.subr.mxu0 0.0
    %2489 = vmatpush1.xpose.msra.mxu0 0.0
    %2490 = vmatprep.subr.mxu0 0.0
    %2491 = vmatpush1.xpose.msra.mxu0 0.0
    %2492 = vmatprep.subr.mxu0 0.0
    %2493 = vmatpush1.xpose.msra.mxu0 0.0
    %2494 = vmatprep.subr.mxu0 0.0
    %2495 = vmatpush1.xpose.msra.mxu0 0.0
    %2496 = vmatprep.subr.mxu0 0.0
    %2497 = vmatpush1.xpose.msra.mxu0 0.0
    %2498 = vmatprep.subr.mxu0 0.0
    %2499 = vmatpush1.xpose.msra.mxu0 0.0
    %2500 = vmatprep.subr.mxu0 0.0
    %2501 = vmatpush1.xpose.msra.mxu0 0.0
    %2502 = vmatprep.subr.mxu0 0.0
    %2503 = vmatpush1.xpose.msra.mxu0 0.0
    %2504 = vmatprep.subr.mxu0 0.0
    %2505 = vmatpush1.xpose.msra.mxu0 0.0
    %2506 = vmatprep.subr.mxu0 0.0
    %2507 = vmatpush1.xpose.msra.mxu0 0.0
    %2508 = vmatprep.subr.mxu0 0.0
    %2509 = vmatpush1.xpose.msra.mxu0 0.0
    %2510 = vmatprep.subr.mxu0 0.0
    %2511 = vmatpush1.xpose.msra.mxu0 0.0
    %2512 = vmatprep.subr.mxu0 0.0
    %2513 = vmatpush1.xpose.msra.mxu0 0.0
    %2514 = vmatprep.subr.mxu0 0.0
    %2515 = vmatpush1.xpose.msra.mxu0 0.0
    %2516 = vmatprep.subr.mxu0 0.0
    %2517 = vmatpush1.xpose.msra.mxu0 0.0
    %2518 = vmatprep.subr.mxu0 0.0
    %2519 = vmatpush1.xpose.msra.mxu0 0.0
    %2520 = vmatprep.subr.mxu0 0.0
    %2521 = vmatpush1.xpose.msra.mxu0 0.0
    %2522 = vmatprep.subr.mxu0 0.0
    %2523 = vmatpush1.xpose.msra.mxu0 0.0
    %2524 = vmatprep.mubr.f32.mxu0 0.0
    %2525 = vmatmul.mubr.f32.gmra.mrb[0].mxu0 %v2449
    %v2526 = vpop.f32.mrb[0].mxu0
    %v2527 = vadd.f32 %v43, %v2526
    %v2528 = vpop.f32.mrb[0].mxu0
    %2529 = vmatprep.mubr.f32.mxu0 0.0
    %2530 = vmatmul.mubr.f32.gmra.mrb[0].mxu0 %v2452
    %v2531 = vpop.f32.mrb[0].mxu0
    %v2532 = vadd.f32 %v44, %v2531
    %v2533 = vpop.f32.mrb[0].mxu0
    %2534 = vmatprep.mubr.f32.mxu0 0.0
    %2535 = vmatmul.mubr.f32.gmra.mrb[0].mxu0 %v2455
    %v2536 = vpop.f32.mrb[0].mxu0
    %v2537 = vadd.f32 %v45, %v2536
    %v2538 = vpop.f32.mrb[0].mxu0
    %2539 = vmatprep.mubr.f32.mxu0 0.0
    %2540 = vmatmul.mubr.f32.gmra.mrb[0].mxu0 %v2458
    %v2541 = vpop.f32.mrb[0].mxu0
    %v2542 = vadd.f32 %v46, %v2541
    %v2543 = vpop.f32.mrb[0].mxu0
    %2544 = vdwg.mxu0
    %v2545 = vsel %vm107, %v2527, -inf
    %2546 = vmax.xlane.f32.xlu0 %v2545
    %v2547 = vpop.xlane.xlu0 %2546
    %v2548 = vsel %vm107, %v2532, -inf
    %2549 = vmax.xlane.f32.xlu0 %v2548
    %v2550 = vpop.xlane.xlu0 %2549
    %v2551 = vsel %vm107, %v2537, -inf
    %2552 = vmax.xlane.f32.xlu0 %v2551
    %v2553 = vpop.xlane.xlu0 %2552
    %v2554 = vsel %vm107, %v2542, -inf
    %2555 = vmax.xlane.f32.xlu0 %v2554
    %v2556 = vpop.xlane.xlu0 %2555
    %v2557 = vsub.f32 %v2527, %v2547
    %v2558 = vsub.f32 %v2532, %v2550
    %v2559 = vsub.f32 %v2537, %v2553
    %v2560 = vsub.f32 %v2542, %v2556
    %v2561 = vmul.f32 %v2557, 1.442695
    %v2562 = vpow.pop %v2561
    %v2563 = vmul.f32 %v2558, 1.442695
    %v2564 = vpow.pop %v2563
    %v2565 = vmul.f32 %v2559, 1.442695
    %v2566 = vpow.pop %v2565
    %v2567 = vmul.f32 %v2560, 1.442695
    %v2568 = vpow.pop %v2567
    %v2569 = vsel %vm107, %v2562, 0.0
    %2570 = vadd.xlane.f32.xlu0 %v2569
    %v2571 = vpop.xlane.xlu0 %2570
    %v2572 = vsel %vm107, %v2564, 0.0
    %2573 = vadd.xlane.f32.xlu0 %v2572
    %v2574 = vpop.xlane.xlu0 %2573
    %v2575 = vsel %vm107, %v2566, 0.0
    %2576 = vadd.xlane.f32.xlu0 %v2575
    %v2577 = vpop.xlane.xlu0 %2576
    %v2578 = vsel %vm107, %v2568, 0.0
    %2579 = vadd.xlane.f32.xlu0 %v2578
    %v2580 = vpop.xlane.xlu0 %2579
    %v2581 = vrcp.pop %v2571
    %v2582 = vmul.f32 %v2562, %v2581
    %v2583 = vrcp.pop %v2574
    %v2584 = vmul.f32 %v2564, %v2583
    %v2585 = vrcp.pop %v2577
    %v2586 = vmul.f32 %v2566, %v2585
    %v2587 = vrcp.pop %v2580
    %v2588 = vmul.f32 %v2568, %v2587
    %v2589 = vadd.f32 %v2437, %v2582
    %v2590 = vadd.f32 %v2439, %v2584
    %v2591 = vadd.f32 %v2441, %v2586
    %v2592 = vadd.f32 %v2443, %v2588
    %v2593 = vmul.f32 %v2180, %v1128
    %v2594 = vmul.f32 %v2185, %v1128
    %v2595 = vmul.f32 %v2190, %v1128
    %v2596 = vmul.f32 %v2195, %v1128
    %v2598 = vsel %vm107, %v2593, 0
    %v2601 = vsel %vm107, %v2594, 0
    %v2604 = vsel %vm107, %v2595, 0
    %v2607 = vsel %vm107, %v2596, 0
    %2609 = vmatprep.subr.mxu0 0.0
    %2610 = vmatpush1.xpose.msra.mxu0 %v2304
    %2611 = vmatprep.subr.mxu0 0.0
    %2612 = vmatpush1.xpose.msra.mxu0 %v2307
    %2613 = vmatprep.subr.mxu0 0.0
    %2614 = vmatpush1.xpose.msra.mxu0 %v2310
    %2615 = vmatprep.subr.mxu0 0.0
    %2616 = vmatpush1.xpose.msra.mxu0 %v2313
    %2617 = vmatprep.subr.mxu0 0.0
    %2618 = vmatpush1.xpose.msra.mxu0 0.0
    %2619 = vmatprep.subr.mxu0 0.0
    %2620 = vmatpush1.xpose.msra.mxu0 0.0
    %2621 = vmatprep.subr.mxu0 0.0
    %2622 = vmatpush1.xpose.msra.mxu0 0.0
    %2623 = vmatprep.subr.mxu0 0.0
    %2624 = vmatpush1.xpose.msra.mxu0 0.0
    %2625 = vmatprep.subr.mxu0 0.0
    %2626 = vmatpush1.xpose.msra.mxu0 0.0
    %2627 = vmatprep.subr.mxu0 0.0
    %2628 = vmatpush1.xpose.msra.mxu0 0.0
    %2629 = vmatprep.subr.mxu0 0.0
    %2630 = vmatpush1.xpose.msra.mxu0 0.0
    %2631 = vmatprep.subr.mxu0 0.0
    %2632 = vmatpush1.xpose.msra.mxu0 0.0
    %2633 = vmatprep.subr.mxu0 0.0
    %2634 = vmatpush1.xpose.msra.mxu0 0.0
    %2635 = vmatprep.subr.mxu0 0.0
    %2636 = vmatpush1.xpose.msra.mxu0 0.0
    %2637 = vmatprep.subr.mxu0 0.0
    %2638 = vmatpush1.xpose.msra.mxu0 0.0
    %2639 = vmatprep.subr.mxu0 0.0
    %2640 = vmatpush1.xpose.msra.mxu0 0.0
    %2641 = vmatprep.subr.mxu0 0.0
    %2642 = vmatpush1.xpose.msra.mxu0 0.0
    %2643 = vmatprep.subr.mxu0 0.0
    %2644 = vmatpush1.xpose.msra.mxu0 0.0
    %2645 = vmatprep.subr.mxu0 0.0
    %2646 = vmatpush1.xpose.msra.mxu0 0.0
    %2647 = vmatprep.subr.mxu0 0.0
    %2648 = vmatpush1.xpose.msra.mxu0 0.0
    %2649 = vmatprep.subr.mxu0 0.0
    %2650 = vmatpush1.xpose.msra.mxu0 0.0
    %2651 = vmatprep.subr.mxu0 0.0
    %2652 = vmatpush1.xpose.msra.mxu0 0.0
    %2653 = vmatprep.subr.mxu0 0.0
    %2654 = vmatpush1.xpose.msra.mxu0 0.0
    %2655 = vmatprep.subr.mxu0 0.0
    %2656 = vmatpush1.xpose.msra.mxu0 0.0
    %2657 = vmatprep.subr.mxu0 0.0
    %2658 = vmatpush1.xpose.msra.mxu0 0.0
    %2659 = vmatprep.subr.mxu0 0.0
    %2660 = vmatpush1.xpose.msra.mxu0 0.0
    %2661 = vmatprep.subr.mxu0 0.0
    %2662 = vmatpush1.xpose.msra.mxu0 0.0
    %2663 = vmatprep.subr.mxu0 0.0
    %2664 = vmatpush1.xpose.msra.mxu0 0.0
    %2665 = vmatprep.subr.mxu0 0.0
    %2666 = vmatpush1.xpose.msra.mxu0 0.0
    %2667 = vmatprep.subr.mxu0 0.0
    %2668 = vmatpush1.xpose.msra.mxu0 0.0
    %2669 = vmatprep.subr.mxu0 0.0
    %2670 = vmatpush1.xpose.msra.mxu0 0.0
    %2671 = vmatprep.subr.mxu0 0.0
    %2672 = vmatpush1.xpose.msra.mxu0 0.0
    %2673 = vmatprep.mubr.f32.mxu0 0.0
    %2674 = vmatmul.mubr.f32.gmra.mrb[0].mxu0 %v2598
    %v2675 = vpop.f32.mrb[0].mxu0
    %v2676 = vadd.f32 %v43, %v2675
    %v2677 = vpop.f32.mrb[0].mxu0
    %2678 = vmatprep.mubr.f32.mxu0 0.0
    %2679 = vmatmul.mubr.f32.gmra.mrb[0].mxu0 %v2601
    %v2680 = vpop.f32.mrb[0].mxu0
    %v2681 = vadd.f32 %v44, %v2680
    %v2682 = vpop.f32.mrb[0].mxu0
    %2683 = vmatprep.mubr.f32.mxu0 0.0
    %2684 = vmatmul.mubr.f32.gmra.mrb[0].mxu0 %v2604
    %v2685 = vpop.f32.mrb[0].mxu0
    %v2686 = vadd.f32 %v45, %v2685
    %v2687 = vpop.f32.mrb[0].mxu0
    %2688 = vmatprep.mubr.f32.mxu0 0.0
    %2689 = vmatmul.mubr.f32.gmra.mrb[0].mxu0 %v2607
    %v2690 = vpop.f32.mrb[0].mxu0
    %v2691 = vadd.f32 %v46, %v2690
    %v2692 = vpop.f32.mrb[0].mxu0
    %2693 = vdwg.mxu0
    %v2694 = vsel %vm107, %v2676, -inf
    %2695 = vmax.xlane.f32.xlu0 %v2694
    %v2696 = vpop.xlane.xlu0 %2695
    %v2697 = vsel %vm107, %v2681, -inf
    %2698 = vmax.xlane.f32.xlu0 %v2697
    %v2699 = vpop.xlane.xlu0 %2698
    %v2700 = vsel %vm107, %v2686, -inf
    %2701 = vmax.xlane.f32.xlu0 %v2700
    %v2702 = vpop.xlane.xlu0 %2701
    %v2703 = vsel %vm107, %v2691, -inf
    %2704 = vmax.xlane.f32.xlu0 %v2703
    %v2705 = vpop.xlane.xlu0 %2704
    %v2706 = vsub.f32 %v2676, %v2696
    %v2707 = vsub.f32 %v2681, %v2699
    %v2708 = vsub.f32 %v2686, %v2702
    %v2709 = vsub.f32 %v2691, %v2705
    %v2710 = vmul.f32 %v2706, 1.442695
    %v2711 = vpow.pop %v2710
    %v2712 = vmul.f32 %v2707, 1.442695
    %v2713 = vpow.pop %v2712
    %v2714 = vmul.f32 %v2708, 1.442695
    %v2715 = vpow.pop %v2714
    %v2716 = vmul.f32 %v2709, 1.442695
    %v2717 = vpow.pop %v2716
    %v2718 = vsel %vm107, %v2711, 0.0
    %2719 = vadd.xlane.f32.xlu0 %v2718
    %v2720 = vpop.xlane.xlu0 %2719
    %v2721 = vsel %vm107, %v2713, 0.0
    %2722 = vadd.xlane.f32.xlu0 %v2721
    %v2723 = vpop.xlane.xlu0 %2722
    %v2724 = vsel %vm107, %v2715, 0.0
    %2725 = vadd.xlane.f32.xlu0 %v2724
    %v2726 = vpop.xlane.xlu0 %2725
    %v2727 = vsel %vm107, %v2717, 0.0
    %2728 = vadd.xlane.f32.xlu0 %v2727
    %v2729 = vpop.xlane.xlu0 %2728
    %v2730 = vrcp.pop %v2720
    %v2731 = vmul.f32 %v2711, %v2730
    %v2732 = vrcp.pop %v2723
    %v2733 = vmul.f32 %v2713, %v2732
    %v2734 = vrcp.pop %v2726
    %v2735 = vmul.f32 %v2715, %v2734
    %v2736 = vrcp.pop %v2729
    %v2737 = vmul.f32 %v2717, %v2736
    %v2738 = vadd.f32 %v2589, %v2731
    %v2739 = vadd.f32 %v2590, %v2733
    %v2740 = vadd.f32 %v2591, %v2735
    %v2741 = vadd.f32 %v2592, %v2737
    %v2742 = vmul.f32 %v2180, %v1386
    %v2743 = vmul.f32 %v2185, %v1386
    %v2744 = vmul.f32 %v2190, %v1386
    %v2745 = vmul.f32 %v2195, %v1386
    %v2747 = vsel %vm107, %v2742, 0
    %v2750 = vsel %vm107, %v2743, 0
    %v2753 = vsel %vm107, %v2744, 0
    %v2756 = vsel %vm107, %v2745, 0
    %2758 = vmatprep.subr.mxu0 0.0
    %2759 = vmatpush1.xpose.msra.mxu0 %v2304
    %2760 = vmatprep.subr.mxu0 0.0
    %2761 = vmatpush1.xpose.msra.mxu0 %v2307
    %2762 = vmatprep.subr.mxu0 0.0
    %2763 = vmatpush1.xpose.msra.mxu0 %v2310
    %2764 = vmatprep.subr.mxu0 0.0
    %2765 = vmatpush1.xpose.msra.mxu0 %v2313
    %2766 = vmatprep.subr.mxu0 0.0
    %2767 = vmatpush1.xpose.msra.mxu0 0.0
    %2768 = vmatprep.subr.mxu0 0.0
    %2769 = vmatpush1.xpose.msra.mxu0 0.0
    %2770 = vmatprep.subr.mxu0 0.0
    %2771 = vmatpush1.xpose.msra.mxu0 0.0
    %2772 = vmatprep.subr.mxu0 0.0
    %2773 = vmatpush1.xpose.msra.mxu0 0.0
    %2774 = vmatprep.subr.mxu0 0.0
    %2775 = vmatpush1.xpose.msra.mxu0 0.0
    %2776 = vmatprep.subr.mxu0 0.0
    %2777 = vmatpush1.xpose.msra.mxu0 0.0
    %2778 = vmatprep.subr.mxu0 0.0
    %2779 = vmatpush1.xpose.msra.mxu0 0.0
    %2780 = vmatprep.subr.mxu0 0.0
    %2781 = vmatpush1.xpose.msra.mxu0 0.0
    %2782 = vmatprep.subr.mxu0 0.0
    %2783 = vmatpush1.xpose.msra.mxu0 0.0
    %2784 = vmatprep.subr.mxu0 0.0
    %2785 = vmatpush1.xpose.msra.mxu0 0.0
    %2786 = vmatprep.subr.mxu0 0.0
    %2787 = vmatpush1.xpose.msra.mxu0 0.0
    %2788 = vmatprep.subr.mxu0 0.0
    %2789 = vmatpush1.xpose.msra.mxu0 0.0
    %2790 = vmatprep.subr.mxu0 0.0
    %2791 = vmatpush1.xpose.msra.mxu0 0.0
    %2792 = vmatprep.subr.mxu0 0.0
    %2793 = vmatpush1.xpose.msra.mxu0 0.0
    %2794 = vmatprep.subr.mxu0 0.0
    %2795 = vmatpush1.xpose.msra.mxu0 0.0
    %2796 = vmatprep.subr.mxu0 0.0
    %2797 = vmatpush1.xpose.msra.mxu0 0.0
    %2798 = vmatprep.subr.mxu0 0.0
    %2799 = vmatpush1.xpose.msra.mxu0 0.0
    %2800 = vmatprep.subr.mxu0 0.0
    %2801 = vmatpush1.xpose.msra.mxu0 0.0
    %2802 = vmatprep.subr.mxu0 0.0
    %2803 = vmatpush1.xpose.msra.mxu0 0.0
    %2804 = vmatprep.subr.mxu0 0.0
    %2805 = vmatpush1.xpose.msra.mxu0 0.0
    %2806 = vmatprep.subr.mxu0 0.0
    %2807 = vmatpush1.xpose.msra.mxu0 0.0
    %2808 = vmatprep.subr.mxu0 0.0
    %2809 = vmatpush1.xpose.msra.mxu0 0.0
    %2810 = vmatprep.subr.mxu0 0.0
    %2811 = vmatpush1.xpose.msra.mxu0 0.0
    %2812 = vmatprep.subr.mxu0 0.0
    %2813 = vmatpush1.xpose.msra.mxu0 0.0
    %2814 = vmatprep.subr.mxu0 0.0
    %2815 = vmatpush1.xpose.msra.mxu0 0.0
    %2816 = vmatprep.subr.mxu0 0.0
    %2817 = vmatpush1.xpose.msra.mxu0 0.0
    %2818 = vmatprep.subr.mxu0 0.0
    %2819 = vmatpush1.xpose.msra.mxu0 0.0
    %2820 = vmatprep.subr.mxu0 0.0
    %2821 = vmatpush1.xpose.msra.mxu0 0.0
    %2822 = vmatprep.mubr.f32.mxu0 0.0
    %2823 = vmatmul.mubr.f32.gmra.mrb[0].mxu0 %v2747
    %v2824 = vpop.f32.mrb[0].mxu0
    %v2825 = vadd.f32 %v43, %v2824
    %v2826 = vpop.f32.mrb[0].mxu0
    %2827 = vmatprep.mubr.f32.mxu0 0.0
    %2828 = vmatmul.mubr.f32.gmra.mrb[0].mxu0 %v2750
    %v2829 = vpop.f32.mrb[0].mxu0
    %v2830 = vadd.f32 %v44, %v2829
    %v2831 = vpop.f32.mrb[0].mxu0
    %2832 = vmatprep.mubr.f32.mxu0 0.0
    %2833 = vmatmul.mubr.f32.gmra.mrb[0].mxu0 %v2753
    %v2834 = vpop.f32.mrb[0].mxu0
    %v2835 = vadd.f32 %v45, %v2834
    %v2836 = vpop.f32.mrb[0].mxu0
    %2837 = vmatprep.mubr.f32.mxu0 0.0
    %2838 = vmatmul.mubr.f32.gmra.mrb[0].mxu0 %v2756
    %v2839 = vpop.f32.mrb[0].mxu0
    %v2840 = vadd.f32 %v46, %v2839
    %v2841 = vpop.f32.mrb[0].mxu0
    %2842 = vdwg.mxu0
    %v2843 = vsel %vm107, %v2825, -inf
    %2844 = vmax.xlane.f32.xlu0 %v2843
    %v2845 = vpop.xlane.xlu0 %2844
    %v2846 = vsel %vm107, %v2830, -inf
    %2847 = vmax.xlane.f32.xlu0 %v2846
    %v2848 = vpop.xlane.xlu0 %2847
    %v2849 = vsel %vm107, %v2835, -inf
    %2850 = vmax.xlane.f32.xlu0 %v2849
    %v2851 = vpop.xlane.xlu0 %2850
    %v2852 = vsel %vm107, %v2840, -inf
    %2853 = vmax.xlane.f32.xlu0 %v2852
    %v2854 = vpop.xlane.xlu0 %2853
    %v2855 = vsub.f32 %v2825, %v2845
    %v2856 = vsub.f32 %v2830, %v2848
    %v2857 = vsub.f32 %v2835, %v2851
    %v2858 = vsub.f32 %v2840, %v2854
    %v2859 = vmul.f32 %v2855, 1.442695
    %v2860 = vpow.pop %v2859
    %v2861 = vmul.f32 %v2856, 1.442695
    %v2862 = vpow.pop %v2861
    %v2863 = vmul.f32 %v2857, 1.442695
    %v2864 = vpow.pop %v2863
    %v2865 = vmul.f32 %v2858, 1.442695
    %v2866 = vpow.pop %v2865
    %v2867 = vsel %vm107, %v2860, 0.0
    %2868 = vadd.xlane.f32.xlu0 %v2867
    %v2869 = vpop.xlane.xlu0 %2868
    %v2870 = vsel %vm107, %v2862, 0.0
    %2871 = vadd.xlane.f32.xlu0 %v2870
    %v2872 = vpop.xlane.xlu0 %2871
    %v2873 = vsel %vm107, %v2864, 0.0
    %2874 = vadd.xlane.f32.xlu0 %v2873
    %v2875 = vpop.xlane.xlu0 %2874
    %v2876 = vsel %vm107, %v2866, 0.0
    %2877 = vadd.xlane.f32.xlu0 %v2876
    %v2878 = vpop.xlane.xlu0 %2877
    %v2879 = vrcp.pop %v2869
    %v2880 = vmul.f32 %v2860, %v2879
    %v2881 = vrcp.pop %v2872
    %v2882 = vmul.f32 %v2862, %v2881
    %v2883 = vrcp.pop %v2875
    %v2884 = vmul.f32 %v2864, %v2883
    %v2885 = vrcp.pop %v2878
    %v2886 = vmul.f32 %v2866, %v2885
    %v2887 = vadd.f32 %v2738, %v2880
    %v2888 = vadd.f32 %v2739, %v2882
    %v2889 = vadd.f32 %v2740, %v2884
    %v2890 = vadd.f32 %v2741, %v2886
    %v2891 = vmul.f32 %v2887, 0.25
    %v2892 = vmul.f32 %v2888, 0.25
    %v2893 = vmul.f32 %v2889, 0.25
    %v2894 = vmul.f32 %v2890, 0.25
    %vm2895 = vcmask 72704
    %2896 = vst.msk [vmem:[%s4] sm:$0xff] %vm2895, %v1641
    %vm2897 = vcmask 65536
    %2898 = vst.msk [vmem:[%s4 + $0x8] sm:$0x1] %vm2897, %v1642
    %2899 = vst.msk [vmem:[%s5] sm:$0xff] %vm2895, %v2891
    %2900 = vst.msk [vmem:[%s5 + $0x8] sm:$0x1] %vm2897, %v2892
    %2903 = vrot.lane.b32.xlu0 %v1643, 112
    %v2904 = vpop.permute.xlu0 %2903
    %2905 = vrot.lane.b32.xlu0 %v1644, 112
    %v2906 = vpop.permute.xlu0 %2905
    %s2909 = scalar_lea.vmem %s4, 16
    %2910 = vst.msk [vmem:[%s2909] sm:$0xff] %vm2895, %v2904
    %2911 = vst.msk [vmem:[%s2909 + $0x8] sm:$0x1] %vm2897, %v2906
    %2914 = vrot.lane.b32.xlu0 %v2893, 112
    %v2915 = vpop.permute.xlu0 %2914
    %2916 = vrot.lane.b32.xlu0 %v2894, 112
    %v2917 = vpop.permute.xlu0 %2916
    %s2920 = scalar_lea.vmem %s5, 16
    %2921 = vst.msk [vmem:[%s2920] sm:$0xff] %vm2895, %v2915
    %2922 = vst.msk [vmem:[%s2920 + $0x8] sm:$0x1] %vm2897, %v2917
    // Predicated region
    $region22: #{att_extractor_forward.1} parent=1 // pred_check
      _
    $region23: #{att_extractor_forward.1} parent=1 // pred_check_branch
      %2924 = sbr.rel (0) target = $region25
    $region24: #{att_extractor_forward.1} parent=1 // pred_region
      _
    $region25: #{att_extractor_forward.1} parent=1 // pred_fallthru
      _
    // Predicated region
    $region26: #{att_extractor_forward.1} parent=1 // pred_check
      _
    $region27: #{att_extractor_forward.1} parent=1 // pred_check_branch
      %2926 = sbr.rel (0) target = $region29
    $region28: #{att_extractor_forward.1} parent=1 // pred_region
      _
    $region29: #{att_extractor_forward.1} parent=1 // pred_fallthru
      _
    // Predicated region
    $region30: #{att_extractor_forward.1} parent=1 // pred_check
      _
    $region31: #{att_extractor_forward.1} parent=1 // pred_check_branch
      %2928 = sbr.rel (0) target = $region33
    $region32: #{att_extractor_forward.1} parent=1 // pred_region
      _
    $region33: #{att_extractor_forward.1} parent=1 // pred_fallthru
      _
    // Predicated region
    $region34: #{att_extractor_forward.1} parent=1 // pred_check
      _
    $region35: #{att_extractor_forward.1} parent=1 // pred_check_branch
      %2930 = sbr.rel (0) target = $region37
    $region36: #{att_extractor_forward.1} parent=1 // pred_region
      _
    $region37: #{att_extractor_forward.1} parent=1 // pred_fallthru
      _
    %2931 = vsyncpa [#allocation3], 1

</llo_original>
